<compile_context>
chip_gen: v7x
topology: tpu7x:2x2x1
jax: 0.10.0
libtpu: 0.0.40
codegen_flags: <defaults>
</compile_context>

<pallas_src>
import math

import jax
import jax.numpy as jnp
from jax.experimental import pallas as pl
from jax.experimental.pallas import tpu as pltpu


# ------------------------------ config (small) --------------------------------
B = 2            # batch
T = 8            # sequence length == block_size
C = 32           # n_embd
N_HEAD = 4
HEAD_DIM = C // N_HEAD
L = 3            # n_layer
N = B * T        # flattened rows (B*T)
EPS = 1e-5       # nn.LayerNorm default
OUT_LANES = 128  # lane-dense output slab width

assert T & (T - 1) == 0, "T must be a power of two (mask uses shifts)"
_SHIFT_T = T.bit_length() - 1

# row indices inside the packed `misc` array, shape (N + 8, C)
_ROW_WTE_W = N
_ROW_WTE_B = N + 1
_ROW_LNF_G = N + 2
_ROW_LNF_B = N + 3
_ROW_HEAD_W = N + 4
_ROW_HEAD_B = N + 5
_MISC_ROWS = N + 8


def _layernorm(x, g, b):
    mu = jnp.mean(x, axis=-1, keepdims=True)
    var = jnp.mean((x - mu) ** 2, axis=-1, keepdims=True)
    return (x - mu) * jax.lax.rsqrt(var + EPS) * g + b


def _gelu_tanh(x):
    return 0.5 * x * (1.0 + jnp.tanh(math.sqrt(2.0 / math.pi)
                                     * (x + 0.044715 * x ** 3)))


# ------------------------------- Pallas kernel --------------------------------
def gpt_kernel(x_ref, misc_ref, vec_ref, w1_ref, w2_ref, out_ref):
    # ---------------- packed embedding / final-head parameters ----------------
    misc = misc_ref[...]                                     # (N+8, C)
    wpe = misc[0:N, :]                                       # pre-tiled (N, C)
    w_wte = misc[_ROW_WTE_W:_ROW_WTE_W + 1, :]               # (1, C)
    b_wte = misc[_ROW_WTE_B:_ROW_WTE_B + 1, :]               # (1, C)
    lnf_g = misc[_ROW_LNF_G:_ROW_LNF_G + 1, :]
    lnf_b = misc[_ROW_LNF_B:_ROW_LNF_B + 1, :]
    w_head = misc[_ROW_HEAD_W:_ROW_HEAD_W + 1, :]
    b_head = misc[_ROW_HEAD_B:_ROW_HEAD_B + 1, 0:1]          # (1, 1)

    # ---- token embedding (Linear(1,C)) + positional embedding (drop = id) ----
    # x_ref is the scalar input pre-broadcast across lanes: x_ref[n, c] = x[n].
    x = x_ref[...] * w_wte + b_wte + wpe                     # (N, C)

    # ---- causal block-diagonal (per-batch) additive bias, built ONCE ----
    row = jax.lax.broadcasted_iota(jnp.int32, (N, N), 0)
    col = jax.lax.broadcasted_iota(jnp.int32, (N, N), 1)
    allowed = jnp.logical_and((row >> _SHIFT_T) == (col >> _SHIFT_T), row >= col)
    bias = jnp.where(allowed, 0.0, -1e30).astype(jnp.float32)     # (N, N)
    bias_all = jnp.concatenate([bias] * N_HEAD, axis=0)           # (NH*N, N)

    inv_sqrt_hd = 1.0 / math.sqrt(HEAD_DIM)

    # ------------------------- statically unrolled layers ----------------------
    for layer in range(L):
        vec = vec_ref[layer]                                 # (8, 4C)
        ln1_g = vec[0:1, 0:C]
        ln1_b = vec[1:2, 0:C]
        ln2_g = vec[2:3, 0:C]
        ln2_b = vec[3:4, 0:C]
        b_aproj = vec[4:5, 0:C]
        b_mproj = vec[5:6, 0:C]
        b_attn = vec[6:7, 0:3 * C]
        b_fc = vec[7:8, :]                                   # (1, 4C)

        w1 = w1_ref[layer]                                   # (C, 8C)
        w_fc = w1[:, 0:4 * C]                                # (C, 4C)
        w_attn = w1[:, 4 * C:7 * C]                          # (C, 3C)
        w_aproj = w1[:, 7 * C:8 * C]                         # (C, C)
        w_mproj = w2_ref[layer]                              # (4C, C)

        # ---- ln_1 + causal self-attention (batch flattened into N rows) ----
        h = _layernorm(x, ln1_g, ln1_b)
        qkv = jnp.dot(h, w_attn, preferred_element_type=jnp.float32) + b_attn
        q = qkv[:, 0:C] * inv_sqrt_hd        # fold 1/sqrt(head_dim) into q once
        k = qkv[:, C:2 * C]
        v = qkv[:, 2 * C:3 * C]

        # per-head q k^T tiles, stacked along sublanes -> one softmax chain
        scores = [
            jax.lax.dot_general(q[:, hh * HEAD_DIM:(hh + 1) * HEAD_DIM],
                                k[:, hh * HEAD_DIM:(hh + 1) * HEAD_DIM],
                                (((1,), (1,)), ((), ())),
                                preferred_element_type=jnp.float32)
            for hh in range(N_HEAD)]
        att = jnp.concatenate(scores, axis=0) + bias_all     # (NH*N, N)
        att = att - jnp.max(att, axis=-1, keepdims=True)
        e = jnp.exp(att)
        p = e / jnp.sum(e, axis=-1, keepdims=True)           # exact softmax

        # per-head (att @ v) placed into lane slices, then ONE output projection
        y = jnp.concatenate(
            [jnp.dot(p[hh * N:(hh + 1) * N, :],
                     v[:, hh * HEAD_DIM:(hh + 1) * HEAD_DIM],
                     preferred_element_type=jnp.float32)
             for hh in range(N_HEAD)], axis=1)               # (N, C)

        x = x + jnp.dot(y, w_aproj,
                        preferred_element_type=jnp.float32) + b_aproj  # resid 1

        # ---- ln_2 + MLP ----
        h2 = _layernorm(x, ln2_g, ln2_b)
        fc = _gelu_tanh(jnp.dot(h2, w_fc,
                                preferred_element_type=jnp.float32) + b_fc)
        x = x + jnp.dot(fc, w_mproj,
                        preferred_element_type=jnp.float32) + b_mproj  # resid 2

    # ---- ln_f + regression head; lane-dense (N, 128) output slab ----
    xf = _layernorm(x, lnf_g, lnf_b)
    res = jnp.sum(xf * w_head, axis=-1, keepdims=True) + b_head        # (N, 1)
    out_ref[...] = jnp.broadcast_to(res, (N, OUT_LANES))


# --------------------------------- wrapper -------------------------------------
def gpt_forward(x, emb, layers, final):
    """x: (B, T, 1).  Returns (B, T) == regression_head(...).squeeze()."""
    w_wte, b_wte, wpe = emb
    lnf_g, lnf_b, w_head, b_head = final

    def pad_lane(v, n):
        return jnp.pad(v, (0, n - v.shape[0]))

    vec_list, w1_list, w2_list = [], [], []
    for (ln1_g, ln1_b, w_attn, b_attn, w_aproj, b_aproj,
         ln2_g, ln2_b, w_fc, b_fc, w_mproj, b_mproj) in layers:
        vec_list.append(jnp.stack([
            pad_lane(ln1_g, 4 * C), pad_lane(ln1_b, 4 * C),
            pad_lane(ln2_g, 4 * C), pad_lane(ln2_b, 4 * C),
            pad_lane(b_aproj, 4 * C), pad_lane(b_mproj, 4 * C),
            pad_lane(b_attn, 4 * C), pad_lane(b_fc, 4 * C)]))    # (8, 4C)
        w1_list.append(jnp.concatenate([w_fc, w_attn, w_aproj], axis=1))  # (C,8C)
        w2_list.append(w_mproj)                                  # (4C, C)
    vec = jnp.stack(vec_list)                                    # (L, 8, 4C)
    w1 = jnp.stack(w1_list)                                      # (L, C, 8C)
    w2 = jnp.stack(w2_list)                                      # (L, 4C, C)

    # misc: pre-tiled positional embedding (N rows) + small embed/head vectors.
    wpe_tiled = jnp.tile(wpe, (B, 1))                            # (N, C)
    misc = jnp.concatenate([
        wpe_tiled,
        jnp.stack([w_wte, b_wte, lnf_g, lnf_b, w_head,
                   jnp.zeros((C,), jnp.float32).at[0].set(b_head),
                   jnp.zeros((C,), jnp.float32),
                   jnp.zeros((C,), jnp.float32)])], axis=0)      # (N+8, C)

    # lane-dense scalar input: broadcast the (N, 1) value across C lanes.
    x_dense = jnp.broadcast_to(x.reshape(N, 1), (N, C)).astype(jnp.float32)

    # Grid-less call: every array is a single whole-array VMEM block, the whole
    # forward (embedding -> L layers -> ln_f -> head) runs in one invocation.
    out = pl.pallas_call(
        gpt_kernel,
        out_shape=jax.ShapeDtypeStruct((N, OUT_LANES), jnp.float32),
    )(x_dense, misc, vec, w1, w2)

    return out[:, 0].reshape(B, T)                               # .squeeze()


# ---------------------------- pure-JAX reference --------------------------------
def gpt_reference(x, emb, layers, final):
    w_wte, b_wte, wpe = emb
    lnf_g, lnf_b, w_head, b_head = final

    def ln(z, g, b):
        mu = jnp.mean(z, -1, keepdims=True)
        var = jnp.mean((z - mu) ** 2, -1, keepdims=True)
        return (z - mu) * jax.lax.rsqrt(var + EPS) * g + b

    h = x * w_wte + b_wte + wpe[None, :T, :]
    for (ln1_g, ln1_b, w_attn, b_attn, w_aproj, b_aproj,
         ln2_g, ln2_b, w_fc, b_fc, w_mproj, b_mproj) in layers:
        hn = ln(h, ln1_g, ln1_b)
        qkv = hn @ w_attn + b_attn
        q, k, v = jnp.split(qkv, 3, axis=-1)
        q = q.reshape(B, T, N_HEAD, HEAD_DIM).transpose(0, 2, 1, 3)
        k = k.reshape(B, T, N_HEAD, HEAD_DIM).transpose(0, 2, 1, 3)
        v = v.reshape(B, T, N_HEAD, HEAD_DIM).transpose(0, 2, 1, 3)
        att = jnp.einsum("bhqd,bhkd->bhqk", q, k) / math.sqrt(HEAD_DIM)
        causal = jnp.tril(jnp.ones((T, T), bool))
        att = jnp.where(causal, att, -jnp.inf)
        att = jax.nn.softmax(att, axis=-1)
        y = jnp.einsum("bhqk,bhkd->bhqd", att, v)
        y = y.transpose(0, 2, 1, 3).reshape(B, T, C)
        h = h + y @ w_aproj + b_aproj
        hn2 = ln(h, ln2_g, ln2_b)
        h = h + _gelu_tanh(hn2 @ w_fc + b_fc) @ w_mproj + b_mproj
    hf = ln(h, lnf_g, lnf_b)
    return hf @ w_head + b_head                                  # (B, T)


# ----------------------------------- main ---------------------------------------
if __name__ == "__main__":
    key = jax.random.PRNGKey(0)
    keys = jax.random.split(key, 64)
    ki = iter(keys)

    x = jax.random.normal(next(ki), (B, T, 1), jnp.float32)

    # deterministic small-random parameters (LayerNorm params perturbed from
    # 1/0 to make the correctness check stronger; biases small random).
    w_wte = 0.02 * jax.random.normal(next(ki), (C,), jnp.float32)
    b_wte = 0.02 * jax.random.normal(next(ki), (C,), jnp.float32)
    wpe = 0.02 * jax.random.normal(next(ki), (T, C), jnp.float32)
    emb = (w_wte, b_wte, wpe)

    layers = []
    for _ in range(L):
        ln1_g = 1.0 + 0.1 * jax.random.normal(next(ki), (C,), jnp.float32)
        ln1_b = 0.1 * jax.random.normal(next(ki), (C,), jnp.float32)
        w_attn = 0.02 * jax.random.normal(next(ki), (C, 3 * C), jnp.float32)
        b_attn = 0.02 * jax.random.normal(next(ki), (3 * C,), jnp.float32)
        w_aproj = 0.02 * jax.random.normal(next(ki), (C, C), jnp.float32)
        b_aproj = 0.02 * jax.random.normal(next(ki), (C,), jnp.float32)
        ln2_g = 1.0 + 0.1 * jax.random.normal(next(ki), (C,), jnp.float32)
        ln2_b = 0.1 * jax.random.normal(next(ki), (C,), jnp.float32)
        w_fc = 0.02 * jax.random.normal(next(ki), (C, 4 * C), jnp.float32)
        b_fc = 0.02 * jax.random.normal(next(ki), (4 * C,), jnp.float32)
        w_mproj = 0.02 * jax.random.normal(next(ki), (4 * C, C), jnp.float32)
        b_mproj = 0.02 * jax.random.normal(next(ki), (C,), jnp.float32)
        layers.append((ln1_g, ln1_b, w_attn, b_attn, w_aproj, b_aproj,
                       ln2_g, ln2_b, w_fc, b_fc, w_mproj, b_mproj))

    lnf_g = 1.0 + 0.1 * jax.random.normal(next(ki), (C,), jnp.float32)
    lnf_b = 0.1 * jax.random.normal(next(ki), (C,), jnp.float32)
    w_head = 0.02 * jax.random.normal(next(ki), (C,), jnp.float32)
    b_head = 0.02 * jax.random.normal(next(ki), (), jnp.float32)
    final = (lnf_g, lnf_b, w_head, b_head)

    out = gpt_forward(x, emb, layers, final)
    out = jax.block_until_ready(out)

    ref = gpt_reference(x, emb, layers, final)
    assert out.shape == (B, T)
    err = jnp.max(jnp.abs(out - ref))
    assert jnp.allclose(out, ref, atol=2e-3, rtol=2e-3), f"max abs diff {err}"

    print("KERNEL_OK")
</pallas_src>

<mosaic_0001>
module attributes {stable_mosaic.version = 11 : i64} {
  func.func @gpt_kernel(%arg0: memref<16x32xf32, #tpu.memory_space<vmem>>, %arg1: memref<24x32xf32, #tpu.memory_space<vmem>>, %arg2: memref<3x8x128xf32, #tpu.memory_space<vmem>>, %arg3: memref<3x32x256xf32, #tpu.memory_space<vmem>>, %arg4: memref<3x128x32xf32, #tpu.memory_space<vmem>>, %arg5: memref<16x128xf32, #tpu.memory_space<vmem>>) attributes {dimension_semantics = [], scalar_prefetch = 0 : i64, scratch_operands = 0 : i64, tpu.core_type = #tpu.core_type<tc>} {
    %c0 = arith.constant 0 : index
    %c0_0 = arith.constant 0 : index
    %0 = vector.load %arg1[%c0, %c0_0] : memref<24x32xf32, #tpu.memory_space<vmem>>, vector<24x32xf32>
    %1 = vector.extract_strided_slice %0 {offsets = [0, 0], sizes = [16, 32], strides = [1, 1]} : vector<24x32xf32> to vector<16x32xf32>
    %2 = vector.extract_strided_slice %0 {offsets = [16, 0], sizes = [1, 32], strides = [1, 1]} : vector<24x32xf32> to vector<1x32xf32>
    %3 = vector.extract_strided_slice %0 {offsets = [17, 0], sizes = [1, 32], strides = [1, 1]} : vector<24x32xf32> to vector<1x32xf32>
    %4 = vector.extract_strided_slice %0 {offsets = [18, 0], sizes = [1, 32], strides = [1, 1]} : vector<24x32xf32> to vector<1x32xf32>
    %5 = vector.extract_strided_slice %0 {offsets = [19, 0], sizes = [1, 32], strides = [1, 1]} : vector<24x32xf32> to vector<1x32xf32>
    %6 = vector.extract_strided_slice %0 {offsets = [20, 0], sizes = [1, 32], strides = [1, 1]} : vector<24x32xf32> to vector<1x32xf32>
    %7 = vector.extract_strided_slice %0 {offsets = [21, 0], sizes = [1, 1], strides = [1, 1]} : vector<24x32xf32> to vector<1x1xf32>
    %c0_1 = arith.constant 0 : index
    %c0_2 = arith.constant 0 : index
    %8 = vector.load %arg0[%c0_1, %c0_2] : memref<16x32xf32, #tpu.memory_space<vmem>>, vector<16x32xf32>
    %9 = vector.broadcast %2 : vector<1x32xf32> to vector<16x32xf32>
    %10 = arith.mulf %8, %9 : vector<16x32xf32>
    %11 = vector.broadcast %3 : vector<1x32xf32> to vector<16x32xf32>
    %12 = arith.addf %10, %11 : vector<16x32xf32>
    %13 = arith.addf %12, %1 : vector<16x32xf32>
    %14 = tpu.iota {dimensions = array<i32: 0>} : vector<16x16xi32>
    %15 = tpu.iota {dimensions = array<i32: 1>} : vector<16x16xi32>
    %c3_i32 = arith.constant 3 : i32
    %16 = vector.broadcast %c3_i32 : i32 to vector<16x16xi32>
    %17 = arith.shrsi %14, %16 : vector<16x16xi32>
    %c3_i32_3 = arith.constant 3 : i32
    %18 = vector.broadcast %c3_i32_3 : i32 to vector<16x16xi32>
    %19 = arith.shrsi %15, %18 : vector<16x16xi32>
    %20 = arith.cmpi eq, %17, %19 : vector<16x16xi32>
    %21 = arith.cmpi sge, %14, %15 : vector<16x16xi32>
    %22 = arith.andi %20, %21 : vector<16x16xi1>
    %cst = arith.constant 0.000000e+00 : f32
    %cst_4 = arith.constant -1.000000e+30 : f32
    %23 = vector.broadcast %cst : f32 to vector<16x16xf32>
    %24 = vector.broadcast %cst_4 : f32 to vector<16x16xf32>
    %25 = arith.select %22, %23, %24 : vector<16x16xi1>, vector<16x16xf32>
    %26 = tpu.concatenate %25, %25, %25, %25 in 0 : vector<16x16xf32>, vector<16x16xf32>, vector<16x16xf32>, vector<16x16xf32> -> vector<64x16xf32>
    %c0_5 = arith.constant 0 : index
    %c0_6 = arith.constant 0 : index
    %c0_7 = arith.constant 0 : index
    %27 = vector.load %arg2[%c0_5, %c0_6, %c0_7] : memref<3x8x128xf32, #tpu.memory_space<vmem>>, vector<1x8x128xf32>
    %28 = vector.shape_cast %27 : vector<1x8x128xf32> to vector<8x128xf32>
    %29 = vector.extract_strided_slice %28 {offsets = [0, 0], sizes = [1, 32], strides = [1, 1]} : vector<8x128xf32> to vector<1x32xf32>
    %30 = vector.extract_strided_slice %28 {offsets = [1, 0], sizes = [1, 32], strides = [1, 1]} : vector<8x128xf32> to vector<1x32xf32>
    %31 = vector.extract_strided_slice %28 {offsets = [2, 0], sizes = [1, 32], strides = [1, 1]} : vector<8x128xf32> to vector<1x32xf32>
    %32 = vector.extract_strided_slice %28 {offsets = [3, 0], sizes = [1, 32], strides = [1, 1]} : vector<8x128xf32> to vector<1x32xf32>
    %33 = vector.extract_strided_slice %28 {offsets = [4, 0], sizes = [1, 32], strides = [1, 1]} : vector<8x128xf32> to vector<1x32xf32>
    %34 = vector.extract_strided_slice %28 {offsets = [5, 0], sizes = [1, 32], strides = [1, 1]} : vector<8x128xf32> to vector<1x32xf32>
    %35 = vector.extract_strided_slice %28 {offsets = [6, 0], sizes = [1, 96], strides = [1, 1]} : vector<8x128xf32> to vector<1x96xf32>
    %36 = vector.extract_strided_slice %28 {offsets = [7, 0], sizes = [1, 128], strides = [1, 1]} : vector<8x128xf32> to vector<1x128xf32>
    %c0_8 = arith.constant 0 : index
    %c0_9 = arith.constant 0 : index
    %c0_10 = arith.constant 0 : index
    %37 = vector.load %arg3[%c0_8, %c0_9, %c0_10] : memref<3x32x256xf32, #tpu.memory_space<vmem>>, vector<1x32x256xf32>
    %38 = vector.shape_cast %37 : vector<1x32x256xf32> to vector<32x256xf32>
    %39 = vector.extract_strided_slice %38 {offsets = [0, 0], sizes = [32, 128], strides = [1, 1]} : vector<32x256xf32> to vector<32x128xf32>
    %40 = vector.extract_strided_slice %38 {offsets = [0, 128], sizes = [32, 96], strides = [1, 1]} : vector<32x256xf32> to vector<32x96xf32>
    %41 = vector.extract_strided_slice %38 {offsets = [0, 224], sizes = [32, 32], strides = [1, 1]} : vector<32x256xf32> to vector<32x32xf32>
    %c0_11 = arith.constant 0 : index
    %c0_12 = arith.constant 0 : index
    %c0_13 = arith.constant 0 : index
    %42 = vector.load %arg4[%c0_11, %c0_12, %c0_13] : memref<3x128x32xf32, #tpu.memory_space<vmem>>, vector<1x128x32xf32>
    %43 = vector.shape_cast %42 : vector<1x128x32xf32> to vector<128x32xf32>
    %cst_14 = arith.constant dense<0.000000e+00> : vector<16xf32>
    %44 = vector.multi_reduction <add>, %13, %cst_14 [1] : vector<16x32xf32> to vector<16xf32>
    %45 = vector.shape_cast %44 : vector<16xf32> to vector<16x1xf32>
    %cst_15 = arith.constant 3.200000e+01 : f32
    %46 = vector.broadcast %cst_15 : f32 to vector<16x1xf32>
    %47 = arith.divf %45, %46 : vector<16x1xf32>
    %48 = vector.broadcast %47 : vector<16x1xf32> to vector<16x32xf32>
    %49 = arith.subf %13, %48 : vector<16x32xf32>
    %50 = arith.mulf %49, %49 : vector<16x32xf32>
    %cst_16 = arith.constant dense<0.000000e+00> : vector<16xf32>
    %51 = vector.multi_reduction <add>, %50, %cst_16 [1] : vector<16x32xf32> to vector<16xf32>
    %52 = vector.shape_cast %51 : vector<16xf32> to vector<16x1xf32>
    %cst_17 = arith.constant 3.200000e+01 : f32
    %53 = vector.broadcast %cst_17 : f32 to vector<16x1xf32>
    %54 = arith.divf %52, %53 : vector<16x1xf32>
    %55 = vector.broadcast %47 : vector<16x1xf32> to vector<16x32xf32>
    %56 = arith.subf %13, %55 : vector<16x32xf32>
    %cst_18 = arith.constant 9.99999974E-6 : f32
    %57 = vector.broadcast %cst_18 : f32 to vector<16x1xf32>
    %58 = arith.addf %54, %57 : vector<16x1xf32>
    %59 = math.rsqrt %58 : vector<16x1xf32>
    %60 = vector.broadcast %59 : vector<16x1xf32> to vector<16x32xf32>
    %61 = arith.mulf %56, %60 : vector<16x32xf32>
    %62 = vector.broadcast %29 : vector<1x32xf32> to vector<16x32xf32>
    %63 = arith.mulf %61, %62 : vector<16x32xf32>
    %64 = vector.broadcast %30 : vector<1x32xf32> to vector<16x32xf32>
    %65 = arith.addf %63, %64 : vector<16x32xf32>
    %cst_19 = arith.constant dense<0.000000e+00> : vector<16x96xf32>
    %66 = tpu.matmul %65, %40, %cst_19 {dimension_numbers = #tpu.dot_dimension_numbers<[1], [0], [0], [1], [0, 0, 1, 1], [], []>} : vector<16x32xf32>, vector<32x96xf32>, vector<16x96xf32> -> vector<16x96xf32>
    %67 = vector.broadcast %35 : vector<1x96xf32> to vector<16x96xf32>
    %68 = arith.addf %66, %67 : vector<16x96xf32>
    %69 = vector.extract_strided_slice %68 {offsets = [0, 0], sizes = [16, 32], strides = [1, 1]} : vector<16x96xf32> to vector<16x32xf32>
    %cst_20 = arith.constant 0.353553385 : f32
    %70 = vector.broadcast %cst_20 : f32 to vector<16x32xf32>
    %71 = arith.mulf %69, %70 : vector<16x32xf32>
    %72 = vector.extract_strided_slice %68 {offsets = [0, 32], sizes = [16, 32], strides = [1, 1]} : vector<16x96xf32> to vector<16x32xf32>
    %73 = vector.extract_strided_slice %68 {offsets = [0, 64], sizes = [16, 32], strides = [1, 1]} : vector<16x96xf32> to vector<16x32xf32>
    %74 = vector.extract_strided_slice %71 {offsets = [0, 0], sizes = [16, 8], strides = [1, 1]} : vector<16x32xf32> to vector<16x8xf32>
    %75 = vector.extract_strided_slice %72 {offsets = [0, 0], sizes = [16, 8], strides = [1, 1]} : vector<16x32xf32> to vector<16x8xf32>
    %cst_21 = arith.constant dense<0.000000e+00> : vector<16x16xf32>
    %76 = tpu.matmul %74, %75, %cst_21 {dimension_numbers = #tpu.dot_dimension_numbers<[1], [1], [0], [0], [0, 0, 1, 0], [], []>} : vector<16x8xf32>, vector<16x8xf32>, vector<16x16xf32> -> vector<16x16xf32>
    %77 = vector.extract_strided_slice %71 {offsets = [0, 8], sizes = [16, 8], strides = [1, 1]} : vector<16x32xf32> to vector<16x8xf32>
    %78 = vector.extract_strided_slice %72 {offsets = [0, 8], sizes = [16, 8], strides = [1, 1]} : vector<16x32xf32> to vector<16x8xf32>
    %cst_22 = arith.constant dense<0.000000e+00> : vector<16x16xf32>
    %79 = tpu.matmul %77, %78, %cst_22 {dimension_numbers = #tpu.dot_dimension_numbers<[1], [1], [0], [0], [0, 0, 1, 0], [], []>} : vector<16x8xf32>, vector<16x8xf32>, vector<16x16xf32> -> vector<16x16xf32>
    %80 = vector.extract_strided_slice %71 {offsets = [0, 16], sizes = [16, 8], strides = [1, 1]} : vector<16x32xf32> to vector<16x8xf32>
    %81 = vector.extract_strided_slice %72 {offsets = [0, 16], sizes = [16, 8], strides = [1, 1]} : vector<16x32xf32> to vector<16x8xf32>
    %cst_23 = arith.constant dense<0.000000e+00> : vector<16x16xf32>
    %82 = tpu.matmul %80, %81, %cst_23 {dimension_numbers = #tpu.dot_dimension_numbers<[1], [1], [0], [0], [0, 0, 1, 0], [], []>} : vector<16x8xf32>, vector<16x8xf32>, vector<16x16xf32> -> vector<16x16xf32>
    %83 = vector.extract_strided_slice %71 {offsets = [0, 24], sizes = [16, 8], strides = [1, 1]} : vector<16x32xf32> to vector<16x8xf32>
    %84 = vector.extract_strided_slice %72 {offsets = [0, 24], sizes = [16, 8], strides = [1, 1]} : vector<16x32xf32> to vector<16x8xf32>
    %cst_24 = arith.constant dense<0.000000e+00> : vector<16x16xf32>
    %85 = tpu.matmul %83, %84, %cst_24 {dimension_numbers = #tpu.dot_dimension_numbers<[1], [1], [0], [0], [0, 0, 1, 0], [], []>} : vector<16x8xf32>, vector<16x8xf32>, vector<16x16xf32> -> vector<16x16xf32>
    %86 = tpu.concatenate %76, %79, %82, %85 in 0 : vector<16x16xf32>, vector<16x16xf32>, vector<16x16xf32>, vector<16x16xf32> -> vector<64x16xf32>
    %87 = arith.addf %86, %26 : vector<64x16xf32>
    %cst_25 = arith.constant dense<0xFF800000> : vector<64xf32>
    %88 = vector.multi_reduction <maximumf>, %87, %cst_25 [1] : vector<64x16xf32> to vector<64xf32>
    %89 = vector.shape_cast %88 : vector<64xf32> to vector<64x1xf32>
    %90 = vector.broadcast %89 : vector<64x1xf32> to vector<64x16xf32>
    %91 = arith.subf %87, %90 : vector<64x16xf32>
    %92 = math.exp %91 : vector<64x16xf32>
    %cst_26 = arith.constant dense<0.000000e+00> : vector<64xf32>
    %93 = vector.multi_reduction <add>, %92, %cst_26 [1] : vector<64x16xf32> to vector<64xf32>
    %94 = vector.shape_cast %93 : vector<64xf32> to vector<64x1xf32>
    %95 = vector.broadcast %94 : vector<64x1xf32> to vector<64x16xf32>
    %96 = arith.divf %92, %95 : vector<64x16xf32>
    %97 = vector.extract_strided_slice %96 {offsets = [0, 0], sizes = [16, 16], strides = [1, 1]} : vector<64x16xf32> to vector<16x16xf32>
    %98 = vector.extract_strided_slice %73 {offsets = [0, 0], sizes = [16, 8], strides = [1, 1]} : vector<16x32xf32> to vector<16x8xf32>
    %cst_27 = arith.constant dense<0.000000e+00> : vector<16x8xf32>
    %99 = tpu.matmul %97, %98, %cst_27 {dimension_numbers = #tpu.dot_dimension_numbers<[1], [0], [0], [1], [0, 0, 1, 1], [], []>} : vector<16x16xf32>, vector<16x8xf32>, vector<16x8xf32> -> vector<16x8xf32>
    %100 = vector.extract_strided_slice %96 {offsets = [16, 0], sizes = [16, 16], strides = [1, 1]} : vector<64x16xf32> to vector<16x16xf32>
    %101 = vector.extract_strided_slice %73 {offsets = [0, 8], sizes = [16, 8], strides = [1, 1]} : vector<16x32xf32> to vector<16x8xf32>
    %cst_28 = arith.constant dense<0.000000e+00> : vector<16x8xf32>
    %102 = tpu.matmul %100, %101, %cst_28 {dimension_numbers = #tpu.dot_dimension_numbers<[1], [0], [0], [1], [0, 0, 1, 1], [], []>} : vector<16x16xf32>, vector<16x8xf32>, vector<16x8xf32> -> vector<16x8xf32>
    %103 = vector.extract_strided_slice %96 {offsets = [32, 0], sizes = [16, 16], strides = [1, 1]} : vector<64x16xf32> to vector<16x16xf32>
    %104 = vector.extract_strided_slice %73 {offsets = [0, 16], sizes = [16, 8], strides = [1, 1]} : vector<16x32xf32> to vector<16x8xf32>
    %cst_29 = arith.constant dense<0.000000e+00> : vector<16x8xf32>
    %105 = tpu.matmul %103, %104, %cst_29 {dimension_numbers = #tpu.dot_dimension_numbers<[1], [0], [0], [1], [0, 0, 1, 1], [], []>} : vector<16x16xf32>, vector<16x8xf32>, vector<16x8xf32> -> vector<16x8xf32>
    %106 = vector.extract_strided_slice %96 {offsets = [48, 0], sizes = [16, 16], strides = [1, 1]} : vector<64x16xf32> to vector<16x16xf32>
    %107 = vector.extract_strided_slice %73 {offsets = [0, 24], sizes = [16, 8], strides = [1, 1]} : vector<16x32xf32> to vector<16x8xf32>
    %cst_30 = arith.constant dense<0.000000e+00> : vector<16x8xf32>
    %108 = tpu.matmul %106, %107, %cst_30 {dimension_numbers = #tpu.dot_dimension_numbers<[1], [0], [0], [1], [0, 0, 1, 1], [], []>} : vector<16x16xf32>, vector<16x8xf32>, vector<16x8xf32> -> vector<16x8xf32>
    %109 = tpu.concatenate %99, %102, %105, %108 in 1 : vector<16x8xf32>, vector<16x8xf32>, vector<16x8xf32>, vector<16x8xf32> -> vector<16x32xf32>
    %cst_31 = arith.constant dense<0.000000e+00> : vector<16x32xf32>
    %110 = tpu.matmul %109, %41, %cst_31 {dimension_numbers = #tpu.dot_dimension_numbers<[1], [0], [0], [1], [0, 0, 1, 1], [], []>} : vector<16x32xf32>, vector<32x32xf32>, vector<16x32xf32> -> vector<16x32xf32>
    %111 = arith.addf %13, %110 : vector<16x32xf32>
    %112 = vector.broadcast %33 : vector<1x32xf32> to vector<16x32xf32>
    %113 = arith.addf %111, %112 : vector<16x32xf32>
    %cst_32 = arith.constant dense<0.000000e+00> : vector<16xf32>
    %114 = vector.multi_reduction <add>, %113, %cst_32 [1] : vector<16x32xf32> to vector<16xf32>
    %115 = vector.shape_cast %114 : vector<16xf32> to vector<16x1xf32>
    %cst_33 = arith.constant 3.200000e+01 : f32
    %116 = vector.broadcast %cst_33 : f32 to vector<16x1xf32>
    %117 = arith.divf %115, %116 : vector<16x1xf32>
    %118 = vector.broadcast %117 : vector<16x1xf32> to vector<16x32xf32>
    %119 = arith.subf %113, %118 : vector<16x32xf32>
    %120 = arith.mulf %119, %119 : vector<16x32xf32>
    %cst_34 = arith.constant dense<0.000000e+00> : vector<16xf32>
    %121 = vector.multi_reduction <add>, %120, %cst_34 [1] : vector<16x32xf32> to vector<16xf32>
    %122 = vector.shape_cast %121 : vector<16xf32> to vector<16x1xf32>
    %cst_35 = arith.constant 3.200000e+01 : f32
    %123 = vector.broadcast %cst_35 : f32 to vector<16x1xf32>
    %124 = arith.divf %122, %123 : vector<16x1xf32>
    %125 = vector.broadcast %117 : vector<16x1xf32> to vector<16x32xf32>
    %126 = arith.subf %113, %125 : vector<16x32xf32>
    %cst_36 = arith.constant 9.99999974E-6 : f32
    %127 = vector.broadcast %cst_36 : f32 to vector<16x1xf32>
    %128 = arith.addf %124, %127 : vector<16x1xf32>
    %129 = math.rsqrt %128 : vector<16x1xf32>
    %130 = vector.broadcast %129 : vector<16x1xf32> to vector<16x32xf32>
    %131 = arith.mulf %126, %130 : vector<16x32xf32>
    %132 = vector.broadcast %31 : vector<1x32xf32> to vector<16x32xf32>
    %133 = arith.mulf %131, %132 : vector<16x32xf32>
    %134 = vector.broadcast %32 : vector<1x32xf32> to vector<16x32xf32>
    %135 = arith.addf %133, %134 : vector<16x32xf32>
    %cst_37 = arith.constant dense<0.000000e+00> : vector<16x128xf32>
    %136 = tpu.matmul %135, %39, %cst_37 {dimension_numbers = #tpu.dot_dimension_numbers<[1], [0], [0], [1], [0, 0, 1, 1], [], []>} : vector<16x32xf32>, vector<32x128xf32>, vector<16x128xf32> -> vector<16x128xf32>
    %137 = vector.broadcast %36 : vector<1x128xf32> to vector<16x128xf32>
    %138 = arith.addf %136, %137 : vector<16x128xf32>
    %cst_38 = arith.constant 5.000000e-01 : f32
    %139 = vector.broadcast %cst_38 : f32 to vector<16x128xf32>
    %140 = arith.mulf %139, %138 : vector<16x128xf32>
    %141 = arith.mulf %138, %138 : vector<16x128xf32>
    %142 = arith.mulf %138, %141 : vector<16x128xf32>
    %cst_39 = arith.constant 4.471500e-02 : f32
    %143 = vector.broadcast %cst_39 : f32 to vector<16x128xf32>
    %144 = arith.mulf %143, %142 : vector<16x128xf32>
    %145 = arith.addf %138, %144 : vector<16x128xf32>
    %cst_40 = arith.constant 0.797884583 : f32
    %146 = vector.broadcast %cst_40 : f32 to vector<16x128xf32>
    %147 = arith.mulf %146, %145 : vector<16x128xf32>
    %148 = math.tanh %147 : vector<16x128xf32>
    %cst_41 = arith.constant 1.000000e+00 : f32
    %149 = vector.broadcast %cst_41 : f32 to vector<16x128xf32>
    %150 = arith.addf %149, %148 : vector<16x128xf32>
    %151 = arith.mulf %140, %150 : vector<16x128xf32>
    %cst_42 = arith.constant dense<0.000000e+00> : vector<16x32xf32>
    %152 = tpu.matmul %151, %43, %cst_42 {dimension_numbers = #tpu.dot_dimension_numbers<[1], [0], [0], [1], [0, 0, 1, 1], [], []>} : vector<16x128xf32>, vector<128x32xf32>, vector<16x32xf32> -> vector<16x32xf32>
    %153 = arith.addf %113, %152 : vector<16x32xf32>
    %154 = vector.broadcast %34 : vector<1x32xf32> to vector<16x32xf32>
    %155 = arith.addf %153, %154 : vector<16x32xf32>
    %c1 = arith.constant 1 : index
    %c0_43 = arith.constant 0 : index
    %c0_44 = arith.constant 0 : index
    %156 = vector.load %arg2[%c1, %c0_43, %c0_44] : memref<3x8x128xf32, #tpu.memory_space<vmem>>, vector<1x8x128xf32>
    %157 = vector.shape_cast %156 : vector<1x8x128xf32> to vector<8x128xf32>
    %158 = vector.extract_strided_slice %157 {offsets = [0, 0], sizes = [1, 32], strides = [1, 1]} : vector<8x128xf32> to vector<1x32xf32>
    %159 = vector.extract_strided_slice %157 {offsets = [1, 0], sizes = [1, 32], strides = [1, 1]} : vector<8x128xf32> to vector<1x32xf32>
    %160 = vector.extract_strided_slice %157 {offsets = [2, 0], sizes = [1, 32], strides = [1, 1]} : vector<8x128xf32> to vector<1x32xf32>
    %161 = vector.extract_strided_slice %157 {offsets = [3, 0], sizes = [1, 32], strides = [1, 1]} : vector<8x128xf32> to vector<1x32xf32>
    %162 = vector.extract_strided_slice %157 {offsets = [4, 0], sizes = [1, 32], strides = [1, 1]} : vector<8x128xf32> to vector<1x32xf32>
    %163 = vector.extract_strided_slice %157 {offsets = [5, 0], sizes = [1, 32], strides = [1, 1]} : vector<8x128xf32> to vector<1x32xf32>
    %164 = vector.extract_strided_slice %157 {offsets = [6, 0], sizes = [1, 96], strides = [1, 1]} : vector<8x128xf32> to vector<1x96xf32>
    %165 = vector.extract_strided_slice %157 {offsets = [7, 0], sizes = [1, 128], strides = [1, 1]} : vector<8x128xf32> to vector<1x128xf32>
    %c1_45 = arith.constant 1 : index
    %c0_46 = arith.constant 0 : index
    %c0_47 = arith.constant 0 : index
    %166 = vector.load %arg3[%c1_45, %c0_46, %c0_47] : memref<3x32x256xf32, #tpu.memory_space<vmem>>, vector<1x32x256xf32>
    %167 = vector.shape_cast %166 : vector<1x32x256xf32> to vector<32x256xf32>
    %168 = vector.extract_strided_slice %167 {offsets = [0, 0], sizes = [32, 128], strides = [1, 1]} : vector<32x256xf32> to vector<32x128xf32>
    %169 = vector.extract_strided_slice %167 {offsets = [0, 128], sizes = [32, 96], strides = [1, 1]} : vector<32x256xf32> to vector<32x96xf32>
    %170 = vector.extract_strided_slice %167 {offsets = [0, 224], sizes = [32, 32], strides = [1, 1]} : vector<32x256xf32> to vector<32x32xf32>
    %c1_48 = arith.constant 1 : index
    %c0_49 = arith.constant 0 : index
    %c0_50 = arith.constant 0 : index
    %171 = vector.load %arg4[%c1_48, %c0_49, %c0_50] : memref<3x128x32xf32, #tpu.memory_space<vmem>>, vector<1x128x32xf32>
    %172 = vector.shape_cast %171 : vector<1x128x32xf32> to vector<128x32xf32>
    %cst_51 = arith.constant dense<0.000000e+00> : vector<16xf32>
    %173 = vector.multi_reduction <add>, %155, %cst_51 [1] : vector<16x32xf32> to vector<16xf32>
    %174 = vector.shape_cast %173 : vector<16xf32> to vector<16x1xf32>
    %cst_52 = arith.constant 3.200000e+01 : f32
    %175 = vector.broadcast %cst_52 : f32 to vector<16x1xf32>
    %176 = arith.divf %174, %175 : vector<16x1xf32>
    %177 = vector.broadcast %176 : vector<16x1xf32> to vector<16x32xf32>
    %178 = arith.subf %155, %177 : vector<16x32xf32>
    %179 = arith.mulf %178, %178 : vector<16x32xf32>
    %cst_53 = arith.constant dense<0.000000e+00> : vector<16xf32>
    %180 = vector.multi_reduction <add>, %179, %cst_53 [1] : vector<16x32xf32> to vector<16xf32>
    %181 = vector.shape_cast %180 : vector<16xf32> to vector<16x1xf32>
    %cst_54 = arith.constant 3.200000e+01 : f32
    %182 = vector.broadcast %cst_54 : f32 to vector<16x1xf32>
    %183 = arith.divf %181, %182 : vector<16x1xf32>
    %184 = vector.broadcast %176 : vector<16x1xf32> to vector<16x32xf32>
    %185 = arith.subf %155, %184 : vector<16x32xf32>
    %cst_55 = arith.constant 9.99999974E-6 : f32
    %186 = vector.broadcast %cst_55 : f32 to vector<16x1xf32>
    %187 = arith.addf %183, %186 : vector<16x1xf32>
    %188 = math.rsqrt %187 : vector<16x1xf32>
    %189 = vector.broadcast %188 : vector<16x1xf32> to vector<16x32xf32>
    %190 = arith.mulf %185, %189 : vector<16x32xf32>
    %191 = vector.broadcast %158 : vector<1x32xf32> to vector<16x32xf32>
    %192 = arith.mulf %190, %191 : vector<16x32xf32>
    %193 = vector.broadcast %159 : vector<1x32xf32> to vector<16x32xf32>
    %194 = arith.addf %192, %193 : vector<16x32xf32>
    %cst_56 = arith.constant dense<0.000000e+00> : vector<16x96xf32>
    %195 = tpu.matmul %194, %169, %cst_56 {dimension_numbers = #tpu.dot_dimension_numbers<[1], [0], [0], [1], [0, 0, 1, 1], [], []>} : vector<16x32xf32>, vector<32x96xf32>, vector<16x96xf32> -> vector<16x96xf32>
    %196 = vector.broadcast %164 : vector<1x96xf32> to vector<16x96xf32>
    %197 = arith.addf %195, %196 : vector<16x96xf32>
    %198 = vector.extract_strided_slice %197 {offsets = [0, 0], sizes = [16, 32], strides = [1, 1]} : vector<16x96xf32> to vector<16x32xf32>
    %cst_57 = arith.constant 0.353553385 : f32
    %199 = vector.broadcast %cst_57 : f32 to vector<16x32xf32>
    %200 = arith.mulf %198, %199 : vector<16x32xf32>
    %201 = vector.extract_strided_slice %197 {offsets = [0, 32], sizes = [16, 32], strides = [1, 1]} : vector<16x96xf32> to vector<16x32xf32>
    %202 = vector.extract_strided_slice %197 {offsets = [0, 64], sizes = [16, 32], strides = [1, 1]} : vector<16x96xf32> to vector<16x32xf32>
    %203 = vector.extract_strided_slice %200 {offsets = [0, 0], sizes = [16, 8], strides = [1, 1]} : vector<16x32xf32> to vector<16x8xf32>
    %204 = vector.extract_strided_slice %201 {offsets = [0, 0], sizes = [16, 8], strides = [1, 1]} : vector<16x32xf32> to vector<16x8xf32>
    %cst_58 = arith.constant dense<0.000000e+00> : vector<16x16xf32>
    %205 = tpu.matmul %203, %204, %cst_58 {dimension_numbers = #tpu.dot_dimension_numbers<[1], [1], [0], [0], [0, 0, 1, 0], [], []>} : vector<16x8xf32>, vector<16x8xf32>, vector<16x16xf32> -> vector<16x16xf32>
    %206 = vector.extract_strided_slice %200 {offsets = [0, 8], sizes = [16, 8], strides = [1, 1]} : vector<16x32xf32> to vector<16x8xf32>
    %207 = vector.extract_strided_slice %201 {offsets = [0, 8], sizes = [16, 8], strides = [1, 1]} : vector<16x32xf32> to vector<16x8xf32>
    %cst_59 = arith.constant dense<0.000000e+00> : vector<16x16xf32>
    %208 = tpu.matmul %206, %207, %cst_59 {dimension_numbers = #tpu.dot_dimension_numbers<[1], [1], [0], [0], [0, 0, 1, 0], [], []>} : vector<16x8xf32>, vector<16x8xf32>, vector<16x16xf32> -> vector<16x16xf32>
    %209 = vector.extract_strided_slice %200 {offsets = [0, 16], sizes = [16, 8], strides = [1, 1]} : vector<16x32xf32> to vector<16x8xf32>
    %210 = vector.extract_strided_slice %201 {offsets = [0, 16], sizes = [16, 8], strides = [1, 1]} : vector<16x32xf32> to vector<16x8xf32>
    %cst_60 = arith.constant dense<0.000000e+00> : vector<16x16xf32>
    %211 = tpu.matmul %209, %210, %cst_60 {dimension_numbers = #tpu.dot_dimension_numbers<[1], [1], [0], [0], [0, 0, 1, 0], [], []>} : vector<16x8xf32>, vector<16x8xf32>, vector<16x16xf32> -> vector<16x16xf32>
    %212 = vector.extract_strided_slice %200 {offsets = [0, 24], sizes = [16, 8], strides = [1, 1]} : vector<16x32xf32> to vector<16x8xf32>
    %213 = vector.extract_strided_slice %201 {offsets = [0, 24], sizes = [16, 8], strides = [1, 1]} : vector<16x32xf32> to vector<16x8xf32>
    %cst_61 = arith.constant dense<0.000000e+00> : vector<16x16xf32>
    %214 = tpu.matmul %212, %213, %cst_61 {dimension_numbers = #tpu.dot_dimension_numbers<[1], [1], [0], [0], [0, 0, 1, 0], [], []>} : vector<16x8xf32>, vector<16x8xf32>, vector<16x16xf32> -> vector<16x16xf32>
    %215 = tpu.concatenate %205, %208, %211, %214 in 0 : vector<16x16xf32>, vector<16x16xf32>, vector<16x16xf32>, vector<16x16xf32> -> vector<64x16xf32>
    %216 = arith.addf %215, %26 : vector<64x16xf32>
    %cst_62 = arith.constant dense<0xFF800000> : vector<64xf32>
    %217 = vector.multi_reduction <maximumf>, %216, %cst_62 [1] : vector<64x16xf32> to vector<64xf32>
    %218 = vector.shape_cast %217 : vector<64xf32> to vector<64x1xf32>
    %219 = vector.broadcast %218 : vector<64x1xf32> to vector<64x16xf32>
    %220 = arith.subf %216, %219 : vector<64x16xf32>
    %221 = math.exp %220 : vector<64x16xf32>
    %cst_63 = arith.constant dense<0.000000e+00> : vector<64xf32>
    %222 = vector.multi_reduction <add>, %221, %cst_63 [1] : vector<64x16xf32> to vector<64xf32>
    %223 = vector.shape_cast %222 : vector<64xf32> to vector<64x1xf32>
    %224 = vector.broadcast %223 : vector<64x1xf32> to vector<64x16xf32>
    %225 = arith.divf %221, %224 : vector<64x16xf32>
    %226 = vector.extract_strided_slice %225 {offsets = [0, 0], sizes = [16, 16], strides = [1, 1]} : vector<64x16xf32> to vector<16x16xf32>
    %227 = vector.extract_strided_slice %202 {offsets = [0, 0], sizes = [16, 8], strides = [1, 1]} : vector<16x32xf32> to vector<16x8xf32>
    %cst_64 = arith.constant dense<0.000000e+00> : vector<16x8xf32>
    %228 = tpu.matmul %226, %227, %cst_64 {dimension_numbers = #tpu.dot_dimension_numbers<[1], [0], [0], [1], [0, 0, 1, 1], [], []>} : vector<16x16xf32>, vector<16x8xf32>, vector<16x8xf32> -> vector<16x8xf32>
    %229 = vector.extract_strided_slice %225 {offsets = [16, 0], sizes = [16, 16], strides = [1, 1]} : vector<64x16xf32> to vector<16x16xf32>
    %230 = vector.extract_strided_slice %202 {offsets = [0, 8], sizes = [16, 8], strides = [1, 1]} : vector<16x32xf32> to vector<16x8xf32>
    %cst_65 = arith.constant dense<0.000000e+00> : vector<16x8xf32>
    %231 = tpu.matmul %229, %230, %cst_65 {dimension_numbers = #tpu.dot_dimension_numbers<[1], [0], [0], [1], [0, 0, 1, 1], [], []>} : vector<16x16xf32>, vector<16x8xf32>, vector<16x8xf32> -> vector<16x8xf32>
    %232 = vector.extract_strided_slice %225 {offsets = [32, 0], sizes = [16, 16], strides = [1, 1]} : vector<64x16xf32> to vector<16x16xf32>
    %233 = vector.extract_strided_slice %202 {offsets = [0, 16], sizes = [16, 8], strides = [1, 1]} : vector<16x32xf32> to vector<16x8xf32>
    %cst_66 = arith.constant dense<0.000000e+00> : vector<16x8xf32>
    %234 = tpu.matmul %232, %233, %cst_66 {dimension_numbers = #tpu.dot_dimension_numbers<[1], [0], [0], [1], [0, 0, 1, 1], [], []>} : vector<16x16xf32>, vector<16x8xf32>, vector<16x8xf32> -> vector<16x8xf32>
    %235 = vector.extract_strided_slice %225 {offsets = [48, 0], sizes = [16, 16], strides = [1, 1]} : vector<64x16xf32> to vector<16x16xf32>
    %236 = vector.extract_strided_slice %202 {offsets = [0, 24], sizes = [16, 8], strides = [1, 1]} : vector<16x32xf32> to vector<16x8xf32>
    %cst_67 = arith.constant dense<0.000000e+00> : vector<16x8xf32>
    %237 = tpu.matmul %235, %236, %cst_67 {dimension_numbers = #tpu.dot_dimension_numbers<[1], [0], [0], [1], [0, 0, 1, 1], [], []>} : vector<16x16xf32>, vector<16x8xf32>, vector<16x8xf32> -> vector<16x8xf32>
    %238 = tpu.concatenate %228, %231, %234, %237 in 1 : vector<16x8xf32>, vector<16x8xf32>, vector<16x8xf32>, vector<16x8xf32> -> vector<16x32xf32>
    %cst_68 = arith.constant dense<0.000000e+00> : vector<16x32xf32>
    %239 = tpu.matmul %238, %170, %cst_68 {dimension_numbers = #tpu.dot_dimension_numbers<[1], [0], [0], [1], [0, 0, 1, 1], [], []>} : vector<16x32xf32>, vector<32x32xf32>, vector<16x32xf32> -> vector<16x32xf32>
    %240 = arith.addf %155, %239 : vector<16x32xf32>
    %241 = vector.broadcast %162 : vector<1x32xf32> to vector<16x32xf32>
    %242 = arith.addf %240, %241 : vector<16x32xf32>
    %cst_69 = arith.constant dense<0.000000e+00> : vector<16xf32>
    %243 = vector.multi_reduction <add>, %242, %cst_69 [1] : vector<16x32xf32> to vector<16xf32>
    %244 = vector.shape_cast %243 : vector<16xf32> to vector<16x1xf32>
    %cst_70 = arith.constant 3.200000e+01 : f32
    %245 = vector.broadcast %cst_70 : f32 to vector<16x1xf32>
    %246 = arith.divf %244, %245 : vector<16x1xf32>
    %247 = vector.broadcast %246 : vector<16x1xf32> to vector<16x32xf32>
    %248 = arith.subf %242, %247 : vector<16x32xf32>
    %249 = arith.mulf %248, %248 : vector<16x32xf32>
    %cst_71 = arith.constant dense<0.000000e+00> : vector<16xf32>
    %250 = vector.multi_reduction <add>, %249, %cst_71 [1] : vector<16x32xf32> to vector<16xf32>
    %251 = vector.shape_cast %250 : vector<16xf32> to vector<16x1xf32>
    %cst_72 = arith.constant 3.200000e+01 : f32
    %252 = vector.broadcast %cst_72 : f32 to vector<16x1xf32>
    %253 = arith.divf %251, %252 : vector<16x1xf32>
    %254 = vector.broadcast %246 : vector<16x1xf32> to vector<16x32xf32>
    %255 = arith.subf %242, %254 : vector<16x32xf32>
    %cst_73 = arith.constant 9.99999974E-6 : f32
    %256 = vector.broadcast %cst_73 : f32 to vector<16x1xf32>
    %257 = arith.addf %253, %256 : vector<16x1xf32>
    %258 = math.rsqrt %257 : vector<16x1xf32>
    %259 = vector.broadcast %258 : vector<16x1xf32> to vector<16x32xf32>
    %260 = arith.mulf %255, %259 : vector<16x32xf32>
    %261 = vector.broadcast %160 : vector<1x32xf32> to vector<16x32xf32>
    %262 = arith.mulf %260, %261 : vector<16x32xf32>
    %263 = vector.broadcast %161 : vector<1x32xf32> to vector<16x32xf32>
    %264 = arith.addf %262, %263 : vector<16x32xf32>
    %cst_74 = arith.constant dense<0.000000e+00> : vector<16x128xf32>
    %265 = tpu.matmul %264, %168, %cst_74 {dimension_numbers = #tpu.dot_dimension_numbers<[1], [0], [0], [1], [0, 0, 1, 1], [], []>} : vector<16x32xf32>, vector<32x128xf32>, vector<16x128xf32> -> vector<16x128xf32>
    %266 = vector.broadcast %165 : vector<1x128xf32> to vector<16x128xf32>
    %267 = arith.addf %265, %266 : vector<16x128xf32>
    %cst_75 = arith.constant 5.000000e-01 : f32
    %268 = vector.broadcast %cst_75 : f32 to vector<16x128xf32>
    %269 = arith.mulf %268, %267 : vector<16x128xf32>
    %270 = arith.mulf %267, %267 : vector<16x128xf32>
    %271 = arith.mulf %267, %270 : vector<16x128xf32>
    %cst_76 = arith.constant 4.471500e-02 : f32
    %272 = vector.broadcast %cst_76 : f32 to vector<16x128xf32>
    %273 = arith.mulf %272, %271 : vector<16x128xf32>
    %274 = arith.addf %267, %273 : vector<16x128xf32>
    %cst_77 = arith.constant 0.797884583 : f32
    %275 = vector.broadcast %cst_77 : f32 to vector<16x128xf32>
    %276 = arith.mulf %275, %274 : vector<16x128xf32>
    %277 = math.tanh %276 : vector<16x128xf32>
    %cst_78 = arith.constant 1.000000e+00 : f32
    %278 = vector.broadcast %cst_78 : f32 to vector<16x128xf32>
    %279 = arith.addf %278, %277 : vector<16x128xf32>
    %280 = arith.mulf %269, %279 : vector<16x128xf32>
    %cst_79 = arith.constant dense<0.000000e+00> : vector<16x32xf32>
    %281 = tpu.matmul %280, %172, %cst_79 {dimension_numbers = #tpu.dot_dimension_numbers<[1], [0], [0], [1], [0, 0, 1, 1], [], []>} : vector<16x128xf32>, vector<128x32xf32>, vector<16x32xf32> -> vector<16x32xf32>
    %282 = arith.addf %242, %281 : vector<16x32xf32>
    %283 = vector.broadcast %163 : vector<1x32xf32> to vector<16x32xf32>
    %284 = arith.addf %282, %283 : vector<16x32xf32>
    %c2 = arith.constant 2 : index
    %c0_80 = arith.constant 0 : index
    %c0_81 = arith.constant 0 : index
    %285 = vector.load %arg2[%c2, %c0_80, %c0_81] : memref<3x8x128xf32, #tpu.memory_space<vmem>>, vector<1x8x128xf32>
    %286 = vector.shape_cast %285 : vector<1x8x128xf32> to vector<8x128xf32>
    %287 = vector.extract_strided_slice %286 {offsets = [0, 0], sizes = [1, 32], strides = [1, 1]} : vector<8x128xf32> to vector<1x32xf32>
    %288 = vector.extract_strided_slice %286 {offsets = [1, 0], sizes = [1, 32], strides = [1, 1]} : vector<8x128xf32> to vector<1x32xf32>
    %289 = vector.extract_strided_slice %286 {offsets = [2, 0], sizes = [1, 32], strides = [1, 1]} : vector<8x128xf32> to vector<1x32xf32>
    %290 = vector.extract_strided_slice %286 {offsets = [3, 0], sizes = [1, 32], strides = [1, 1]} : vector<8x128xf32> to vector<1x32xf32>
    %291 = vector.extract_strided_slice %286 {offsets = [4, 0], sizes = [1, 32], strides = [1, 1]} : vector<8x128xf32> to vector<1x32xf32>
    %292 = vector.extract_strided_slice %286 {offsets = [5, 0], sizes = [1, 32], strides = [1, 1]} : vector<8x128xf32> to vector<1x32xf32>
    %293 = vector.extract_strided_slice %286 {offsets = [6, 0], sizes = [1, 96], strides = [1, 1]} : vector<8x128xf32> to vector<1x96xf32>
    %294 = vector.extract_strided_slice %286 {offsets = [7, 0], sizes = [1, 128], strides = [1, 1]} : vector<8x128xf32> to vector<1x128xf32>
    %c2_82 = arith.constant 2 : index
    %c0_83 = arith.constant 0 : index
    %c0_84 = arith.constant 0 : index
    %295 = vector.load %arg3[%c2_82, %c0_83, %c0_84] : memref<3x32x256xf32, #tpu.memory_space<vmem>>, vector<1x32x256xf32>
    %296 = vector.shape_cast %295 : vector<1x32x256xf32> to vector<32x256xf32>
    %297 = vector.extract_strided_slice %296 {offsets = [0, 0], sizes = [32, 128], strides = [1, 1]} : vector<32x256xf32> to vector<32x128xf32>
    %298 = vector.extract_strided_slice %296 {offsets = [0, 128], sizes = [32, 96], strides = [1, 1]} : vector<32x256xf32> to vector<32x96xf32>
    %299 = vector.extract_strided_slice %296 {offsets = [0, 224], sizes = [32, 32], strides = [1, 1]} : vector<32x256xf32> to vector<32x32xf32>
    %c2_85 = arith.constant 2 : index
    %c0_86 = arith.constant 0 : index
    %c0_87 = arith.constant 0 : index
    %300 = vector.load %arg4[%c2_85, %c0_86, %c0_87] : memref<3x128x32xf32, #tpu.memory_space<vmem>>, vector<1x128x32xf32>
    %301 = vector.shape_cast %300 : vector<1x128x32xf32> to vector<128x32xf32>
    %cst_88 = arith.constant dense<0.000000e+00> : vector<16xf32>
    %302 = vector.multi_reduction <add>, %284, %cst_88 [1] : vector<16x32xf32> to vector<16xf32>
    %303 = vector.shape_cast %302 : vector<16xf32> to vector<16x1xf32>
    %cst_89 = arith.constant 3.200000e+01 : f32
    %304 = vector.broadcast %cst_89 : f32 to vector<16x1xf32>
    %305 = arith.divf %303, %304 : vector<16x1xf32>
    %306 = vector.broadcast %305 : vector<16x1xf32> to vector<16x32xf32>
    %307 = arith.subf %284, %306 : vector<16x32xf32>
    %308 = arith.mulf %307, %307 : vector<16x32xf32>
    %cst_90 = arith.constant dense<0.000000e+00> : vector<16xf32>
    %309 = vector.multi_reduction <add>, %308, %cst_90 [1] : vector<16x32xf32> to vector<16xf32>
    %310 = vector.shape_cast %309 : vector<16xf32> to vector<16x1xf32>
    %cst_91 = arith.constant 3.200000e+01 : f32
    %311 = vector.broadcast %cst_91 : f32 to vector<16x1xf32>
    %312 = arith.divf %310, %311 : vector<16x1xf32>
    %313 = vector.broadcast %305 : vector<16x1xf32> to vector<16x32xf32>
    %314 = arith.subf %284, %313 : vector<16x32xf32>
    %cst_92 = arith.constant 9.99999974E-6 : f32
    %315 = vector.broadcast %cst_92 : f32 to vector<16x1xf32>
    %316 = arith.addf %312, %315 : vector<16x1xf32>
    %317 = math.rsqrt %316 : vector<16x1xf32>
    %318 = vector.broadcast %317 : vector<16x1xf32> to vector<16x32xf32>
    %319 = arith.mulf %314, %318 : vector<16x32xf32>
    %320 = vector.broadcast %287 : vector<1x32xf32> to vector<16x32xf32>
    %321 = arith.mulf %319, %320 : vector<16x32xf32>
    %322 = vector.broadcast %288 : vector<1x32xf32> to vector<16x32xf32>
    %323 = arith.addf %321, %322 : vector<16x32xf32>
    %cst_93 = arith.constant dense<0.000000e+00> : vector<16x96xf32>
    %324 = tpu.matmul %323, %298, %cst_93 {dimension_numbers = #tpu.dot_dimension_numbers<[1], [0], [0], [1], [0, 0, 1, 1], [], []>} : vector<16x32xf32>, vector<32x96xf32>, vector<16x96xf32> -> vector<16x96xf32>
    %325 = vector.broadcast %293 : vector<1x96xf32> to vector<16x96xf32>
    %326 = arith.addf %324, %325 : vector<16x96xf32>
    %327 = vector.extract_strided_slice %326 {offsets = [0, 0], sizes = [16, 32], strides = [1, 1]} : vector<16x96xf32> to vector<16x32xf32>
    %cst_94 = arith.constant 0.353553385 : f32
    %328 = vector.broadcast %cst_94 : f32 to vector<16x32xf32>
    %329 = arith.mulf %327, %328 : vector<16x32xf32>
    %330 = vector.extract_strided_slice %326 {offsets = [0, 32], sizes = [16, 32], strides = [1, 1]} : vector<16x96xf32> to vector<16x32xf32>
    %331 = vector.extract_strided_slice %326 {offsets = [0, 64], sizes = [16, 32], strides = [1, 1]} : vector<16x96xf32> to vector<16x32xf32>
    %332 = vector.extract_strided_slice %329 {offsets = [0, 0], sizes = [16, 8], strides = [1, 1]} : vector<16x32xf32> to vector<16x8xf32>
    %333 = vector.extract_strided_slice %330 {offsets = [0, 0], sizes = [16, 8], strides = [1, 1]} : vector<16x32xf32> to vector<16x8xf32>
    %cst_95 = arith.constant dense<0.000000e+00> : vector<16x16xf32>
    %334 = tpu.matmul %332, %333, %cst_95 {dimension_numbers = #tpu.dot_dimension_numbers<[1], [1], [0], [0], [0, 0, 1, 0], [], []>} : vector<16x8xf32>, vector<16x8xf32>, vector<16x16xf32> -> vector<16x16xf32>
    %335 = vector.extract_strided_slice %329 {offsets = [0, 8], sizes = [16, 8], strides = [1, 1]} : vector<16x32xf32> to vector<16x8xf32>
    %336 = vector.extract_strided_slice %330 {offsets = [0, 8], sizes = [16, 8], strides = [1, 1]} : vector<16x32xf32> to vector<16x8xf32>
    %cst_96 = arith.constant dense<0.000000e+00> : vector<16x16xf32>
    %337 = tpu.matmul %335, %336, %cst_96 {dimension_numbers = #tpu.dot_dimension_numbers<[1], [1], [0], [0], [0, 0, 1, 0], [], []>} : vector<16x8xf32>, vector<16x8xf32>, vector<16x16xf32> -> vector<16x16xf32>
    %338 = vector.extract_strided_slice %329 {offsets = [0, 16], sizes = [16, 8], strides = [1, 1]} : vector<16x32xf32> to vector<16x8xf32>
    %339 = vector.extract_strided_slice %330 {offsets = [0, 16], sizes = [16, 8], strides = [1, 1]} : vector<16x32xf32> to vector<16x8xf32>
    %cst_97 = arith.constant dense<0.000000e+00> : vector<16x16xf32>
    %340 = tpu.matmul %338, %339, %cst_97 {dimension_numbers = #tpu.dot_dimension_numbers<[1], [1], [0], [0], [0, 0, 1, 0], [], []>} : vector<16x8xf32>, vector<16x8xf32>, vector<16x16xf32> -> vector<16x16xf32>
    %341 = vector.extract_strided_slice %329 {offsets = [0, 24], sizes = [16, 8], strides = [1, 1]} : vector<16x32xf32> to vector<16x8xf32>
    %342 = vector.extract_strided_slice %330 {offsets = [0, 24], sizes = [16, 8], strides = [1, 1]} : vector<16x32xf32> to vector<16x8xf32>
    %cst_98 = arith.constant dense<0.000000e+00> : vector<16x16xf32>
    %343 = tpu.matmul %341, %342, %cst_98 {dimension_numbers = #tpu.dot_dimension_numbers<[1], [1], [0], [0], [0, 0, 1, 0], [], []>} : vector<16x8xf32>, vector<16x8xf32>, vector<16x16xf32> -> vector<16x16xf32>
    %344 = tpu.concatenate %334, %337, %340, %343 in 0 : vector<16x16xf32>, vector<16x16xf32>, vector<16x16xf32>, vector<16x16xf32> -> vector<64x16xf32>
    %345 = arith.addf %344, %26 : vector<64x16xf32>
    %cst_99 = arith.constant dense<0xFF800000> : vector<64xf32>
    %346 = vector.multi_reduction <maximumf>, %345, %cst_99 [1] : vector<64x16xf32> to vector<64xf32>
    %347 = vector.shape_cast %346 : vector<64xf32> to vector<64x1xf32>
    %348 = vector.broadcast %347 : vector<64x1xf32> to vector<64x16xf32>
    %349 = arith.subf %345, %348 : vector<64x16xf32>
    %350 = math.exp %349 : vector<64x16xf32>
    %cst_100 = arith.constant dense<0.000000e+00> : vector<64xf32>
    %351 = vector.multi_reduction <add>, %350, %cst_100 [1] : vector<64x16xf32> to vector<64xf32>
    %352 = vector.shape_cast %351 : vector<64xf32> to vector<64x1xf32>
    %353 = vector.broadcast %352 : vector<64x1xf32> to vector<64x16xf32>
    %354 = arith.divf %350, %353 : vector<64x16xf32>
    %355 = vector.extract_strided_slice %354 {offsets = [0, 0], sizes = [16, 16], strides = [1, 1]} : vector<64x16xf32> to vector<16x16xf32>
    %356 = vector.extract_strided_slice %331 {offsets = [0, 0], sizes = [16, 8], strides = [1, 1]} : vector<16x32xf32> to vector<16x8xf32>
    %cst_101 = arith.constant dense<0.000000e+00> : vector<16x8xf32>
    %357 = tpu.matmul %355, %356, %cst_101 {dimension_numbers = #tpu.dot_dimension_numbers<[1], [0], [0], [1], [0, 0, 1, 1], [], []>} : vector<16x16xf32>, vector<16x8xf32>, vector<16x8xf32> -> vector<16x8xf32>
    %358 = vector.extract_strided_slice %354 {offsets = [16, 0], sizes = [16, 16], strides = [1, 1]} : vector<64x16xf32> to vector<16x16xf32>
    %359 = vector.extract_strided_slice %331 {offsets = [0, 8], sizes = [16, 8], strides = [1, 1]} : vector<16x32xf32> to vector<16x8xf32>
    %cst_102 = arith.constant dense<0.000000e+00> : vector<16x8xf32>
    %360 = tpu.matmul %358, %359, %cst_102 {dimension_numbers = #tpu.dot_dimension_numbers<[1], [0], [0], [1], [0, 0, 1, 1], [], []>} : vector<16x16xf32>, vector<16x8xf32>, vector<16x8xf32> -> vector<16x8xf32>
    %361 = vector.extract_strided_slice %354 {offsets = [32, 0], sizes = [16, 16], strides = [1, 1]} : vector<64x16xf32> to vector<16x16xf32>
    %362 = vector.extract_strided_slice %331 {offsets = [0, 16], sizes = [16, 8], strides = [1, 1]} : vector<16x32xf32> to vector<16x8xf32>
    %cst_103 = arith.constant dense<0.000000e+00> : vector<16x8xf32>
    %363 = tpu.matmul %361, %362, %cst_103 {dimension_numbers = #tpu.dot_dimension_numbers<[1], [0], [0], [1], [0, 0, 1, 1], [], []>} : vector<16x16xf32>, vector<16x8xf32>, vector<16x8xf32> -> vector<16x8xf32>
    %364 = vector.extract_strided_slice %354 {offsets = [48, 0], sizes = [16, 16], strides = [1, 1]} : vector<64x16xf32> to vector<16x16xf32>
    %365 = vector.extract_strided_slice %331 {offsets = [0, 24], sizes = [16, 8], strides = [1, 1]} : vector<16x32xf32> to vector<16x8xf32>
    %cst_104 = arith.constant dense<0.000000e+00> : vector<16x8xf32>
    %366 = tpu.matmul %364, %365, %cst_104 {dimension_numbers = #tpu.dot_dimension_numbers<[1], [0], [0], [1], [0, 0, 1, 1], [], []>} : vector<16x16xf32>, vector<16x8xf32>, vector<16x8xf32> -> vector<16x8xf32>
    %367 = tpu.concatenate %357, %360, %363, %366 in 1 : vector<16x8xf32>, vector<16x8xf32>, vector<16x8xf32>, vector<16x8xf32> -> vector<16x32xf32>
    %cst_105 = arith.constant dense<0.000000e+00> : vector<16x32xf32>
    %368 = tpu.matmul %367, %299, %cst_105 {dimension_numbers = #tpu.dot_dimension_numbers<[1], [0], [0], [1], [0, 0, 1, 1], [], []>} : vector<16x32xf32>, vector<32x32xf32>, vector<16x32xf32> -> vector<16x32xf32>
    %369 = arith.addf %284, %368 : vector<16x32xf32>
    %370 = vector.broadcast %291 : vector<1x32xf32> to vector<16x32xf32>
    %371 = arith.addf %369, %370 : vector<16x32xf32>
    %cst_106 = arith.constant dense<0.000000e+00> : vector<16xf32>
    %372 = vector.multi_reduction <add>, %371, %cst_106 [1] : vector<16x32xf32> to vector<16xf32>
    %373 = vector.shape_cast %372 : vector<16xf32> to vector<16x1xf32>
    %cst_107 = arith.constant 3.200000e+01 : f32
    %374 = vector.broadcast %cst_107 : f32 to vector<16x1xf32>
    %375 = arith.divf %373, %374 : vector<16x1xf32>
    %376 = vector.broadcast %375 : vector<16x1xf32> to vector<16x32xf32>
    %377 = arith.subf %371, %376 : vector<16x32xf32>
    %378 = arith.mulf %377, %377 : vector<16x32xf32>
    %cst_108 = arith.constant dense<0.000000e+00> : vector<16xf32>
    %379 = vector.multi_reduction <add>, %378, %cst_108 [1] : vector<16x32xf32> to vector<16xf32>
    %380 = vector.shape_cast %379 : vector<16xf32> to vector<16x1xf32>
    %cst_109 = arith.constant 3.200000e+01 : f32
    %381 = vector.broadcast %cst_109 : f32 to vector<16x1xf32>
    %382 = arith.divf %380, %381 : vector<16x1xf32>
    %383 = vector.broadcast %375 : vector<16x1xf32> to vector<16x32xf32>
    %384 = arith.subf %371, %383 : vector<16x32xf32>
    %cst_110 = arith.constant 9.99999974E-6 : f32
    %385 = vector.broadcast %cst_110 : f32 to vector<16x1xf32>
    %386 = arith.addf %382, %385 : vector<16x1xf32>
    %387 = math.rsqrt %386 : vector<16x1xf32>
    %388 = vector.broadcast %387 : vector<16x1xf32> to vector<16x32xf32>
    %389 = arith.mulf %384, %388 : vector<16x32xf32>
    %390 = vector.broadcast %289 : vector<1x32xf32> to vector<16x32xf32>
    %391 = arith.mulf %389, %390 : vector<16x32xf32>
    %392 = vector.broadcast %290 : vector<1x32xf32> to vector<16x32xf32>
    %393 = arith.addf %391, %392 : vector<16x32xf32>
    %cst_111 = arith.constant dense<0.000000e+00> : vector<16x128xf32>
    %394 = tpu.matmul %393, %297, %cst_111 {dimension_numbers = #tpu.dot_dimension_numbers<[1], [0], [0], [1], [0, 0, 1, 1], [], []>} : vector<16x32xf32>, vector<32x128xf32>, vector<16x128xf32> -> vector<16x128xf32>
    %395 = vector.broadcast %294 : vector<1x128xf32> to vector<16x128xf32>
    %396 = arith.addf %394, %395 : vector<16x128xf32>
    %cst_112 = arith.constant 5.000000e-01 : f32
    %397 = vector.broadcast %cst_112 : f32 to vector<16x128xf32>
    %398 = arith.mulf %397, %396 : vector<16x128xf32>
    %399 = arith.mulf %396, %396 : vector<16x128xf32>
    %400 = arith.mulf %396, %399 : vector<16x128xf32>
    %cst_113 = arith.constant 4.471500e-02 : f32
    %401 = vector.broadcast %cst_113 : f32 to vector<16x128xf32>
    %402 = arith.mulf %401, %400 : vector<16x128xf32>
    %403 = arith.addf %396, %402 : vector<16x128xf32>
    %cst_114 = arith.constant 0.797884583 : f32
    %404 = vector.broadcast %cst_114 : f32 to vector<16x128xf32>
    %405 = arith.mulf %404, %403 : vector<16x128xf32>
    %406 = math.tanh %405 : vector<16x128xf32>
    %cst_115 = arith.constant 1.000000e+00 : f32
    %407 = vector.broadcast %cst_115 : f32 to vector<16x128xf32>
    %408 = arith.addf %407, %406 : vector<16x128xf32>
    %409 = arith.mulf %398, %408 : vector<16x128xf32>
    %cst_116 = arith.constant dense<0.000000e+00> : vector<16x32xf32>
    %410 = tpu.matmul %409, %301, %cst_116 {dimension_numbers = #tpu.dot_dimension_numbers<[1], [0], [0], [1], [0, 0, 1, 1], [], []>} : vector<16x128xf32>, vector<128x32xf32>, vector<16x32xf32> -> vector<16x32xf32>
    %411 = arith.addf %371, %410 : vector<16x32xf32>
    %412 = vector.broadcast %292 : vector<1x32xf32> to vector<16x32xf32>
    %413 = arith.addf %411, %412 : vector<16x32xf32>
    %cst_117 = arith.constant dense<0.000000e+00> : vector<16xf32>
    %414 = vector.multi_reduction <add>, %413, %cst_117 [1] : vector<16x32xf32> to vector<16xf32>
    %415 = vector.shape_cast %414 : vector<16xf32> to vector<16x1xf32>
    %cst_118 = arith.constant 3.200000e+01 : f32
    %416 = vector.broadcast %cst_118 : f32 to vector<16x1xf32>
    %417 = arith.divf %415, %416 : vector<16x1xf32>
    %418 = vector.broadcast %417 : vector<16x1xf32> to vector<16x32xf32>
    %419 = arith.subf %413, %418 : vector<16x32xf32>
    %420 = arith.mulf %419, %419 : vector<16x32xf32>
    %cst_119 = arith.constant dense<0.000000e+00> : vector<16xf32>
    %421 = vector.multi_reduction <add>, %420, %cst_119 [1] : vector<16x32xf32> to vector<16xf32>
    %422 = vector.shape_cast %421 : vector<16xf32> to vector<16x1xf32>
    %cst_120 = arith.constant 3.200000e+01 : f32
    %423 = vector.broadcast %cst_120 : f32 to vector<16x1xf32>
    %424 = arith.divf %422, %423 : vector<16x1xf32>
    %425 = vector.broadcast %417 : vector<16x1xf32> to vector<16x32xf32>
    %426 = arith.subf %413, %425 : vector<16x32xf32>
    %cst_121 = arith.constant 9.99999974E-6 : f32
    %427 = vector.broadcast %cst_121 : f32 to vector<16x1xf32>
    %428 = arith.addf %424, %427 : vector<16x1xf32>
    %429 = math.rsqrt %428 : vector<16x1xf32>
    %430 = vector.broadcast %429 : vector<16x1xf32> to vector<16x32xf32>
    %431 = arith.mulf %426, %430 : vector<16x32xf32>
    %432 = vector.broadcast %4 : vector<1x32xf32> to vector<16x32xf32>
    %433 = arith.mulf %431, %432 : vector<16x32xf32>
    %434 = vector.broadcast %5 : vector<1x32xf32> to vector<16x32xf32>
    %435 = arith.addf %433, %434 : vector<16x32xf32>
    %436 = vector.broadcast %6 : vector<1x32xf32> to vector<16x32xf32>
    %437 = arith.mulf %435, %436 : vector<16x32xf32>
    %cst_122 = arith.constant dense<0.000000e+00> : vector<16xf32>
    %438 = vector.multi_reduction <add>, %437, %cst_122 [1] : vector<16x32xf32> to vector<16xf32>
    %439 = vector.shape_cast %438 : vector<16xf32> to vector<16x1xf32>
    %440 = vector.broadcast %7 : vector<1x1xf32> to vector<16x1xf32>
    %441 = arith.addf %439, %440 : vector<16x1xf32>
    %442 = vector.shape_cast %441 : vector<16x1xf32> to vector<16x1xf32>
    %443 = vector.broadcast %442 : vector<16x1xf32> to vector<16x128xf32>
    %c0_123 = arith.constant 0 : index
    %c0_124 = arith.constant 0 : index
    %444 = vector.load %arg5[%c0_123, %c0_124] : memref<16x128xf32, #tpu.memory_space<vmem>>, vector<16x128xf32>
    tpu.vector_store %arg5[%c0_123, %c0_124], %443 {strides = array<i32>} : memref<16x128xf32, #tpu.memory_space<vmem>>, vector<16x128xf32>,
    return
  }
}

</mosaic_0001>

<llo_original>
// kernel: tpu_custom_call.1
$region0: #{tpu_custom_call.1}
  #allocation0 [shape = 'u32[]', space=smem, size = 0x4, offset = 0x4, fixed_abs, tag = 'smem constant byte address 0x4 - core index']
  #allocation1 [shape = 'u32[144,128]{1,0:T(1,128)}', space=vmem, size = 0x12000, scoped, tag = 'internal scratch']
  %s0 = inlined_call_operand.vmem [shape: f32[16,32], index: 0, kind: input, shape index: {}]
  %s1 = inlined_call_operand.vmem [shape: f32[24,32], index: 1, kind: input, shape index: {}]
  %s2 = inlined_call_operand.vmem [shape: f32[3,8,128], index: 2, kind: input, shape index: {}]
  %s3 = inlined_call_operand.vmem [shape: f32[3,32,256], index: 3, kind: input, shape index: {}]
  %s4 = inlined_call_operand.vmem [shape: f32[3,128,32], index: 4, kind: input, shape index: {}]
  %s5 = inlined_call_operand.hbm [shape: f32[16,128], index: 5, kind: output, shape index: {}]
  %s6 = sld [smem:[#allocation0]]
  $region30: #{tpu_custom_call.1} parent=0
    _
  %s8 = ssub.s32 1, %s6
  %s9 = scalar_select 0, %s8, %s6
  $region1: #{tpu_custom_call.1} parent=0
    #allocation2 [shape = 'u8[8192]{0}', space=vmem, size = 0x2000, scoped, tag = 'output window, operand 0, single buffered']
    #allocation3 [shape = 's32[1]{0}', space=sflag, size = 0x4, scoped, tag = 'scoped memory for tpu_custom_call.1']
    %10 = vsyncpa [#allocation3], 0
    // Predicated region
    $region2: #{tpu_custom_call.1} parent=1 // pred_check
      _
    $region3: #{tpu_custom_call.1} parent=1 // pred_check_branch
      %12 = sbr.rel (0) target = $region5
    $region4: #{tpu_custom_call.1} parent=1 // pred_region
      _
    $region5: #{tpu_custom_call.1} parent=1 // pred_fallthru
      _
    // Predicated region
    $region6: #{tpu_custom_call.1} parent=1 // pred_check
      _
    $region7: #{tpu_custom_call.1} parent=1 // pred_check_branch
      %14 = sbr.rel (0) target = $region9
    $region8: #{tpu_custom_call.1} parent=1 // pred_region
      _
    $region9: #{tpu_custom_call.1} parent=1 // pred_fallthru
      _
    // Predicated region
    $region10: #{tpu_custom_call.1} parent=1 // pred_check
      _
    $region11: #{tpu_custom_call.1} parent=1 // pred_check_branch
      %16 = sbr.rel (0) target = $region13
    $region12: #{tpu_custom_call.1} parent=1 // pred_region
      _
    $region13: #{tpu_custom_call.1} parent=1 // pred_fallthru
      _
    // Predicated region
    $region14: #{tpu_custom_call.1} parent=1 // pred_check
      _
    $region15: #{tpu_custom_call.1} parent=1 // pred_check_branch
      %18 = sbr.rel (0) target = $region17
    $region16: #{tpu_custom_call.1} parent=1 // pred_region
      _
    $region17: #{tpu_custom_call.1} parent=1 // pred_fallthru
      _
    // Predicated region
    $region18: #{tpu_custom_call.1} parent=1 // pred_check
      _
    $region19: #{tpu_custom_call.1} parent=1 // pred_check_branch
      %20 = sbr.rel (0) target = $region21
    $region20: #{tpu_custom_call.1} parent=1 // pred_region
      _
    $region21: #{tpu_custom_call.1} parent=1 // pred_fallthru
      _
    %v21 = vld [vmem:[%s1] sm:$0xff]
    %v22 = vld [vmem:[%s1 + $0x8] sm:$0xff]
    %v23 = vld [vmem:[%s1 + $0x10] sm:$0xff]
    %v24 = vld [vmem:[%s0] sm:$0xff]
    %v25 = vld [vmem:[%s0 + $0x8] sm:$0xff]
    %v26 = vlaneseq
    %v27 = vshrl.u32 %v26, 7
    %v28 = vsub.s32 0, %v27
    %v29 = vrot.slane %v23, %v28
    %v30 = vmul.f32 %v24, %v29
    %v31 = vmul.f32 %v25, %v29
    %v32 = vlaneseq
    %v33 = vshrl.u32 %v32, 7
    %v34 = vsub.s32 1, %v33
    %v35 = vrot.slane %v23, %v34
    %v36 = vadd.f32 %v30, %v35
    %v37 = vadd.f32 %v31, %v35
    %v38 = vadd.f32 %v36, %v21
    %v39 = vadd.f32 %v37, %v22
    %v40 = vlaneseq
    %v41 = vshrl.u32 %v40, 7
    %v42 = vadd.s32 %v41, 8
    %v43 = vlaneseq
    %v44 = vand.u32 %v43, 127
    %v45 = vshra.s32 %v41, 3
    %v46 = vshra.s32 %v42, 3
    %v47 = vshra.s32 %v44, 3
    %vm48 = vcmp.eq.s32.totalorder %v45, %v47
    %vm49 = vcmp.eq.s32.totalorder %v46, %v47
    %vm50 = vcmp.ge.s32.totalorder %v41, %v44
    %vm51 = vcmp.ge.s32.totalorder %v42, %v44
    %vm52 = vmand %vm48, %vm50
    %vm53 = vmand %vm49, %vm51
    %v54 = vsel %vm52, 0.0, -1e+30
    %v55 = vsel %vm53, 0.0, -1e+30
    %v56 = vld [vmem:[%s2] sm:$0xff]
    %v57 = vld [vmem:[%s3] sm:$0xff]
    %v58 = vld [vmem:[%s3 + $0x8] sm:$0xff]
    %v59 = vld [vmem:[%s3 + $0x10] sm:$0xff]
    %v60 = vld [vmem:[%s3 + $0x18] sm:$0xff]
    %v61 = vld [vmem:[%s3 + $0x20] sm:$0xff]
    %v62 = vld [vmem:[%s3 + $0x28] sm:$0xff]
    %v63 = vld [vmem:[%s3 + $0x30] sm:$0xff]
    %v64 = vld [vmem:[%s3 + $0x38] sm:$0xff]
    %v65 = vld [vmem:[%s4] sm:$0xff]
    %v66 = vld [vmem:[%s4 + $0x8] sm:$0xff]
    %v67 = vld [vmem:[%s4 + $0x10] sm:$0xff]
    %v68 = vld [vmem:[%s4 + $0x18] sm:$0xff]
    %v69 = vld [vmem:[%s4 + $0x20] sm:$0xff]
    %v70 = vld [vmem:[%s4 + $0x28] sm:$0xff]
    %v71 = vld [vmem:[%s4 + $0x30] sm:$0xff]
    %v72 = vld [vmem:[%s4 + $0x38] sm:$0xff]
    %v73 = vld [vmem:[%s4 + $0x40] sm:$0xff]
    %v74 = vld [vmem:[%s4 + $0x48] sm:$0xff]
    %v75 = vld [vmem:[%s4 + $0x50] sm:$0xff]
    %v76 = vld [vmem:[%s4 + $0x58] sm:$0xff]
    %v77 = vld [vmem:[%s4 + $0x60] sm:$0xff]
    %v78 = vld [vmem:[%s4 + $0x68] sm:$0xff]
    %v79 = vld [vmem:[%s4 + $0x70] sm:$0xff]
    %v80 = vld [vmem:[%s4 + $0x78] sm:$0xff]
    %vm81 = vcmask 261120
    %v82 = vsel %vm81, %v38, 0.0
    %83 = vadd.xlane.f32.xlu0 %v82
    %v84 = vpop.xlane.xlu0 %83
    %v85 = vsel %vm81, %v39, 0.0
    %86 = vadd.xlane.f32.xlu0 %v85
    %v87 = vpop.xlane.xlu0 %86
    %v88 = vrcp.pop 32.0
    %v89 = vmul.f32 %v84, %v88
    %v90 = vmul.f32 %v87, %v88
    %v91 = vsub.f32 %v38, %v89
    %v92 = vsub.f32 %v39, %v90
    %v93 = vmul.f32 %v91, %v91
    %v94 = vmul.f32 %v92, %v92
    %v95 = vsel %vm81, %v93, 0.0
    %96 = vadd.xlane.f32.xlu0 %v95
    %v97 = vpop.xlane.xlu0 %96
    %v98 = vsel %vm81, %v94, 0.0
    %99 = vadd.xlane.f32.xlu0 %v98
    %v100 = vpop.xlane.xlu0 %99
    %v101 = vmul.f32 %v97, %v88
    %v102 = vmul.f32 %v100, %v88
    %v103 = vadd.f32 %v101, 1e-05
    %v104 = vadd.f32 %v102, 1e-05
    %v105 = vrsqrt.pop %v103
    %v106 = vrsqrt.pop %v104
    %v107 = vmul.f32 %v91, %v105
    %v108 = vmul.f32 %v92, %v106
    %v109 = vlaneseq
    %v110 = vshrl.u32 %v109, 7
    %v111 = vsub.s32 0, %v110
    %v112 = vrot.slane %v56, %v111
    %v113 = vmul.f32 %v107, %v112
    %v114 = vmul.f32 %v108, %v112
    %v115 = vlaneseq
    %v116 = vshrl.u32 %v115, 7
    %v117 = vsub.s32 1, %v116
    %v118 = vrot.slane %v56, %v117
    %v119 = vadd.f32 %v113, %v118
    %v120 = vadd.f32 %v114, %v118
    %v121 = vlaneseq
    %v122 = vshrl.u32 %v121, 7
    %v123 = vsub.s32 6, %v122
    %v124 = vrot.slane %v56, %v123
    %v126 = vsel %vm81, %v119, 0
    %v129 = vsel %vm81, %v120, 0
    %131 = vmatprep.subr.mxu0 0.0
    %132 = vmatpush1.msra.mxu0 %v58
    %133 = vmatprep.subr.mxu0 0.0
    %134 = vmatpush1.msra.mxu0 %v60
    %135 = vmatprep.subr.mxu0 0.0
    %136 = vmatpush1.msra.mxu0 %v62
    %137 = vmatprep.subr.mxu0 0.0
    %138 = vmatpush1.msra.mxu0 %v64
    %139 = vmatprep.subr.mxu0 0.0
    %140 = vmatpush1.msra.mxu0 0.0
    %141 = vmatprep.subr.mxu0 0.0
    %142 = vmatpush1.msra.mxu0 0.0
    %143 = vmatprep.subr.mxu0 0.0
    %144 = vmatpush1.msra.mxu0 0.0
    %145 = vmatprep.subr.mxu0 0.0
    %146 = vmatpush1.msra.mxu0 0.0
    %147 = vmatprep.subr.mxu0 0.0
    %148 = vmatpush1.msra.mxu0 0.0
    %149 = vmatprep.subr.mxu0 0.0
    %150 = vmatpush1.msra.mxu0 0.0
    %151 = vmatprep.subr.mxu0 0.0
    %152 = vmatpush1.msra.mxu0 0.0
    %153 = vmatprep.subr.mxu0 0.0
    %154 = vmatpush1.msra.mxu0 0.0
    %155 = vmatprep.subr.mxu0 0.0
    %156 = vmatpush1.msra.mxu0 0.0
    %157 = vmatprep.subr.mxu0 0.0
    %158 = vmatpush1.msra.mxu0 0.0
    %159 = vmatprep.subr.mxu0 0.0
    %160 = vmatpush1.msra.mxu0 0.0
    %161 = vmatprep.subr.mxu0 0.0
    %162 = vmatpush1.msra.mxu0 0.0
    %163 = vmatprep.subr.mxu0 0.0
    %164 = vmatpush1.msra.mxu0 0.0
    %165 = vmatprep.subr.mxu0 0.0
    %166 = vmatpush1.msra.mxu0 0.0
    %167 = vmatprep.subr.mxu0 0.0
    %168 = vmatpush1.msra.mxu0 0.0
    %169 = vmatprep.subr.mxu0 0.0
    %170 = vmatpush1.msra.mxu0 0.0
    %171 = vmatprep.subr.mxu0 0.0
    %172 = vmatpush1.msra.mxu0 0.0
    %173 = vmatprep.subr.mxu0 0.0
    %174 = vmatpush1.msra.mxu0 0.0
    %175 = vmatprep.subr.mxu0 0.0
    %176 = vmatpush1.msra.mxu0 0.0
    %177 = vmatprep.subr.mxu0 0.0
    %178 = vmatpush1.msra.mxu0 0.0
    %179 = vmatprep.subr.mxu0 0.0
    %180 = vmatpush1.msra.mxu0 0.0
    %181 = vmatprep.subr.mxu0 0.0
    %182 = vmatpush1.msra.mxu0 0.0
    %183 = vmatprep.subr.mxu0 0.0
    %184 = vmatpush1.msra.mxu0 0.0
    %185 = vmatprep.subr.mxu0 0.0
    %186 = vmatpush1.msra.mxu0 0.0
    %187 = vmatprep.subr.mxu0 0.0
    %188 = vmatpush1.msra.mxu0 0.0
    %189 = vmatprep.subr.mxu0 0.0
    %190 = vmatpush1.msra.mxu0 0.0
    %191 = vmatprep.subr.mxu0 0.0
    %192 = vmatpush1.msra.mxu0 0.0
    %193 = vmatprep.subr.mxu0 0.0
    %194 = vmatpush1.msra.mxu0 0.0
    %195 = vmatprep.mubr.f32.mxu0 0.0
    %196 = vmatmul.mubr.f32.gmra.mrb[0].mxu0 %v126
    %v197 = vpop.f32.mrb[0].mxu0
    %v198 = vadd.f32 %v124, %v197
    %v199 = vpop.f32.mrb[0].mxu0
    %200 = vmatprep.mubr.f32.mxu0 0.0
    %201 = vmatmul.mubr.f32.gmra.mrb[0].mxu0 %v129
    %v202 = vpop.f32.mrb[0].mxu0
    %v203 = vadd.f32 %v124, %v202
    %v204 = vpop.f32.mrb[0].mxu0
    %205 = vdwg.mxu0
    %v206 = vmul.f32 %v198, 0.35355338
    %v207 = vmul.f32 %v203, 0.35355338
    %210 = vrot.lane.b32.xlu0 %v198, 96
    %v211 = vpop.permute.xlu0 %210
    %212 = vrot.lane.b32.xlu0 %v203, 96
    %v213 = vpop.permute.xlu0 %212
    %vm214 = vcmask 64512
    %v216 = vsel %vm214, %v206, 0
    %v219 = vsel %vm214, %v207, 0
    %v221 = vsel %vm214, %v211, 0
    %v223 = vsel %vm214, %v213, 0
    %225 = vmatprep.subr.mxu0 0.0
    %226 = vmatpush1.xpose.msra.mxu0 %v221
    %227 = vmatprep.subr.mxu0 0.0
    %228 = vmatpush1.xpose.msra.mxu0 %v223
    %229 = vmatprep.subr.mxu0 0.0
    %230 = vmatpush1.xpose.msra.mxu0 0.0
    %231 = vmatprep.subr.mxu0 0.0
    %232 = vmatpush1.xpose.msra.mxu0 0.0
    %233 = vmatprep.subr.mxu0 0.0
    %234 = vmatpush1.xpose.msra.mxu0 0.0
    %235 = vmatprep.subr.mxu0 0.0
    %236 = vmatpush1.xpose.msra.mxu0 0.0
    %237 = vmatprep.subr.mxu0 0.0
    %238 = vmatpush1.xpose.msra.mxu0 0.0
    %239 = vmatprep.subr.mxu0 0.0
    %240 = vmatpush1.xpose.msra.mxu0 0.0
    %241 = vmatprep.subr.mxu0 0.0
    %242 = vmatpush1.xpose.msra.mxu0 0.0
    %243 = vmatprep.subr.mxu0 0.0
    %244 = vmatpush1.xpose.msra.mxu0 0.0
    %245 = vmatprep.subr.mxu0 0.0
    %246 = vmatpush1.xpose.msra.mxu0 0.0
    %247 = vmatprep.subr.mxu0 0.0
    %248 = vmatpush1.xpose.msra.mxu0 0.0
    %249 = vmatprep.subr.mxu0 0.0
    %250 = vmatpush1.xpose.msra.mxu0 0.0
    %251 = vmatprep.subr.mxu0 0.0
    %252 = vmatpush1.xpose.msra.mxu0 0.0
    %253 = vmatprep.subr.mxu0 0.0
    %254 = vmatpush1.xpose.msra.mxu0 0.0
    %255 = vmatprep.subr.mxu0 0.0
    %256 = vmatpush1.xpose.msra.mxu0 0.0
    %257 = vmatprep.subr.mxu0 0.0
    %258 = vmatpush1.xpose.msra.mxu0 0.0
    %259 = vmatprep.subr.mxu0 0.0
    %260 = vmatpush1.xpose.msra.mxu0 0.0
    %261 = vmatprep.subr.mxu0 0.0
    %262 = vmatpush1.xpose.msra.mxu0 0.0
    %263 = vmatprep.subr.mxu0 0.0
    %264 = vmatpush1.xpose.msra.mxu0 0.0
    %265 = vmatprep.subr.mxu0 0.0
    %266 = vmatpush1.xpose.msra.mxu0 0.0
    %267 = vmatprep.subr.mxu0 0.0
    %268 = vmatpush1.xpose.msra.mxu0 0.0
    %269 = vmatprep.subr.mxu0 0.0
    %270 = vmatpush1.xpose.msra.mxu0 0.0
    %271 = vmatprep.subr.mxu0 0.0
    %272 = vmatpush1.xpose.msra.mxu0 0.0
    %273 = vmatprep.subr.mxu0 0.0
    %274 = vmatpush1.xpose.msra.mxu0 0.0
    %275 = vmatprep.subr.mxu0 0.0
    %276 = vmatpush1.xpose.msra.mxu0 0.0
    %277 = vmatprep.subr.mxu0 0.0
    %278 = vmatpush1.xpose.msra.mxu0 0.0
    %279 = vmatprep.subr.mxu0 0.0
    %280 = vmatpush1.xpose.msra.mxu0 0.0
    %281 = vmatprep.subr.mxu0 0.0
    %282 = vmatpush1.xpose.msra.mxu0 0.0
    %283 = vmatprep.subr.mxu0 0.0
    %284 = vmatpush1.xpose.msra.mxu0 0.0
    %285 = vmatprep.subr.mxu0 0.0
    %286 = vmatpush1.xpose.msra.mxu0 0.0
    %287 = vmatprep.subr.mxu0 0.0
    %288 = vmatpush1.xpose.msra.mxu0 0.0
    %289 = vmatprep.mubr.f32.mxu0 0.0
    %290 = vmatmul.mubr.f32.gmra.mrb[0].mxu0 %v216
    %v291 = vpop.f32.mrb[0].mxu0
    %v292 = vadd.f32 0.0, %v291
    %v293 = vpop.f32.mrb[0].mxu0
    %294 = vmatprep.mubr.f32.mxu0 0.0
    %295 = vmatmul.mubr.f32.gmra.mrb[0].mxu0 %v219
    %v296 = vpop.f32.mrb[0].mxu0
    %v297 = vadd.f32 0.0, %v296
    %v298 = vpop.f32.mrb[0].mxu0
    %299 = vdwg.mxu0
    %300 = vrot.lane.b32.xlu0 %v206, 120
    %v301 = vpop.permute.xlu0 %300
    %302 = vrot.lane.b32.xlu0 %v207, 120
    %v303 = vpop.permute.xlu0 %302
    %304 = vrot.lane.b32.xlu0 %v198, 88
    %v305 = vpop.permute.xlu0 %304
    %306 = vrot.lane.b32.xlu0 %v203, 88
    %v307 = vpop.permute.xlu0 %306
    %v308 = vsel %vm214, %v301, 0
    %v310 = vsel %vm214, %v303, 0
    %v312 = vsel %vm214, %v305, 0
    %v314 = vsel %vm214, %v307, 0
    %316 = vmatprep.subr.mxu0 0.0
    %317 = vmatpush1.xpose.msra.mxu0 %v312
    %318 = vmatprep.subr.mxu0 0.0
    %319 = vmatpush1.xpose.msra.mxu0 %v314
    %320 = vmatprep.subr.mxu0 0.0
    %321 = vmatpush1.xpose.msra.mxu0 0.0
    %322 = vmatprep.subr.mxu0 0.0
    %323 = vmatpush1.xpose.msra.mxu0 0.0
    %324 = vmatprep.subr.mxu0 0.0
    %325 = vmatpush1.xpose.msra.mxu0 0.0
    %326 = vmatprep.subr.mxu0 0.0
    %327 = vmatpush1.xpose.msra.mxu0 0.0
    %328 = vmatprep.subr.mxu0 0.0
    %329 = vmatpush1.xpose.msra.mxu0 0.0
    %330 = vmatprep.subr.mxu0 0.0
    %331 = vmatpush1.xpose.msra.mxu0 0.0
    %332 = vmatprep.subr.mxu0 0.0
    %333 = vmatpush1.xpose.msra.mxu0 0.0
    %334 = vmatprep.subr.mxu0 0.0
    %335 = vmatpush1.xpose.msra.mxu0 0.0
    %336 = vmatprep.subr.mxu0 0.0
    %337 = vmatpush1.xpose.msra.mxu0 0.0
    %338 = vmatprep.subr.mxu0 0.0
    %339 = vmatpush1.xpose.msra.mxu0 0.0
    %340 = vmatprep.subr.mxu0 0.0
    %341 = vmatpush1.xpose.msra.mxu0 0.0
    %342 = vmatprep.subr.mxu0 0.0
    %343 = vmatpush1.xpose.msra.mxu0 0.0
    %344 = vmatprep.subr.mxu0 0.0
    %345 = vmatpush1.xpose.msra.mxu0 0.0
    %346 = vmatprep.subr.mxu0 0.0
    %347 = vmatpush1.xpose.msra.mxu0 0.0
    %348 = vmatprep.subr.mxu0 0.0
    %349 = vmatpush1.xpose.msra.mxu0 0.0
    %350 = vmatprep.subr.mxu0 0.0
    %351 = vmatpush1.xpose.msra.mxu0 0.0
    %352 = vmatprep.subr.mxu0 0.0
    %353 = vmatpush1.xpose.msra.mxu0 0.0
    %354 = vmatprep.subr.mxu0 0.0
    %355 = vmatpush1.xpose.msra.mxu0 0.0
    %356 = vmatprep.subr.mxu0 0.0
    %357 = vmatpush1.xpose.msra.mxu0 0.0
    %358 = vmatprep.subr.mxu0 0.0
    %359 = vmatpush1.xpose.msra.mxu0 0.0
    %360 = vmatprep.subr.mxu0 0.0
    %361 = vmatpush1.xpose.msra.mxu0 0.0
    %362 = vmatprep.subr.mxu0 0.0
    %363 = vmatpush1.xpose.msra.mxu0 0.0
    %364 = vmatprep.subr.mxu0 0.0
    %365 = vmatpush1.xpose.msra.mxu0 0.0
    %366 = vmatprep.subr.mxu0 0.0
    %367 = vmatpush1.xpose.msra.mxu0 0.0
    %368 = vmatprep.subr.mxu0 0.0
    %369 = vmatpush1.xpose.msra.mxu0 0.0
    %370 = vmatprep.subr.mxu0 0.0
    %371 = vmatpush1.xpose.msra.mxu0 0.0
    %372 = vmatprep.subr.mxu0 0.0
    %373 = vmatpush1.xpose.msra.mxu0 0.0
    %374 = vmatprep.subr.mxu0 0.0
    %375 = vmatpush1.xpose.msra.mxu0 0.0
    %376 = vmatprep.subr.mxu0 0.0
    %377 = vmatpush1.xpose.msra.mxu0 0.0
    %378 = vmatprep.subr.mxu0 0.0
    %379 = vmatpush1.xpose.msra.mxu0 0.0
    %380 = vmatprep.mubr.f32.mxu0 0.0
    %381 = vmatmul.mubr.f32.gmra.mrb[0].mxu0 %v308
    %v382 = vpop.f32.mrb[0].mxu0
    %v383 = vadd.f32 0.0, %v382
    %v384 = vpop.f32.mrb[0].mxu0
    %385 = vmatprep.mubr.f32.mxu0 0.0
    %386 = vmatmul.mubr.f32.gmra.mrb[0].mxu0 %v310
    %v387 = vpop.f32.mrb[0].mxu0
    %v388 = vadd.f32 0.0, %v387
    %v389 = vpop.f32.mrb[0].mxu0
    %390 = vdwg.mxu0
    %391 = vrot.lane.b32.xlu0 %v206, 112
    %v392 = vpop.permute.xlu0 %391
    %393 = vrot.lane.b32.xlu0 %v207, 112
    %v394 = vpop.permute.xlu0 %393
    %395 = vrot.lane.b32.xlu0 %v198, 80
    %v396 = vpop.permute.xlu0 %395
    %397 = vrot.lane.b32.xlu0 %v203, 80
    %v398 = vpop.permute.xlu0 %397
    %v399 = vsel %vm214, %v392, 0
    %v401 = vsel %vm214, %v394, 0
    %v403 = vsel %vm214, %v396, 0
    %v405 = vsel %vm214, %v398, 0
    %407 = vmatprep.subr.mxu0 0.0
    %408 = vmatpush1.xpose.msra.mxu0 %v403
    %409 = vmatprep.subr.mxu0 0.0
    %410 = vmatpush1.xpose.msra.mxu0 %v405
    %411 = vmatprep.subr.mxu0 0.0
    %412 = vmatpush1.xpose.msra.mxu0 0.0
    %413 = vmatprep.subr.mxu0 0.0
    %414 = vmatpush1.xpose.msra.mxu0 0.0
    %415 = vmatprep.subr.mxu0 0.0
    %416 = vmatpush1.xpose.msra.mxu0 0.0
    %417 = vmatprep.subr.mxu0 0.0
    %418 = vmatpush1.xpose.msra.mxu0 0.0
    %419 = vmatprep.subr.mxu0 0.0
    %420 = vmatpush1.xpose.msra.mxu0 0.0
    %421 = vmatprep.subr.mxu0 0.0
    %422 = vmatpush1.xpose.msra.mxu0 0.0
    %423 = vmatprep.subr.mxu0 0.0
    %424 = vmatpush1.xpose.msra.mxu0 0.0
    %425 = vmatprep.subr.mxu0 0.0
    %426 = vmatpush1.xpose.msra.mxu0 0.0
    %427 = vmatprep.subr.mxu0 0.0
    %428 = vmatpush1.xpose.msra.mxu0 0.0
    %429 = vmatprep.subr.mxu0 0.0
    %430 = vmatpush1.xpose.msra.mxu0 0.0
    %431 = vmatprep.subr.mxu0 0.0
    %432 = vmatpush1.xpose.msra.mxu0 0.0
    %433 = vmatprep.subr.mxu0 0.0
    %434 = vmatpush1.xpose.msra.mxu0 0.0
    %435 = vmatprep.subr.mxu0 0.0
    %436 = vmatpush1.xpose.msra.mxu0 0.0
    %437 = vmatprep.subr.mxu0 0.0
    %438 = vmatpush1.xpose.msra.mxu0 0.0
    %439 = vmatprep.subr.mxu0 0.0
    %440 = vmatpush1.xpose.msra.mxu0 0.0
    %441 = vmatprep.subr.mxu0 0.0
    %442 = vmatpush1.xpose.msra.mxu0 0.0
    %443 = vmatprep.subr.mxu0 0.0
    %444 = vmatpush1.xpose.msra.mxu0 0.0
    %445 = vmatprep.subr.mxu0 0.0
    %446 = vmatpush1.xpose.msra.mxu0 0.0
    %447 = vmatprep.subr.mxu0 0.0
    %448 = vmatpush1.xpose.msra.mxu0 0.0
    %449 = vmatprep.subr.mxu0 0.0
    %450 = vmatpush1.xpose.msra.mxu0 0.0
    %451 = vmatprep.subr.mxu0 0.0
    %452 = vmatpush1.xpose.msra.mxu0 0.0
    %453 = vmatprep.subr.mxu0 0.0
    %454 = vmatpush1.xpose.msra.mxu0 0.0
    %455 = vmatprep.subr.mxu0 0.0
    %456 = vmatpush1.xpose.msra.mxu0 0.0
    %457 = vmatprep.subr.mxu0 0.0
    %458 = vmatpush1.xpose.msra.mxu0 0.0
    %459 = vmatprep.subr.mxu0 0.0
    %460 = vmatpush1.xpose.msra.mxu0 0.0
    %461 = vmatprep.subr.mxu0 0.0
    %462 = vmatpush1.xpose.msra.mxu0 0.0
    %463 = vmatprep.subr.mxu0 0.0
    %464 = vmatpush1.xpose.msra.mxu0 0.0
    %465 = vmatprep.subr.mxu0 0.0
    %466 = vmatpush1.xpose.msra.mxu0 0.0
    %467 = vmatprep.subr.mxu0 0.0
    %468 = vmatpush1.xpose.msra.mxu0 0.0
    %469 = vmatprep.subr.mxu0 0.0
    %470 = vmatpush1.xpose.msra.mxu0 0.0
    %471 = vmatprep.mubr.f32.mxu0 0.0
    %472 = vmatmul.mubr.f32.gmra.mrb[0].mxu0 %v399
    %v473 = vpop.f32.mrb[0].mxu0
    %v474 = vadd.f32 0.0, %v473
    %v475 = vpop.f32.mrb[0].mxu0
    %476 = vmatprep.mubr.f32.mxu0 0.0
    %477 = vmatmul.mubr.f32.gmra.mrb[0].mxu0 %v401
    %v478 = vpop.f32.mrb[0].mxu0
    %v479 = vadd.f32 0.0, %v478
    %v480 = vpop.f32.mrb[0].mxu0
    %481 = vdwg.mxu0
    %482 = vrot.lane.b32.xlu0 %v206, 104
    %v483 = vpop.permute.xlu0 %482
    %484 = vrot.lane.b32.xlu0 %v207, 104
    %v485 = vpop.permute.xlu0 %484
    %486 = vrot.lane.b32.xlu0 %v198, 72
    %v487 = vpop.permute.xlu0 %486
    %488 = vrot.lane.b32.xlu0 %v203, 72
    %v489 = vpop.permute.xlu0 %488
    %v490 = vsel %vm214, %v483, 0
    %v492 = vsel %vm214, %v485, 0
    %v494 = vsel %vm214, %v487, 0
    %v496 = vsel %vm214, %v489, 0
    %498 = vmatprep.subr.mxu0 0.0
    %499 = vmatpush1.xpose.msra.mxu0 %v494
    %500 = vmatprep.subr.mxu0 0.0
    %501 = vmatpush1.xpose.msra.mxu0 %v496
    %502 = vmatprep.subr.mxu0 0.0
    %503 = vmatpush1.xpose.msra.mxu0 0.0
    %504 = vmatprep.subr.mxu0 0.0
    %505 = vmatpush1.xpose.msra.mxu0 0.0
    %506 = vmatprep.subr.mxu0 0.0
    %507 = vmatpush1.xpose.msra.mxu0 0.0
    %508 = vmatprep.subr.mxu0 0.0
    %509 = vmatpush1.xpose.msra.mxu0 0.0
    %510 = vmatprep.subr.mxu0 0.0
    %511 = vmatpush1.xpose.msra.mxu0 0.0
    %512 = vmatprep.subr.mxu0 0.0
    %513 = vmatpush1.xpose.msra.mxu0 0.0
    %514 = vmatprep.subr.mxu0 0.0
    %515 = vmatpush1.xpose.msra.mxu0 0.0
    %516 = vmatprep.subr.mxu0 0.0
    %517 = vmatpush1.xpose.msra.mxu0 0.0
    %518 = vmatprep.subr.mxu0 0.0
    %519 = vmatpush1.xpose.msra.mxu0 0.0
    %520 = vmatprep.subr.mxu0 0.0
    %521 = vmatpush1.xpose.msra.mxu0 0.0
    %522 = vmatprep.subr.mxu0 0.0
    %523 = vmatpush1.xpose.msra.mxu0 0.0
    %524 = vmatprep.subr.mxu0 0.0
    %525 = vmatpush1.xpose.msra.mxu0 0.0
    %526 = vmatprep.subr.mxu0 0.0
    %527 = vmatpush1.xpose.msra.mxu0 0.0
    %528 = vmatprep.subr.mxu0 0.0
    %529 = vmatpush1.xpose.msra.mxu0 0.0
    %530 = vmatprep.subr.mxu0 0.0
    %531 = vmatpush1.xpose.msra.mxu0 0.0
    %532 = vmatprep.subr.mxu0 0.0
    %533 = vmatpush1.xpose.msra.mxu0 0.0
    %534 = vmatprep.subr.mxu0 0.0
    %535 = vmatpush1.xpose.msra.mxu0 0.0
    %536 = vmatprep.subr.mxu0 0.0
    %537 = vmatpush1.xpose.msra.mxu0 0.0
    %538 = vmatprep.subr.mxu0 0.0
    %539 = vmatpush1.xpose.msra.mxu0 0.0
    %540 = vmatprep.subr.mxu0 0.0
    %541 = vmatpush1.xpose.msra.mxu0 0.0
    %542 = vmatprep.subr.mxu0 0.0
    %543 = vmatpush1.xpose.msra.mxu0 0.0
    %544 = vmatprep.subr.mxu0 0.0
    %545 = vmatpush1.xpose.msra.mxu0 0.0
    %546 = vmatprep.subr.mxu0 0.0
    %547 = vmatpush1.xpose.msra.mxu0 0.0
    %548 = vmatprep.subr.mxu0 0.0
    %549 = vmatpush1.xpose.msra.mxu0 0.0
    %550 = vmatprep.subr.mxu0 0.0
    %551 = vmatpush1.xpose.msra.mxu0 0.0
    %552 = vmatprep.subr.mxu0 0.0
    %553 = vmatpush1.xpose.msra.mxu0 0.0
    %554 = vmatprep.subr.mxu0 0.0
    %555 = vmatpush1.xpose.msra.mxu0 0.0
    %556 = vmatprep.subr.mxu0 0.0
    %557 = vmatpush1.xpose.msra.mxu0 0.0
    %558 = vmatprep.subr.mxu0 0.0
    %559 = vmatpush1.xpose.msra.mxu0 0.0
    %560 = vmatprep.subr.mxu0 0.0
    %561 = vmatpush1.xpose.msra.mxu0 0.0
    %562 = vmatprep.mubr.f32.mxu0 0.0
    %563 = vmatmul.mubr.f32.gmra.mrb[0].mxu0 %v490
    %v564 = vpop.f32.mrb[0].mxu0
    %v565 = vadd.f32 0.0, %v564
    %v566 = vpop.f32.mrb[0].mxu0
    %567 = vmatprep.mubr.f32.mxu0 0.0
    %568 = vmatmul.mubr.f32.gmra.mrb[0].mxu0 %v492
    %v569 = vpop.f32.mrb[0].mxu0
    %v570 = vadd.f32 0.0, %v569
    %v571 = vpop.f32.mrb[0].mxu0
    %572 = vdwg.mxu0
    %v573 = vadd.f32 %v292, %v54
    %v574 = vadd.f32 %v297, %v55
    %v575 = vadd.f32 %v383, %v54
    %v576 = vadd.f32 %v388, %v55
    %v577 = vadd.f32 %v474, %v54
    %v578 = vadd.f32 %v479, %v55
    %v579 = vadd.f32 %v565, %v54
    %v580 = vadd.f32 %v570, %v55
    %vm581 = vcmask 130048
    %v582 = vsel %vm581, %v573, -inf
    %583 = vmax.xlane.f32.xlu0 %v582
    %v584 = vpop.xlane.xlu0 %583
    %v585 = vsel %vm581, %v574, -inf
    %586 = vmax.xlane.f32.xlu0 %v585
    %v587 = vpop.xlane.xlu0 %586
    %v588 = vsel %vm581, %v575, -inf
    %589 = vmax.xlane.f32.xlu0 %v588
    %v590 = vpop.xlane.xlu0 %589
    %v591 = vsel %vm581, %v576, -inf
    %592 = vmax.xlane.f32.xlu0 %v591
    %v593 = vpop.xlane.xlu0 %592
    %v594 = vsel %vm581, %v577, -inf
    %595 = vmax.xlane.f32.xlu0 %v594
    %v596 = vpop.xlane.xlu0 %595
    %v597 = vsel %vm581, %v578, -inf
    %598 = vmax.xlane.f32.xlu0 %v597
    %v599 = vpop.xlane.xlu0 %598
    %v600 = vsel %vm581, %v579, -inf
    %601 = vmax.xlane.f32.xlu0 %v600
    %v602 = vpop.xlane.xlu0 %601
    %v603 = vsel %vm581, %v580, -inf
    %604 = vmax.xlane.f32.xlu0 %v603
    %v605 = vpop.xlane.xlu0 %604
    %v606 = vsub.f32 %v573, %v584
    %v607 = vsub.f32 %v574, %v587
    %v608 = vsub.f32 %v575, %v590
    %v609 = vsub.f32 %v576, %v593
    %v610 = vsub.f32 %v577, %v596
    %v611 = vsub.f32 %v578, %v599
    %v612 = vsub.f32 %v579, %v602
    %v613 = vsub.f32 %v580, %v605
    %v614 = vmul.f32 %v606, 1.442695
    %v615 = vpow.pop %v614
    %v616 = vmul.f32 %v607, 1.442695
    %v617 = vpow.pop %v616
    %v618 = vmul.f32 %v608, 1.442695
    %v619 = vpow.pop %v618
    %v620 = vmul.f32 %v609, 1.442695
    %v621 = vpow.pop %v620
    %v622 = vmul.f32 %v610, 1.442695
    %v623 = vpow.pop %v622
    %v624 = vmul.f32 %v611, 1.442695
    %v625 = vpow.pop %v624
    %v626 = vmul.f32 %v612, 1.442695
    %v627 = vpow.pop %v626
    %v628 = vmul.f32 %v613, 1.442695
    %v629 = vpow.pop %v628
    %v630 = vsel %vm581, %v615, 0.0
    %631 = vadd.xlane.f32.xlu0 %v630
    %v632 = vpop.xlane.xlu0 %631
    %v633 = vsel %vm581, %v617, 0.0
    %634 = vadd.xlane.f32.xlu0 %v633
    %v635 = vpop.xlane.xlu0 %634
    %v636 = vsel %vm581, %v619, 0.0
    %637 = vadd.xlane.f32.xlu0 %v636
    %v638 = vpop.xlane.xlu0 %637
    %v639 = vsel %vm581, %v621, 0.0
    %640 = vadd.xlane.f32.xlu0 %v639
    %v641 = vpop.xlane.xlu0 %640
    %v642 = vsel %vm581, %v623, 0.0
    %643 = vadd.xlane.f32.xlu0 %v642
    %v644 = vpop.xlane.xlu0 %643
    %v645 = vsel %vm581, %v625, 0.0
    %646 = vadd.xlane.f32.xlu0 %v645
    %v647 = vpop.xlane.xlu0 %646
    %v648 = vsel %vm581, %v627, 0.0
    %649 = vadd.xlane.f32.xlu0 %v648
    %v650 = vpop.xlane.xlu0 %649
    %v651 = vsel %vm581, %v629, 0.0
    %652 = vadd.xlane.f32.xlu0 %v651
    %v653 = vpop.xlane.xlu0 %652
    %v654 = vrcp.pop %v632
    %v655 = vmul.f32 %v615, %v654
    %v656 = vrcp.pop %v635
    %v657 = vmul.f32 %v617, %v656
    %v658 = vrcp.pop %v638
    %v659 = vmul.f32 %v619, %v658
    %v660 = vrcp.pop %v641
    %v661 = vmul.f32 %v621, %v660
    %v662 = vrcp.pop %v644
    %v663 = vmul.f32 %v623, %v662
    %v664 = vrcp.pop %v647
    %v665 = vmul.f32 %v625, %v664
    %v666 = vrcp.pop %v650
    %v667 = vmul.f32 %v627, %v666
    %v668 = vrcp.pop %v653
    %v669 = vmul.f32 %v629, %v668
    %670 = vrot.lane.b32.xlu0 %v198, 64
    %v671 = vpop.permute.xlu0 %670
    %672 = vrot.lane.b32.xlu0 %v203, 64
    %v673 = vpop.permute.xlu0 %672
    %v677 = vsel %vm581, %v655, 0
    %v680 = vsel %vm581, %v657, 0
    %682 = vmatprep.subr.mxu0 0.0
    %683 = vmatpush1.msra.mxu0 %v671
    %684 = vmatprep.subr.mxu0 0.0
    %685 = vmatpush1.msra.mxu0 %v673
    %686 = vmatprep.subr.mxu0 0.0
    %687 = vmatpush1.msra.mxu0 0.0
    %688 = vmatprep.subr.mxu0 0.0
    %689 = vmatpush1.msra.mxu0 0.0
    %690 = vmatprep.subr.mxu0 0.0
    %691 = vmatpush1.msra.mxu0 0.0
    %692 = vmatprep.subr.mxu0 0.0
    %693 = vmatpush1.msra.mxu0 0.0
    %694 = vmatprep.subr.mxu0 0.0
    %695 = vmatpush1.msra.mxu0 0.0
    %696 = vmatprep.subr.mxu0 0.0
    %697 = vmatpush1.msra.mxu0 0.0
    %698 = vmatprep.subr.mxu0 0.0
    %699 = vmatpush1.msra.mxu0 0.0
    %700 = vmatprep.subr.mxu0 0.0
    %701 = vmatpush1.msra.mxu0 0.0
    %702 = vmatprep.subr.mxu0 0.0
    %703 = vmatpush1.msra.mxu0 0.0
    %704 = vmatprep.subr.mxu0 0.0
    %705 = vmatpush1.msra.mxu0 0.0
    %706 = vmatprep.subr.mxu0 0.0
    %707 = vmatpush1.msra.mxu0 0.0
    %708 = vmatprep.subr.mxu0 0.0
    %709 = vmatpush1.msra.mxu0 0.0
    %710 = vmatprep.subr.mxu0 0.0
    %711 = vmatpush1.msra.mxu0 0.0
    %712 = vmatprep.subr.mxu0 0.0
    %713 = vmatpush1.msra.mxu0 0.0
    %714 = vmatprep.subr.mxu0 0.0
    %715 = vmatpush1.msra.mxu0 0.0
    %716 = vmatprep.subr.mxu0 0.0
    %717 = vmatpush1.msra.mxu0 0.0
    %718 = vmatprep.subr.mxu0 0.0
    %719 = vmatpush1.msra.mxu0 0.0
    %720 = vmatprep.subr.mxu0 0.0
    %721 = vmatpush1.msra.mxu0 0.0
    %722 = vmatprep.subr.mxu0 0.0
    %723 = vmatpush1.msra.mxu0 0.0
    %724 = vmatprep.subr.mxu0 0.0
    %725 = vmatpush1.msra.mxu0 0.0
    %726 = vmatprep.subr.mxu0 0.0
    %727 = vmatpush1.msra.mxu0 0.0
    %728 = vmatprep.subr.mxu0 0.0
    %729 = vmatpush1.msra.mxu0 0.0
    %730 = vmatprep.subr.mxu0 0.0
    %731 = vmatpush1.msra.mxu0 0.0
    %732 = vmatprep.subr.mxu0 0.0
    %733 = vmatpush1.msra.mxu0 0.0
    %734 = vmatprep.subr.mxu0 0.0
    %735 = vmatpush1.msra.mxu0 0.0
    %736 = vmatprep.subr.mxu0 0.0
    %737 = vmatpush1.msra.mxu0 0.0
    %738 = vmatprep.subr.mxu0 0.0
    %739 = vmatpush1.msra.mxu0 0.0
    %740 = vmatprep.subr.mxu0 0.0
    %741 = vmatpush1.msra.mxu0 0.0
    %742 = vmatprep.subr.mxu0 0.0
    %743 = vmatpush1.msra.mxu0 0.0
    %744 = vmatprep.subr.mxu0 0.0
    %745 = vmatpush1.msra.mxu0 0.0
    %746 = vmatprep.mubr.f32.mxu0 0.0
    %747 = vmatmul.mubr.f32.gmra.mrb[0].mxu0 %v677
    %v748 = vpop.f32.mrb[0].mxu0
    %v749 = vadd.f32 0.0, %v748
    %v750 = vpop.f32.mrb[0].mxu0
    %751 = vmatprep.mubr.f32.mxu0 0.0
    %752 = vmatmul.mubr.f32.gmra.mrb[0].mxu0 %v680
    %v753 = vpop.f32.mrb[0].mxu0
    %v754 = vadd.f32 0.0, %v753
    %v755 = vpop.f32.mrb[0].mxu0
    %756 = vdwg.mxu0
    %757 = vrot.lane.b32.xlu0 %v198, 56
    %v758 = vpop.permute.xlu0 %757
    %759 = vrot.lane.b32.xlu0 %v203, 56
    %v760 = vpop.permute.xlu0 %759
    %v764 = vsel %vm581, %v659, 0
    %v767 = vsel %vm581, %v661, 0
    %769 = vmatprep.subr.mxu0 0.0
    %770 = vmatpush1.msra.mxu0 %v758
    %771 = vmatprep.subr.mxu0 0.0
    %772 = vmatpush1.msra.mxu0 %v760
    %773 = vmatprep.subr.mxu0 0.0
    %774 = vmatpush1.msra.mxu0 0.0
    %775 = vmatprep.subr.mxu0 0.0
    %776 = vmatpush1.msra.mxu0 0.0
    %777 = vmatprep.subr.mxu0 0.0
    %778 = vmatpush1.msra.mxu0 0.0
    %779 = vmatprep.subr.mxu0 0.0
    %780 = vmatpush1.msra.mxu0 0.0
    %781 = vmatprep.subr.mxu0 0.0
    %782 = vmatpush1.msra.mxu0 0.0
    %783 = vmatprep.subr.mxu0 0.0
    %784 = vmatpush1.msra.mxu0 0.0
    %785 = vmatprep.subr.mxu0 0.0
    %786 = vmatpush1.msra.mxu0 0.0
    %787 = vmatprep.subr.mxu0 0.0
    %788 = vmatpush1.msra.mxu0 0.0
    %789 = vmatprep.subr.mxu0 0.0
    %790 = vmatpush1.msra.mxu0 0.0
    %791 = vmatprep.subr.mxu0 0.0
    %792 = vmatpush1.msra.mxu0 0.0
    %793 = vmatprep.subr.mxu0 0.0
    %794 = vmatpush1.msra.mxu0 0.0
    %795 = vmatprep.subr.mxu0 0.0
    %796 = vmatpush1.msra.mxu0 0.0
    %797 = vmatprep.subr.mxu0 0.0
    %798 = vmatpush1.msra.mxu0 0.0
    %799 = vmatprep.subr.mxu0 0.0
    %800 = vmatpush1.msra.mxu0 0.0
    %801 = vmatprep.subr.mxu0 0.0
    %802 = vmatpush1.msra.mxu0 0.0
    %803 = vmatprep.subr.mxu0 0.0
    %804 = vmatpush1.msra.mxu0 0.0
    %805 = vmatprep.subr.mxu0 0.0
    %806 = vmatpush1.msra.mxu0 0.0
    %807 = vmatprep.subr.mxu0 0.0
    %808 = vmatpush1.msra.mxu0 0.0
    %809 = vmatprep.subr.mxu0 0.0
    %810 = vmatpush1.msra.mxu0 0.0
    %811 = vmatprep.subr.mxu0 0.0
    %812 = vmatpush1.msra.mxu0 0.0
    %813 = vmatprep.subr.mxu0 0.0
    %814 = vmatpush1.msra.mxu0 0.0
    %815 = vmatprep.subr.mxu0 0.0
    %816 = vmatpush1.msra.mxu0 0.0
    %817 = vmatprep.subr.mxu0 0.0
    %818 = vmatpush1.msra.mxu0 0.0
    %819 = vmatprep.subr.mxu0 0.0
    %820 = vmatpush1.msra.mxu0 0.0
    %821 = vmatprep.subr.mxu0 0.0
    %822 = vmatpush1.msra.mxu0 0.0
    %823 = vmatprep.subr.mxu0 0.0
    %824 = vmatpush1.msra.mxu0 0.0
    %825 = vmatprep.subr.mxu0 0.0
    %826 = vmatpush1.msra.mxu0 0.0
    %827 = vmatprep.subr.mxu0 0.0
    %828 = vmatpush1.msra.mxu0 0.0
    %829 = vmatprep.subr.mxu0 0.0
    %830 = vmatpush1.msra.mxu0 0.0
    %831 = vmatprep.subr.mxu0 0.0
    %832 = vmatpush1.msra.mxu0 0.0
    %833 = vmatprep.mubr.f32.mxu0 0.0
    %834 = vmatmul.mubr.f32.gmra.mrb[0].mxu0 %v764
    %v835 = vpop.f32.mrb[0].mxu0
    %v836 = vadd.f32 0.0, %v835
    %v837 = vpop.f32.mrb[0].mxu0
    %838 = vmatprep.mubr.f32.mxu0 0.0
    %839 = vmatmul.mubr.f32.gmra.mrb[0].mxu0 %v767
    %v840 = vpop.f32.mrb[0].mxu0
    %v841 = vadd.f32 0.0, %v840
    %v842 = vpop.f32.mrb[0].mxu0
    %843 = vdwg.mxu0
    %844 = vrot.lane.b32.xlu0 %v198, 48
    %v845 = vpop.permute.xlu0 %844
    %846 = vrot.lane.b32.xlu0 %v203, 48
    %v847 = vpop.permute.xlu0 %846
    %v851 = vsel %vm581, %v663, 0
    %v854 = vsel %vm581, %v665, 0
    %856 = vmatprep.subr.mxu0 0.0
    %857 = vmatpush1.msra.mxu0 %v845
    %858 = vmatprep.subr.mxu0 0.0
    %859 = vmatpush1.msra.mxu0 %v847
    %860 = vmatprep.subr.mxu0 0.0
    %861 = vmatpush1.msra.mxu0 0.0
    %862 = vmatprep.subr.mxu0 0.0
    %863 = vmatpush1.msra.mxu0 0.0
    %864 = vmatprep.subr.mxu0 0.0
    %865 = vmatpush1.msra.mxu0 0.0
    %866 = vmatprep.subr.mxu0 0.0
    %867 = vmatpush1.msra.mxu0 0.0
    %868 = vmatprep.subr.mxu0 0.0
    %869 = vmatpush1.msra.mxu0 0.0
    %870 = vmatprep.subr.mxu0 0.0
    %871 = vmatpush1.msra.mxu0 0.0
    %872 = vmatprep.subr.mxu0 0.0
    %873 = vmatpush1.msra.mxu0 0.0
    %874 = vmatprep.subr.mxu0 0.0
    %875 = vmatpush1.msra.mxu0 0.0
    %876 = vmatprep.subr.mxu0 0.0
    %877 = vmatpush1.msra.mxu0 0.0
    %878 = vmatprep.subr.mxu0 0.0
    %879 = vmatpush1.msra.mxu0 0.0
    %880 = vmatprep.subr.mxu0 0.0
    %881 = vmatpush1.msra.mxu0 0.0
    %882 = vmatprep.subr.mxu0 0.0
    %883 = vmatpush1.msra.mxu0 0.0
    %884 = vmatprep.subr.mxu0 0.0
    %885 = vmatpush1.msra.mxu0 0.0
    %886 = vmatprep.subr.mxu0 0.0
    %887 = vmatpush1.msra.mxu0 0.0
    %888 = vmatprep.subr.mxu0 0.0
    %889 = vmatpush1.msra.mxu0 0.0
    %890 = vmatprep.subr.mxu0 0.0
    %891 = vmatpush1.msra.mxu0 0.0
    %892 = vmatprep.subr.mxu0 0.0
    %893 = vmatpush1.msra.mxu0 0.0
    %894 = vmatprep.subr.mxu0 0.0
    %895 = vmatpush1.msra.mxu0 0.0
    %896 = vmatprep.subr.mxu0 0.0
    %897 = vmatpush1.msra.mxu0 0.0
    %898 = vmatprep.subr.mxu0 0.0
    %899 = vmatpush1.msra.mxu0 0.0
    %900 = vmatprep.subr.mxu0 0.0
    %901 = vmatpush1.msra.mxu0 0.0
    %902 = vmatprep.subr.mxu0 0.0
    %903 = vmatpush1.msra.mxu0 0.0
    %904 = vmatprep.subr.mxu0 0.0
    %905 = vmatpush1.msra.mxu0 0.0
    %906 = vmatprep.subr.mxu0 0.0
    %907 = vmatpush1.msra.mxu0 0.0
    %908 = vmatprep.subr.mxu0 0.0
    %909 = vmatpush1.msra.mxu0 0.0
    %910 = vmatprep.subr.mxu0 0.0
    %911 = vmatpush1.msra.mxu0 0.0
    %912 = vmatprep.subr.mxu0 0.0
    %913 = vmatpush1.msra.mxu0 0.0
    %914 = vmatprep.subr.mxu0 0.0
    %915 = vmatpush1.msra.mxu0 0.0
    %916 = vmatprep.subr.mxu0 0.0
    %917 = vmatpush1.msra.mxu0 0.0
    %918 = vmatprep.subr.mxu0 0.0
    %919 = vmatpush1.msra.mxu0 0.0
    %920 = vmatprep.mubr.f32.mxu0 0.0
    %921 = vmatmul.mubr.f32.gmra.mrb[0].mxu0 %v851
    %v922 = vpop.f32.mrb[0].mxu0
    %v923 = vadd.f32 0.0, %v922
    %v924 = vpop.f32.mrb[0].mxu0
    %925 = vmatprep.mubr.f32.mxu0 0.0
    %926 = vmatmul.mubr.f32.gmra.mrb[0].mxu0 %v854
    %v927 = vpop.f32.mrb[0].mxu0
    %v928 = vadd.f32 0.0, %v927
    %v929 = vpop.f32.mrb[0].mxu0
    %930 = vdwg.mxu0
    %931 = vrot.lane.b32.xlu0 %v198, 40
    %v932 = vpop.permute.xlu0 %931
    %933 = vrot.lane.b32.xlu0 %v203, 40
    %v934 = vpop.permute.xlu0 %933
    %v938 = vsel %vm581, %v667, 0
    %v941 = vsel %vm581, %v669, 0
    %943 = vmatprep.subr.mxu0 0.0
    %944 = vmatpush1.msra.mxu0 %v932
    %945 = vmatprep.subr.mxu0 0.0
    %946 = vmatpush1.msra.mxu0 %v934
    %947 = vmatprep.subr.mxu0 0.0
    %948 = vmatpush1.msra.mxu0 0.0
    %949 = vmatprep.subr.mxu0 0.0
    %950 = vmatpush1.msra.mxu0 0.0
    %951 = vmatprep.subr.mxu0 0.0
    %952 = vmatpush1.msra.mxu0 0.0
    %953 = vmatprep.subr.mxu0 0.0
    %954 = vmatpush1.msra.mxu0 0.0
    %955 = vmatprep.subr.mxu0 0.0
    %956 = vmatpush1.msra.mxu0 0.0
    %957 = vmatprep.subr.mxu0 0.0
    %958 = vmatpush1.msra.mxu0 0.0
    %959 = vmatprep.subr.mxu0 0.0
    %960 = vmatpush1.msra.mxu0 0.0
    %961 = vmatprep.subr.mxu0 0.0
    %962 = vmatpush1.msra.mxu0 0.0
    %963 = vmatprep.subr.mxu0 0.0
    %964 = vmatpush1.msra.mxu0 0.0
    %965 = vmatprep.subr.mxu0 0.0
    %966 = vmatpush1.msra.mxu0 0.0
    %967 = vmatprep.subr.mxu0 0.0
    %968 = vmatpush1.msra.mxu0 0.0
    %969 = vmatprep.subr.mxu0 0.0
    %970 = vmatpush1.msra.mxu0 0.0
    %971 = vmatprep.subr.mxu0 0.0
    %972 = vmatpush1.msra.mxu0 0.0
    %973 = vmatprep.subr.mxu0 0.0
    %974 = vmatpush1.msra.mxu0 0.0
    %975 = vmatprep.subr.mxu0 0.0
    %976 = vmatpush1.msra.mxu0 0.0
    %977 = vmatprep.subr.mxu0 0.0
    %978 = vmatpush1.msra.mxu0 0.0
    %979 = vmatprep.subr.mxu0 0.0
    %980 = vmatpush1.msra.mxu0 0.0
    %981 = vmatprep.subr.mxu0 0.0
    %982 = vmatpush1.msra.mxu0 0.0
    %983 = vmatprep.subr.mxu0 0.0
    %984 = vmatpush1.msra.mxu0 0.0
    %985 = vmatprep.subr.mxu0 0.0
    %986 = vmatpush1.msra.mxu0 0.0
    %987 = vmatprep.subr.mxu0 0.0
    %988 = vmatpush1.msra.mxu0 0.0
    %989 = vmatprep.subr.mxu0 0.0
    %990 = vmatpush1.msra.mxu0 0.0
    %991 = vmatprep.subr.mxu0 0.0
    %992 = vmatpush1.msra.mxu0 0.0
    %993 = vmatprep.subr.mxu0 0.0
    %994 = vmatpush1.msra.mxu0 0.0
    %995 = vmatprep.subr.mxu0 0.0
    %996 = vmatpush1.msra.mxu0 0.0
    %997 = vmatprep.subr.mxu0 0.0
    %998 = vmatpush1.msra.mxu0 0.0
    %999 = vmatprep.subr.mxu0 0.0
    %1000 = vmatpush1.msra.mxu0 0.0
    %1001 = vmatprep.subr.mxu0 0.0
    %1002 = vmatpush1.msra.mxu0 0.0
    %1003 = vmatprep.subr.mxu0 0.0
    %1004 = vmatpush1.msra.mxu0 0.0
    %1005 = vmatprep.subr.mxu0 0.0
    %1006 = vmatpush1.msra.mxu0 0.0
    %1007 = vmatprep.mubr.f32.mxu0 0.0
    %1008 = vmatmul.mubr.f32.gmra.mrb[0].mxu0 %v938
    %v1009 = vpop.f32.mrb[0].mxu0
    %v1010 = vadd.f32 0.0, %v1009
    %v1011 = vpop.f32.mrb[0].mxu0
    %1012 = vmatprep.mubr.f32.mxu0 0.0
    %1013 = vmatmul.mubr.f32.gmra.mrb[0].mxu0 %v941
    %v1014 = vpop.f32.mrb[0].mxu0
    %v1015 = vadd.f32 0.0, %v1014
    %v1016 = vpop.f32.mrb[0].mxu0
    %1017 = vdwg.mxu0
    %1020 = vrot.lane.b32.xlu0 %v836, 8
    %v1021 = vpop.permute.xlu0 %1020
    %1022 = vrot.lane.b32.xlu0 %v841, 8
    %v1023 = vpop.permute.xlu0 %1022
    %1028 = vrot.lane.b32.xlu0 %v923, 16
    %v1029 = vpop.permute.xlu0 %1028
    %1030 = vrot.lane.b32.xlu0 %v928, 16
    %v1031 = vpop.permute.xlu0 %1030
    %1036 = vrot.lane.b32.xlu0 %v1010, 24
    %v1037 = vpop.permute.xlu0 %1036
    %1038 = vrot.lane.b32.xlu0 %v1015, 24
    %v1039 = vpop.permute.xlu0 %1038
    %v1042 = vsel %vm214, %v749, %v1021
    %v1043 = vsel %vm214, %v754, %v1023
    %v1044 = vsel %vm581, %v1042, %v1029
    %v1045 = vsel %vm581, %v1043, %v1031
    %vm1046 = vcmask 195584
    %v1047 = vsel %vm1046, %v1044, %v1037
    %v1048 = vsel %vm1046, %v1045, %v1039
    %1053 = vrot.lane.b32.xlu0 %v58, 32
    %v1054 = vpop.permute.xlu0 %1053
    %1055 = vrot.lane.b32.xlu0 %v60, 32
    %v1056 = vpop.permute.xlu0 %1055
    %1057 = vrot.lane.b32.xlu0 %v62, 32
    %v1058 = vpop.permute.xlu0 %1057
    %1059 = vrot.lane.b32.xlu0 %v64, 32
    %v1060 = vpop.permute.xlu0 %1059
    %v1066 = vsel %vm81, %v1047, 0
    %v1069 = vsel %vm81, %v1048, 0
    %1071 = vmatprep.subr.mxu0 0.0
    %1072 = vmatpush1.msra.mxu0 %v1054
    %1073 = vmatprep.subr.mxu0 0.0
    %1074 = vmatpush1.msra.mxu0 %v1056
    %1075 = vmatprep.subr.mxu0 0.0
    %1076 = vmatpush1.msra.mxu0 %v1058
    %1077 = vmatprep.subr.mxu0 0.0
    %1078 = vmatpush1.msra.mxu0 %v1060
    %1079 = vmatprep.subr.mxu0 0.0
    %1080 = vmatpush1.msra.mxu0 0.0
    %1081 = vmatprep.subr.mxu0 0.0
    %1082 = vmatpush1.msra.mxu0 0.0
    %1083 = vmatprep.subr.mxu0 0.0
    %1084 = vmatpush1.msra.mxu0 0.0
    %1085 = vmatprep.subr.mxu0 0.0
    %1086 = vmatpush1.msra.mxu0 0.0
    %1087 = vmatprep.subr.mxu0 0.0
    %1088 = vmatpush1.msra.mxu0 0.0
    %1089 = vmatprep.subr.mxu0 0.0
    %1090 = vmatpush1.msra.mxu0 0.0
    %1091 = vmatprep.subr.mxu0 0.0
    %1092 = vmatpush1.msra.mxu0 0.0
    %1093 = vmatprep.subr.mxu0 0.0
    %1094 = vmatpush1.msra.mxu0 0.0
    %1095 = vmatprep.subr.mxu0 0.0
    %1096 = vmatpush1.msra.mxu0 0.0
    %1097 = vmatprep.subr.mxu0 0.0
    %1098 = vmatpush1.msra.mxu0 0.0
    %1099 = vmatprep.subr.mxu0 0.0
    %1100 = vmatpush1.msra.mxu0 0.0
    %1101 = vmatprep.subr.mxu0 0.0
    %1102 = vmatpush1.msra.mxu0 0.0
    %1103 = vmatprep.subr.mxu0 0.0
    %1104 = vmatpush1.msra.mxu0 0.0
    %1105 = vmatprep.subr.mxu0 0.0
    %1106 = vmatpush1.msra.mxu0 0.0
    %1107 = vmatprep.subr.mxu0 0.0
    %1108 = vmatpush1.msra.mxu0 0.0
    %1109 = vmatprep.subr.mxu0 0.0
    %1110 = vmatpush1.msra.mxu0 0.0
    %1111 = vmatprep.subr.mxu0 0.0
    %1112 = vmatpush1.msra.mxu0 0.0
    %1113 = vmatprep.subr.mxu0 0.0
    %1114 = vmatpush1.msra.mxu0 0.0
    %1115 = vmatprep.subr.mxu0 0.0
    %1116 = vmatpush1.msra.mxu0 0.0
    %1117 = vmatprep.subr.mxu0 0.0
    %1118 = vmatpush1.msra.mxu0 0.0
    %1119 = vmatprep.subr.mxu0 0.0
    %1120 = vmatpush1.msra.mxu0 0.0
    %1121 = vmatprep.subr.mxu0 0.0
    %1122 = vmatpush1.msra.mxu0 0.0
    %1123 = vmatprep.subr.mxu0 0.0
    %1124 = vmatpush1.msra.mxu0 0.0
    %1125 = vmatprep.subr.mxu0 0.0
    %1126 = vmatpush1.msra.mxu0 0.0
    %1127 = vmatprep.subr.mxu0 0.0
    %1128 = vmatpush1.msra.mxu0 0.0
    %1129 = vmatprep.subr.mxu0 0.0
    %1130 = vmatpush1.msra.mxu0 0.0
    %1131 = vmatprep.subr.mxu0 0.0
    %1132 = vmatpush1.msra.mxu0 0.0
    %1133 = vmatprep.subr.mxu0 0.0
    %1134 = vmatpush1.msra.mxu0 0.0
    %1135 = vmatprep.mubr.f32.mxu0 0.0
    %1136 = vmatmul.mubr.f32.gmra.mrb[0].mxu0 %v1066
    %v1137 = vpop.f32.mrb[0].mxu0
    %v1138 = vadd.f32 0.0, %v1137
    %v1139 = vpop.f32.mrb[0].mxu0
    %1140 = vmatprep.mubr.f32.mxu0 0.0
    %1141 = vmatmul.mubr.f32.gmra.mrb[0].mxu0 %v1069
    %v1142 = vpop.f32.mrb[0].mxu0
    %v1143 = vadd.f32 0.0, %v1142
    %v1144 = vpop.f32.mrb[0].mxu0
    %1145 = vdwg.mxu0
    %v1146 = vadd.f32 %v38, %v1138
    %v1147 = vadd.f32 %v39, %v1143
    %v1148 = vlaneseq
    %v1149 = vshrl.u32 %v1148, 7
    %v1150 = vsub.s32 4, %v1149
    %v1151 = vrot.slane %v56, %v1150
    %v1152 = vadd.f32 %v1146, %v1151
    %v1153 = vadd.f32 %v1147, %v1151
    %v1154 = vsel %vm81, %v1152, 0.0
    %1155 = vadd.xlane.f32.xlu0 %v1154
    %v1156 = vpop.xlane.xlu0 %1155
    %v1157 = vsel %vm81, %v1153, 0.0
    %1158 = vadd.xlane.f32.xlu0 %v1157
    %v1159 = vpop.xlane.xlu0 %1158
    %v1160 = vmul.f32 %v1156, %v88
    %v1161 = vmul.f32 %v1159, %v88
    %v1162 = vsub.f32 %v1152, %v1160
    %v1163 = vsub.f32 %v1153, %v1161
    %v1164 = vmul.f32 %v1162, %v1162
    %v1165 = vmul.f32 %v1163, %v1163
    %v1166 = vsel %vm81, %v1164, 0.0
    %1167 = vadd.xlane.f32.xlu0 %v1166
    %v1168 = vpop.xlane.xlu0 %1167
    %v1169 = vsel %vm81, %v1165, 0.0
    %1170 = vadd.xlane.f32.xlu0 %v1169
    %v1171 = vpop.xlane.xlu0 %1170
    %v1172 = vmul.f32 %v1168, %v88
    %v1173 = vmul.f32 %v1171, %v88
    %v1174 = vadd.f32 %v1172, 1e-05
    %v1175 = vadd.f32 %v1173, 1e-05
    %v1176 = vrsqrt.pop %v1174
    %v1177 = vrsqrt.pop %v1175
    %v1178 = vmul.f32 %v1162, %v1176
    %v1179 = vmul.f32 %v1163, %v1177
    %v1180 = vlaneseq
    %v1181 = vshrl.u32 %v1180, 7
    %v1182 = vsub.s32 2, %v1181
    %v1183 = vrot.slane %v56, %v1182
    %v1184 = vmul.f32 %v1178, %v1183
    %v1185 = vmul.f32 %v1179, %v1183
    %v1186 = vlaneseq
    %v1187 = vshrl.u32 %v1186, 7
    %v1188 = vsub.s32 3, %v1187
    %v1189 = vrot.slane %v56, %v1188
    %v1190 = vadd.f32 %v1184, %v1189
    %v1191 = vadd.f32 %v1185, %v1189
    %v1192 = vlaneseq
    %v1193 = vshrl.u32 %v1192, 7
    %v1194 = vsub.s32 7, %v1193
    %v1195 = vrot.slane %v56, %v1194
    %v1197 = vsel %vm81, %v1190, 0
    %v1200 = vsel %vm81, %v1191, 0
    %1202 = vmatprep.subr.mxu0 0.0
    %1203 = vmatpush1.msra.mxu0 %v57
    %1204 = vmatprep.subr.mxu0 0.0
    %1205 = vmatpush1.msra.mxu0 %v59
    %1206 = vmatprep.subr.mxu0 0.0
    %1207 = vmatpush1.msra.mxu0 %v61
    %1208 = vmatprep.subr.mxu0 0.0
    %1209 = vmatpush1.msra.mxu0 %v63
    %1210 = vmatprep.subr.mxu0 0.0
    %1211 = vmatpush1.msra.mxu0 0.0
    %1212 = vmatprep.subr.mxu0 0.0
    %1213 = vmatpush1.msra.mxu0 0.0
    %1214 = vmatprep.subr.mxu0 0.0
    %1215 = vmatpush1.msra.mxu0 0.0
    %1216 = vmatprep.subr.mxu0 0.0
    %1217 = vmatpush1.msra.mxu0 0.0
    %1218 = vmatprep.subr.mxu0 0.0
    %1219 = vmatpush1.msra.mxu0 0.0
    %1220 = vmatprep.subr.mxu0 0.0
    %1221 = vmatpush1.msra.mxu0 0.0
    %1222 = vmatprep.subr.mxu0 0.0
    %1223 = vmatpush1.msra.mxu0 0.0
    %1224 = vmatprep.subr.mxu0 0.0
    %1225 = vmatpush1.msra.mxu0 0.0
    %1226 = vmatprep.subr.mxu0 0.0
    %1227 = vmatpush1.msra.mxu0 0.0
    %1228 = vmatprep.subr.mxu0 0.0
    %1229 = vmatpush1.msra.mxu0 0.0
    %1230 = vmatprep.subr.mxu0 0.0
    %1231 = vmatpush1.msra.mxu0 0.0
    %1232 = vmatprep.subr.mxu0 0.0
    %1233 = vmatpush1.msra.mxu0 0.0
    %1234 = vmatprep.subr.mxu0 0.0
    %1235 = vmatpush1.msra.mxu0 0.0
    %1236 = vmatprep.subr.mxu0 0.0
    %1237 = vmatpush1.msra.mxu0 0.0
    %1238 = vmatprep.subr.mxu0 0.0
    %1239 = vmatpush1.msra.mxu0 0.0
    %1240 = vmatprep.subr.mxu0 0.0
    %1241 = vmatpush1.msra.mxu0 0.0
    %1242 = vmatprep.subr.mxu0 0.0
    %1243 = vmatpush1.msra.mxu0 0.0
    %1244 = vmatprep.subr.mxu0 0.0
    %1245 = vmatpush1.msra.mxu0 0.0
    %1246 = vmatprep.subr.mxu0 0.0
    %1247 = vmatpush1.msra.mxu0 0.0
    %1248 = vmatprep.subr.mxu0 0.0
    %1249 = vmatpush1.msra.mxu0 0.0
    %1250 = vmatprep.subr.mxu0 0.0
    %1251 = vmatpush1.msra.mxu0 0.0
    %1252 = vmatprep.subr.mxu0 0.0
    %1253 = vmatpush1.msra.mxu0 0.0
    %1254 = vmatprep.subr.mxu0 0.0
    %1255 = vmatpush1.msra.mxu0 0.0
    %1256 = vmatprep.subr.mxu0 0.0
    %1257 = vmatpush1.msra.mxu0 0.0
    %1258 = vmatprep.subr.mxu0 0.0
    %1259 = vmatpush1.msra.mxu0 0.0
    %1260 = vmatprep.subr.mxu0 0.0
    %1261 = vmatpush1.msra.mxu0 0.0
    %1262 = vmatprep.subr.mxu0 0.0
    %1263 = vmatpush1.msra.mxu0 0.0
    %1264 = vmatprep.subr.mxu0 0.0
    %1265 = vmatpush1.msra.mxu0 0.0
    %1266 = vmatprep.mubr.f32.mxu0 0.0
    %1267 = vmatmul.mubr.f32.gmra.mrb[0].mxu0 %v1197
    %v1268 = vpop.f32.mrb[0].mxu0
    %v1269 = vadd.f32 %v1195, %v1268
    %v1270 = vpop.f32.mrb[0].mxu0
    %1271 = vmatprep.mubr.f32.mxu0 0.0
    %1272 = vmatmul.mubr.f32.gmra.mrb[0].mxu0 %v1200
    %v1273 = vpop.f32.mrb[0].mxu0
    %v1274 = vadd.f32 %v1195, %v1273
    %v1275 = vpop.f32.mrb[0].mxu0
    %1276 = vdwg.mxu0
    %v1277 = vmul.f32 %v1269, 0.5
    %v1278 = vmul.f32 %v1274, 0.5
    %v1279 = vmul.f32 %v1269, %v1269
    %v1280 = vmul.f32 %v1274, %v1274
    %v1281 = vmul.f32 %v1269, %v1279
    %v1282 = vmul.f32 %v1274, %v1280
    %v1283 = vmul.f32 %v1281, 0.044715
    %v1284 = vmul.f32 %v1282, 0.044715
    %v1285 = vadd.f32 %v1269, %v1283
    %v1286 = vadd.f32 %v1274, %v1284
    %v1287 = vmul.f32 %v1285, 0.7978846
    %v1288 = vmul.f32 %v1286, 0.7978846
    %v1289 = vtanh.pop %v1287
    %v1290 = vtanh.pop %v1288
    %v1291 = vadd.f32 %v1289, 1.0
    %v1292 = vadd.f32 %v1290, 1.0
    %v1293 = vmul.f32 %v1277, %v1291
    %v1294 = vmul.f32 %v1278, %v1292
    %1295 = vmatprep.subr.mxu0 0.0
    %1296 = vmatpush1.msra.mxu0 %v65
    %1297 = vmatprep.subr.mxu0 0.0
    %1298 = vmatpush1.msra.mxu0 %v66
    %1299 = vmatprep.subr.mxu0 0.0
    %1300 = vmatpush1.msra.mxu0 %v67
    %1301 = vmatprep.subr.mxu0 0.0
    %1302 = vmatpush1.msra.mxu0 %v68
    %1303 = vmatprep.subr.mxu0 0.0
    %1304 = vmatpush1.msra.mxu0 %v69
    %1305 = vmatprep.subr.mxu0 0.0
    %1306 = vmatpush1.msra.mxu0 %v70
    %1307 = vmatprep.subr.mxu0 0.0
    %1308 = vmatpush1.msra.mxu0 %v71
    %1309 = vmatprep.subr.mxu0 0.0
    %1310 = vmatpush1.msra.mxu0 %v72
    %1311 = vmatprep.subr.mxu0 0.0
    %1312 = vmatpush1.msra.mxu0 %v73
    %1313 = vmatprep.subr.mxu0 0.0
    %1314 = vmatpush1.msra.mxu0 %v74
    %1315 = vmatprep.subr.mxu0 0.0
    %1316 = vmatpush1.msra.mxu0 %v75
    %1317 = vmatprep.subr.mxu0 0.0
    %1318 = vmatpush1.msra.mxu0 %v76
    %1319 = vmatprep.subr.mxu0 0.0
    %1320 = vmatpush1.msra.mxu0 %v77
    %1321 = vmatprep.subr.mxu0 0.0
    %1322 = vmatpush1.msra.mxu0 %v78
    %1323 = vmatprep.subr.mxu0 0.0
    %1324 = vmatpush1.msra.mxu0 %v79
    %1325 = vmatprep.subr.mxu0 0.0
    %1326 = vmatpush1.msra.mxu0 %v80
    %1327 = vmatprep.subr.mxu0 0.0
    %1328 = vmatpush1.msra.mxu0 0.0
    %1329 = vmatprep.subr.mxu0 0.0
    %1330 = vmatpush1.msra.mxu0 0.0
    %1331 = vmatprep.subr.mxu0 0.0
    %1332 = vmatpush1.msra.mxu0 0.0
    %1333 = vmatprep.subr.mxu0 0.0
    %1334 = vmatpush1.msra.mxu0 0.0
    %1335 = vmatprep.subr.mxu0 0.0
    %1336 = vmatpush1.msra.mxu0 0.0
    %1337 = vmatprep.subr.mxu0 0.0
    %1338 = vmatpush1.msra.mxu0 0.0
    %1339 = vmatprep.subr.mxu0 0.0
    %1340 = vmatpush1.msra.mxu0 0.0
    %1341 = vmatprep.subr.mxu0 0.0
    %1342 = vmatpush1.msra.mxu0 0.0
    %1343 = vmatprep.subr.mxu0 0.0
    %1344 = vmatpush1.msra.mxu0 0.0
    %1345 = vmatprep.subr.mxu0 0.0
    %1346 = vmatpush1.msra.mxu0 0.0
    %1347 = vmatprep.subr.mxu0 0.0
    %1348 = vmatpush1.msra.mxu0 0.0
    %1349 = vmatprep.subr.mxu0 0.0
    %1350 = vmatpush1.msra.mxu0 0.0
    %1351 = vmatprep.subr.mxu0 0.0
    %1352 = vmatpush1.msra.mxu0 0.0
    %1353 = vmatprep.subr.mxu0 0.0
    %1354 = vmatpush1.msra.mxu0 0.0
    %1355 = vmatprep.subr.mxu0 0.0
    %1356 = vmatpush1.msra.mxu0 0.0
    %1357 = vmatprep.subr.mxu0 0.0
    %1358 = vmatpush1.msra.mxu0 0.0
    %1359 = vmatprep.mubr.f32.mxu0 0.0
    %1360 = vmatmul.mubr.f32.gmra.mrb[0].mxu0 %v1293
    %v1361 = vpop.f32.mrb[0].mxu0
    %v1362 = vadd.f32 0.0, %v1361
    %v1363 = vpop.f32.mrb[0].mxu0
    %1364 = vmatprep.mubr.f32.mxu0 0.0
    %1365 = vmatmul.mubr.f32.gmra.mrb[0].mxu0 %v1294
    %v1366 = vpop.f32.mrb[0].mxu0
    %v1367 = vadd.f32 0.0, %v1366
    %v1368 = vpop.f32.mrb[0].mxu0
    %1369 = vdwg.mxu0
    %v1370 = vadd.f32 %v1152, %v1362
    %v1371 = vadd.f32 %v1153, %v1367
    %v1372 = vlaneseq
    %v1373 = vshrl.u32 %v1372, 7
    %v1374 = vsub.s32 5, %v1373
    %v1375 = vrot.slane %v56, %v1374
    %v1376 = vadd.f32 %v1370, %v1375
    %v1377 = vadd.f32 %v1371, %v1375
    %s1378 = scalar_lea.vmem %s2, 8
    %v1379 = vld [vmem:[%s1378] sm:$0xff]
    %s1380 = scalar_lea.vmem %s3, 64
    %v1381 = vld [vmem:[%s1380] sm:$0xff]
    %v1382 = vld [vmem:[%s1380 + $0x8] sm:$0xff]
    %v1383 = vld [vmem:[%s1380 + $0x10] sm:$0xff]
    %v1384 = vld [vmem:[%s1380 + $0x18] sm:$0xff]
    %v1385 = vld [vmem:[%s1380 + $0x20] sm:$0xff]
    %v1386 = vld [vmem:[%s1380 + $0x28] sm:$0xff]
    %v1387 = vld [vmem:[%s1380 + $0x30] sm:$0xff]
    %v1388 = vld [vmem:[%s1380 + $0x38] sm:$0xff]
    %s1389 = scalar_lea.vmem %s4, 128
    %v1390 = vld [vmem:[%s1389] sm:$0xff]
    %v1391 = vld [vmem:[%s1389 + $0x8] sm:$0xff]
    %v1392 = vld [vmem:[%s1389 + $0x10] sm:$0xff]
    %v1393 = vld [vmem:[%s1389 + $0x18] sm:$0xff]
    %v1394 = vld [vmem:[%s1389 + $0x20] sm:$0xff]
    %v1395 = vld [vmem:[%s1389 + $0x28] sm:$0xff]
    %v1396 = vld [vmem:[%s1389 + $0x30] sm:$0xff]
    %v1397 = vld [vmem:[%s1389 + $0x38] sm:$0xff]
    %v1398 = vld [vmem:[%s1389 + $0x40] sm:$0xff]
    %v1399 = vld [vmem:[%s1389 + $0x48] sm:$0xff]
    %v1400 = vld [vmem:[%s1389 + $0x50] sm:$0xff]
    %v1401 = vld [vmem:[%s1389 + $0x58] sm:$0xff]
    %v1402 = vld [vmem:[%s1389 + $0x60] sm:$0xff]
    %v1403 = vld [vmem:[%s1389 + $0x68] sm:$0xff]
    %v1404 = vld [vmem:[%s1389 + $0x70] sm:$0xff]
    %v1405 = vld [vmem:[%s1389 + $0x78] sm:$0xff]
    %v1406 = vsel %vm81, %v1376, 0.0
    %1407 = vadd.xlane.f32.xlu0 %v1406
    %v1408 = vpop.xlane.xlu0 %1407
    %v1409 = vsel %vm81, %v1377, 0.0
    %1410 = vadd.xlane.f32.xlu0 %v1409
    %v1411 = vpop.xlane.xlu0 %1410
    %v1412 = vmul.f32 %v1408, %v88
    %v1413 = vmul.f32 %v1411, %v88
    %v1414 = vsub.f32 %v1376, %v1412
    %v1415 = vsub.f32 %v1377, %v1413
    %v1416 = vmul.f32 %v1414, %v1414
    %v1417 = vmul.f32 %v1415, %v1415
    %v1418 = vsel %vm81, %v1416, 0.0
    %1419 = vadd.xlane.f32.xlu0 %v1418
    %v1420 = vpop.xlane.xlu0 %1419
    %v1421 = vsel %vm81, %v1417, 0.0
    %1422 = vadd.xlane.f32.xlu0 %v1421
    %v1423 = vpop.xlane.xlu0 %1422
    %v1424 = vmul.f32 %v1420, %v88
    %v1425 = vmul.f32 %v1423, %v88
    %v1426 = vadd.f32 %v1424, 1e-05
    %v1427 = vadd.f32 %v1425, 1e-05
    %v1428 = vrsqrt.pop %v1426
    %v1429 = vrsqrt.pop %v1427
    %v1430 = vmul.f32 %v1414, %v1428
    %v1431 = vmul.f32 %v1415, %v1429
    %v1432 = vlaneseq
    %v1433 = vshrl.u32 %v1432, 7
    %v1434 = vsub.s32 0, %v1433
    %v1435 = vrot.slane %v1379, %v1434
    %v1436 = vmul.f32 %v1430, %v1435
    %v1437 = vmul.f32 %v1431, %v1435
    %v1438 = vlaneseq
    %v1439 = vshrl.u32 %v1438, 7
    %v1440 = vsub.s32 1, %v1439
    %v1441 = vrot.slane %v1379, %v1440
    %v1442 = vadd.f32 %v1436, %v1441
    %v1443 = vadd.f32 %v1437, %v1441
    %v1444 = vlaneseq
    %v1445 = vshrl.u32 %v1444, 7
    %v1446 = vsub.s32 6, %v1445
    %v1447 = vrot.slane %v1379, %v1446
    %v1449 = vsel %vm81, %v1442, 0
    %v1452 = vsel %vm81, %v1443, 0
    %1454 = vmatprep.subr.mxu0 0.0
    %1455 = vmatpush1.msra.mxu0 %v1382
    %1456 = vmatprep.subr.mxu0 0.0
    %1457 = vmatpush1.msra.mxu0 %v1384
    %1458 = vmatprep.subr.mxu0 0.0
    %1459 = vmatpush1.msra.mxu0 %v1386
    %1460 = vmatprep.subr.mxu0 0.0
    %1461 = vmatpush1.msra.mxu0 %v1388
    %1462 = vmatprep.subr.mxu0 0.0
    %1463 = vmatpush1.msra.mxu0 0.0
    %1464 = vmatprep.subr.mxu0 0.0
    %1465 = vmatpush1.msra.mxu0 0.0
    %1466 = vmatprep.subr.mxu0 0.0
    %1467 = vmatpush1.msra.mxu0 0.0
    %1468 = vmatprep.subr.mxu0 0.0
    %1469 = vmatpush1.msra.mxu0 0.0
    %1470 = vmatprep.subr.mxu0 0.0
    %1471 = vmatpush1.msra.mxu0 0.0
    %1472 = vmatprep.subr.mxu0 0.0
    %1473 = vmatpush1.msra.mxu0 0.0
    %1474 = vmatprep.subr.mxu0 0.0
    %1475 = vmatpush1.msra.mxu0 0.0
    %1476 = vmatprep.subr.mxu0 0.0
    %1477 = vmatpush1.msra.mxu0 0.0
    %1478 = vmatprep.subr.mxu0 0.0
    %1479 = vmatpush1.msra.mxu0 0.0
    %1480 = vmatprep.subr.mxu0 0.0
    %1481 = vmatpush1.msra.mxu0 0.0
    %1482 = vmatprep.subr.mxu0 0.0
    %1483 = vmatpush1.msra.mxu0 0.0
    %1484 = vmatprep.subr.mxu0 0.0
    %1485 = vmatpush1.msra.mxu0 0.0
    %1486 = vmatprep.subr.mxu0 0.0
    %1487 = vmatpush1.msra.mxu0 0.0
    %1488 = vmatprep.subr.mxu0 0.0
    %1489 = vmatpush1.msra.mxu0 0.0
    %1490 = vmatprep.subr.mxu0 0.0
    %1491 = vmatpush1.msra.mxu0 0.0
    %1492 = vmatprep.subr.mxu0 0.0
    %1493 = vmatpush1.msra.mxu0 0.0
    %1494 = vmatprep.subr.mxu0 0.0
    %1495 = vmatpush1.msra.mxu0 0.0
    %1496 = vmatprep.subr.mxu0 0.0
    %1497 = vmatpush1.msra.mxu0 0.0
    %1498 = vmatprep.subr.mxu0 0.0
    %1499 = vmatpush1.msra.mxu0 0.0
    %1500 = vmatprep.subr.mxu0 0.0
    %1501 = vmatpush1.msra.mxu0 0.0
    %1502 = vmatprep.subr.mxu0 0.0
    %1503 = vmatpush1.msra.mxu0 0.0
    %1504 = vmatprep.subr.mxu0 0.0
    %1505 = vmatpush1.msra.mxu0 0.0
    %1506 = vmatprep.subr.mxu0 0.0
    %1507 = vmatpush1.msra.mxu0 0.0
    %1508 = vmatprep.subr.mxu0 0.0
    %1509 = vmatpush1.msra.mxu0 0.0
    %1510 = vmatprep.subr.mxu0 0.0
    %1511 = vmatpush1.msra.mxu0 0.0
    %1512 = vmatprep.subr.mxu0 0.0
    %1513 = vmatpush1.msra.mxu0 0.0
    %1514 = vmatprep.subr.mxu0 0.0
    %1515 = vmatpush1.msra.mxu0 0.0
    %1516 = vmatprep.subr.mxu0 0.0
    %1517 = vmatpush1.msra.mxu0 0.0
    %1518 = vmatprep.mubr.f32.mxu0 0.0
    %1519 = vmatmul.mubr.f32.gmra.mrb[0].mxu0 %v1449
    %v1520 = vpop.f32.mrb[0].mxu0
    %v1521 = vadd.f32 %v1447, %v1520
    %v1522 = vpop.f32.mrb[0].mxu0
    %1523 = vmatprep.mubr.f32.mxu0 0.0
    %1524 = vmatmul.mubr.f32.gmra.mrb[0].mxu0 %v1452
    %v1525 = vpop.f32.mrb[0].mxu0
    %v1526 = vadd.f32 %v1447, %v1525
    %v1527 = vpop.f32.mrb[0].mxu0
    %1528 = vdwg.mxu0
    %v1529 = vmul.f32 %v1521, 0.35355338
    %v1530 = vmul.f32 %v1526, 0.35355338
    %1533 = vrot.lane.b32.xlu0 %v1521, 96
    %v1534 = vpop.permute.xlu0 %1533
    %1535 = vrot.lane.b32.xlu0 %v1526, 96
    %v1536 = vpop.permute.xlu0 %1535
    %v1538 = vsel %vm214, %v1529, 0
    %v1541 = vsel %vm214, %v1530, 0
    %v1543 = vsel %vm214, %v1534, 0
    %v1545 = vsel %vm214, %v1536, 0
    %1547 = vmatprep.subr.mxu0 0.0
    %1548 = vmatpush1.xpose.msra.mxu0 %v1543
    %1549 = vmatprep.subr.mxu0 0.0
    %1550 = vmatpush1.xpose.msra.mxu0 %v1545
    %1551 = vmatprep.subr.mxu0 0.0
    %1552 = vmatpush1.xpose.msra.mxu0 0.0
    %1553 = vmatprep.subr.mxu0 0.0
    %1554 = vmatpush1.xpose.msra.mxu0 0.0
    %1555 = vmatprep.subr.mxu0 0.0
    %1556 = vmatpush1.xpose.msra.mxu0 0.0
    %1557 = vmatprep.subr.mxu0 0.0
    %1558 = vmatpush1.xpose.msra.mxu0 0.0
    %1559 = vmatprep.subr.mxu0 0.0
    %1560 = vmatpush1.xpose.msra.mxu0 0.0
    %1561 = vmatprep.subr.mxu0 0.0
    %1562 = vmatpush1.xpose.msra.mxu0 0.0
    %1563 = vmatprep.subr.mxu0 0.0
    %1564 = vmatpush1.xpose.msra.mxu0 0.0
    %1565 = vmatprep.subr.mxu0 0.0
    %1566 = vmatpush1.xpose.msra.mxu0 0.0
    %1567 = vmatprep.subr.mxu0 0.0
    %1568 = vmatpush1.xpose.msra.mxu0 0.0
    %1569 = vmatprep.subr.mxu0 0.0
    %1570 = vmatpush1.xpose.msra.mxu0 0.0
    %1571 = vmatprep.subr.mxu0 0.0
    %1572 = vmatpush1.xpose.msra.mxu0 0.0
    %1573 = vmatprep.subr.mxu0 0.0
    %1574 = vmatpush1.xpose.msra.mxu0 0.0
    %1575 = vmatprep.subr.mxu0 0.0
    %1576 = vmatpush1.xpose.msra.mxu0 0.0
    %1577 = vmatprep.subr.mxu0 0.0
    %1578 = vmatpush1.xpose.msra.mxu0 0.0
    %1579 = vmatprep.subr.mxu0 0.0
    %1580 = vmatpush1.xpose.msra.mxu0 0.0
    %1581 = vmatprep.subr.mxu0 0.0
    %1582 = vmatpush1.xpose.msra.mxu0 0.0
    %1583 = vmatprep.subr.mxu0 0.0
    %1584 = vmatpush1.xpose.msra.mxu0 0.0
    %1585 = vmatprep.subr.mxu0 0.0
    %1586 = vmatpush1.xpose.msra.mxu0 0.0
    %1587 = vmatprep.subr.mxu0 0.0
    %1588 = vmatpush1.xpose.msra.mxu0 0.0
    %1589 = vmatprep.subr.mxu0 0.0
    %1590 = vmatpush1.xpose.msra.mxu0 0.0
    %1591 = vmatprep.subr.mxu0 0.0
    %1592 = vmatpush1.xpose.msra.mxu0 0.0
    %1593 = vmatprep.subr.mxu0 0.0
    %1594 = vmatpush1.xpose.msra.mxu0 0.0
    %1595 = vmatprep.subr.mxu0 0.0
    %1596 = vmatpush1.xpose.msra.mxu0 0.0
    %1597 = vmatprep.subr.mxu0 0.0
    %1598 = vmatpush1.xpose.msra.mxu0 0.0
    %1599 = vmatprep.subr.mxu0 0.0
    %1600 = vmatpush1.xpose.msra.mxu0 0.0
    %1601 = vmatprep.subr.mxu0 0.0
    %1602 = vmatpush1.xpose.msra.mxu0 0.0
    %1603 = vmatprep.subr.mxu0 0.0
    %1604 = vmatpush1.xpose.msra.mxu0 0.0
    %1605 = vmatprep.subr.mxu0 0.0
    %1606 = vmatpush1.xpose.msra.mxu0 0.0
    %1607 = vmatprep.subr.mxu0 0.0
    %1608 = vmatpush1.xpose.msra.mxu0 0.0
    %1609 = vmatprep.subr.mxu0 0.0
    %1610 = vmatpush1.xpose.msra.mxu0 0.0
    %1611 = vmatprep.mubr.f32.mxu0 0.0
    %1612 = vmatmul.mubr.f32.gmra.mrb[0].mxu0 %v1538
    %v1613 = vpop.f32.mrb[0].mxu0
    %v1614 = vadd.f32 0.0, %v1613
    %v1615 = vpop.f32.mrb[0].mxu0
    %1616 = vmatprep.mubr.f32.mxu0 0.0
    %1617 = vmatmul.mubr.f32.gmra.mrb[0].mxu0 %v1541
    %v1618 = vpop.f32.mrb[0].mxu0
    %v1619 = vadd.f32 0.0, %v1618
    %v1620 = vpop.f32.mrb[0].mxu0
    %1621 = vdwg.mxu0
    %1622 = vrot.lane.b32.xlu0 %v1529, 120
    %v1623 = vpop.permute.xlu0 %1622
    %1624 = vrot.lane.b32.xlu0 %v1530, 120
    %v1625 = vpop.permute.xlu0 %1624
    %1626 = vrot.lane.b32.xlu0 %v1521, 88
    %v1627 = vpop.permute.xlu0 %1626
    %1628 = vrot.lane.b32.xlu0 %v1526, 88
    %v1629 = vpop.permute.xlu0 %1628
    %v1630 = vsel %vm214, %v1623, 0
    %v1632 = vsel %vm214, %v1625, 0
    %v1634 = vsel %vm214, %v1627, 0
    %v1636 = vsel %vm214, %v1629, 0
    %1638 = vmatprep.subr.mxu0 0.0
    %1639 = vmatpush1.xpose.msra.mxu0 %v1634
    %1640 = vmatprep.subr.mxu0 0.0
    %1641 = vmatpush1.xpose.msra.mxu0 %v1636
    %1642 = vmatprep.subr.mxu0 0.0
    %1643 = vmatpush1.xpose.msra.mxu0 0.0
    %1644 = vmatprep.subr.mxu0 0.0
    %1645 = vmatpush1.xpose.msra.mxu0 0.0
    %1646 = vmatprep.subr.mxu0 0.0
    %1647 = vmatpush1.xpose.msra.mxu0 0.0
    %1648 = vmatprep.subr.mxu0 0.0
    %1649 = vmatpush1.xpose.msra.mxu0 0.0
    %1650 = vmatprep.subr.mxu0 0.0
    %1651 = vmatpush1.xpose.msra.mxu0 0.0
    %1652 = vmatprep.subr.mxu0 0.0
    %1653 = vmatpush1.xpose.msra.mxu0 0.0
    %1654 = vmatprep.subr.mxu0 0.0
    %1655 = vmatpush1.xpose.msra.mxu0 0.0
    %1656 = vmatprep.subr.mxu0 0.0
    %1657 = vmatpush1.xpose.msra.mxu0 0.0
    %1658 = vmatprep.subr.mxu0 0.0
    %1659 = vmatpush1.xpose.msra.mxu0 0.0
    %1660 = vmatprep.subr.mxu0 0.0
    %1661 = vmatpush1.xpose.msra.mxu0 0.0
    %1662 = vmatprep.subr.mxu0 0.0
    %1663 = vmatpush1.xpose.msra.mxu0 0.0
    %1664 = vmatprep.subr.mxu0 0.0
    %1665 = vmatpush1.xpose.msra.mxu0 0.0
    %1666 = vmatprep.subr.mxu0 0.0
    %1667 = vmatpush1.xpose.msra.mxu0 0.0
    %1668 = vmatprep.subr.mxu0 0.0
    %1669 = vmatpush1.xpose.msra.mxu0 0.0
    %1670 = vmatprep.subr.mxu0 0.0
    %1671 = vmatpush1.xpose.msra.mxu0 0.0
    %1672 = vmatprep.subr.mxu0 0.0
    %1673 = vmatpush1.xpose.msra.mxu0 0.0
    %1674 = vmatprep.subr.mxu0 0.0
    %1675 = vmatpush1.xpose.msra.mxu0 0.0
    %1676 = vmatprep.subr.mxu0 0.0
    %1677 = vmatpush1.xpose.msra.mxu0 0.0
    %1678 = vmatprep.subr.mxu0 0.0
    %1679 = vmatpush1.xpose.msra.mxu0 0.0
    %1680 = vmatprep.subr.mxu0 0.0
    %1681 = vmatpush1.xpose.msra.mxu0 0.0
    %1682 = vmatprep.subr.mxu0 0.0
    %1683 = vmatpush1.xpose.msra.mxu0 0.0
    %1684 = vmatprep.subr.mxu0 0.0
    %1685 = vmatpush1.xpose.msra.mxu0 0.0
    %1686 = vmatprep.subr.mxu0 0.0
    %1687 = vmatpush1.xpose.msra.mxu0 0.0
    %1688 = vmatprep.subr.mxu0 0.0
    %1689 = vmatpush1.xpose.msra.mxu0 0.0
    %1690 = vmatprep.subr.mxu0 0.0
    %1691 = vmatpush1.xpose.msra.mxu0 0.0
    %1692 = vmatprep.subr.mxu0 0.0
    %1693 = vmatpush1.xpose.msra.mxu0 0.0
    %1694 = vmatprep.subr.mxu0 0.0
    %1695 = vmatpush1.xpose.msra.mxu0 0.0
    %1696 = vmatprep.subr.mxu0 0.0
    %1697 = vmatpush1.xpose.msra.mxu0 0.0
    %1698 = vmatprep.subr.mxu0 0.0
    %1699 = vmatpush1.xpose.msra.mxu0 0.0
    %1700 = vmatprep.subr.mxu0 0.0
    %1701 = vmatpush1.xpose.msra.mxu0 0.0
    %1702 = vmatprep.mubr.f32.mxu0 0.0
    %1703 = vmatmul.mubr.f32.gmra.mrb[0].mxu0 %v1630
    %v1704 = vpop.f32.mrb[0].mxu0
    %v1705 = vadd.f32 0.0, %v1704
    %v1706 = vpop.f32.mrb[0].mxu0
    %1707 = vmatprep.mubr.f32.mxu0 0.0
    %1708 = vmatmul.mubr.f32.gmra.mrb[0].mxu0 %v1632
    %v1709 = vpop.f32.mrb[0].mxu0
    %v1710 = vadd.f32 0.0, %v1709
    %v1711 = vpop.f32.mrb[0].mxu0
    %1712 = vdwg.mxu0
    %1713 = vrot.lane.b32.xlu0 %v1529, 112
    %v1714 = vpop.permute.xlu0 %1713
    %1715 = vrot.lane.b32.xlu0 %v1530, 112
    %v1716 = vpop.permute.xlu0 %1715
    %1717 = vrot.lane.b32.xlu0 %v1521, 80
    %v1718 = vpop.permute.xlu0 %1717
    %1719 = vrot.lane.b32.xlu0 %v1526, 80
    %v1720 = vpop.permute.xlu0 %1719
    %v1721 = vsel %vm214, %v1714, 0
    %v1723 = vsel %vm214, %v1716, 0
    %v1725 = vsel %vm214, %v1718, 0
    %v1727 = vsel %vm214, %v1720, 0
    %1729 = vmatprep.subr.mxu0 0.0
    %1730 = vmatpush1.xpose.msra.mxu0 %v1725
    %1731 = vmatprep.subr.mxu0 0.0
    %1732 = vmatpush1.xpose.msra.mxu0 %v1727
    %1733 = vmatprep.subr.mxu0 0.0
    %1734 = vmatpush1.xpose.msra.mxu0 0.0
    %1735 = vmatprep.subr.mxu0 0.0
    %1736 = vmatpush1.xpose.msra.mxu0 0.0
    %1737 = vmatprep.subr.mxu0 0.0
    %1738 = vmatpush1.xpose.msra.mxu0 0.0
    %1739 = vmatprep.subr.mxu0 0.0
    %1740 = vmatpush1.xpose.msra.mxu0 0.0
    %1741 = vmatprep.subr.mxu0 0.0
    %1742 = vmatpush1.xpose.msra.mxu0 0.0
    %1743 = vmatprep.subr.mxu0 0.0
    %1744 = vmatpush1.xpose.msra.mxu0 0.0
    %1745 = vmatprep.subr.mxu0 0.0
    %1746 = vmatpush1.xpose.msra.mxu0 0.0
    %1747 = vmatprep.subr.mxu0 0.0
    %1748 = vmatpush1.xpose.msra.mxu0 0.0
    %1749 = vmatprep.subr.mxu0 0.0
    %1750 = vmatpush1.xpose.msra.mxu0 0.0
    %1751 = vmatprep.subr.mxu0 0.0
    %1752 = vmatpush1.xpose.msra.mxu0 0.0
    %1753 = vmatprep.subr.mxu0 0.0
    %1754 = vmatpush1.xpose.msra.mxu0 0.0
    %1755 = vmatprep.subr.mxu0 0.0
    %1756 = vmatpush1.xpose.msra.mxu0 0.0
    %1757 = vmatprep.subr.mxu0 0.0
    %1758 = vmatpush1.xpose.msra.mxu0 0.0
    %1759 = vmatprep.subr.mxu0 0.0
    %1760 = vmatpush1.xpose.msra.mxu0 0.0
    %1761 = vmatprep.subr.mxu0 0.0
    %1762 = vmatpush1.xpose.msra.mxu0 0.0
    %1763 = vmatprep.subr.mxu0 0.0
    %1764 = vmatpush1.xpose.msra.mxu0 0.0
    %1765 = vmatprep.subr.mxu0 0.0
    %1766 = vmatpush1.xpose.msra.mxu0 0.0
    %1767 = vmatprep.subr.mxu0 0.0
    %1768 = vmatpush1.xpose.msra.mxu0 0.0
    %1769 = vmatprep.subr.mxu0 0.0
    %1770 = vmatpush1.xpose.msra.mxu0 0.0
    %1771 = vmatprep.subr.mxu0 0.0
    %1772 = vmatpush1.xpose.msra.mxu0 0.0
    %1773 = vmatprep.subr.mxu0 0.0
    %1774 = vmatpush1.xpose.msra.mxu0 0.0
    %1775 = vmatprep.subr.mxu0 0.0
    %1776 = vmatpush1.xpose.msra.mxu0 0.0
    %1777 = vmatprep.subr.mxu0 0.0
    %1778 = vmatpush1.xpose.msra.mxu0 0.0
    %1779 = vmatprep.subr.mxu0 0.0
    %1780 = vmatpush1.xpose.msra.mxu0 0.0
    %1781 = vmatprep.subr.mxu0 0.0
    %1782 = vmatpush1.xpose.msra.mxu0 0.0
    %1783 = vmatprep.subr.mxu0 0.0
    %1784 = vmatpush1.xpose.msra.mxu0 0.0
    %1785 = vmatprep.subr.mxu0 0.0
    %1786 = vmatpush1.xpose.msra.mxu0 0.0
    %1787 = vmatprep.subr.mxu0 0.0
    %1788 = vmatpush1.xpose.msra.mxu0 0.0
    %1789 = vmatprep.subr.mxu0 0.0
    %1790 = vmatpush1.xpose.msra.mxu0 0.0
    %1791 = vmatprep.subr.mxu0 0.0
    %1792 = vmatpush1.xpose.msra.mxu0 0.0
    %1793 = vmatprep.mubr.f32.mxu0 0.0
    %1794 = vmatmul.mubr.f32.gmra.mrb[0].mxu0 %v1721
    %v1795 = vpop.f32.mrb[0].mxu0
    %v1796 = vadd.f32 0.0, %v1795
    %v1797 = vpop.f32.mrb[0].mxu0
    %1798 = vmatprep.mubr.f32.mxu0 0.0
    %1799 = vmatmul.mubr.f32.gmra.mrb[0].mxu0 %v1723
    %v1800 = vpop.f32.mrb[0].mxu0
    %v1801 = vadd.f32 0.0, %v1800
    %v1802 = vpop.f32.mrb[0].mxu0
    %1803 = vdwg.mxu0
    %1804 = vrot.lane.b32.xlu0 %v1529, 104
    %v1805 = vpop.permute.xlu0 %1804
    %1806 = vrot.lane.b32.xlu0 %v1530, 104
    %v1807 = vpop.permute.xlu0 %1806
    %1808 = vrot.lane.b32.xlu0 %v1521, 72
    %v1809 = vpop.permute.xlu0 %1808
    %1810 = vrot.lane.b32.xlu0 %v1526, 72
    %v1811 = vpop.permute.xlu0 %1810
    %v1812 = vsel %vm214, %v1805, 0
    %v1814 = vsel %vm214, %v1807, 0
    %v1816 = vsel %vm214, %v1809, 0
    %v1818 = vsel %vm214, %v1811, 0
    %1820 = vmatprep.subr.mxu0 0.0
    %1821 = vmatpush1.xpose.msra.mxu0 %v1816
    %1822 = vmatprep.subr.mxu0 0.0
    %1823 = vmatpush1.xpose.msra.mxu0 %v1818
    %1824 = vmatprep.subr.mxu0 0.0
    %1825 = vmatpush1.xpose.msra.mxu0 0.0
    %1826 = vmatprep.subr.mxu0 0.0
    %1827 = vmatpush1.xpose.msra.mxu0 0.0
    %1828 = vmatprep.subr.mxu0 0.0
    %1829 = vmatpush1.xpose.msra.mxu0 0.0
    %1830 = vmatprep.subr.mxu0 0.0
    %1831 = vmatpush1.xpose.msra.mxu0 0.0
    %1832 = vmatprep.subr.mxu0 0.0
    %1833 = vmatpush1.xpose.msra.mxu0 0.0
    %1834 = vmatprep.subr.mxu0 0.0
    %1835 = vmatpush1.xpose.msra.mxu0 0.0
    %1836 = vmatprep.subr.mxu0 0.0
    %1837 = vmatpush1.xpose.msra.mxu0 0.0
    %1838 = vmatprep.subr.mxu0 0.0
    %1839 = vmatpush1.xpose.msra.mxu0 0.0
    %1840 = vmatprep.subr.mxu0 0.0
    %1841 = vmatpush1.xpose.msra.mxu0 0.0
    %1842 = vmatprep.subr.mxu0 0.0
    %1843 = vmatpush1.xpose.msra.mxu0 0.0
    %1844 = vmatprep.subr.mxu0 0.0
    %1845 = vmatpush1.xpose.msra.mxu0 0.0
    %1846 = vmatprep.subr.mxu0 0.0
    %1847 = vmatpush1.xpose.msra.mxu0 0.0
    %1848 = vmatprep.subr.mxu0 0.0
    %1849 = vmatpush1.xpose.msra.mxu0 0.0
    %1850 = vmatprep.subr.mxu0 0.0
    %1851 = vmatpush1.xpose.msra.mxu0 0.0
    %1852 = vmatprep.subr.mxu0 0.0
    %1853 = vmatpush1.xpose.msra.mxu0 0.0
    %1854 = vmatprep.subr.mxu0 0.0
    %1855 = vmatpush1.xpose.msra.mxu0 0.0
    %1856 = vmatprep.subr.mxu0 0.0
    %1857 = vmatpush1.xpose.msra.mxu0 0.0
    %1858 = vmatprep.subr.mxu0 0.0
    %1859 = vmatpush1.xpose.msra.mxu0 0.0
    %1860 = vmatprep.subr.mxu0 0.0
    %1861 = vmatpush1.xpose.msra.mxu0 0.0
    %1862 = vmatprep.subr.mxu0 0.0
    %1863 = vmatpush1.xpose.msra.mxu0 0.0
    %1864 = vmatprep.subr.mxu0 0.0
    %1865 = vmatpush1.xpose.msra.mxu0 0.0
    %1866 = vmatprep.subr.mxu0 0.0
    %1867 = vmatpush1.xpose.msra.mxu0 0.0
    %1868 = vmatprep.subr.mxu0 0.0
    %1869 = vmatpush1.xpose.msra.mxu0 0.0
    %1870 = vmatprep.subr.mxu0 0.0
    %1871 = vmatpush1.xpose.msra.mxu0 0.0
    %1872 = vmatprep.subr.mxu0 0.0
    %1873 = vmatpush1.xpose.msra.mxu0 0.0
    %1874 = vmatprep.subr.mxu0 0.0
    %1875 = vmatpush1.xpose.msra.mxu0 0.0
    %1876 = vmatprep.subr.mxu0 0.0
    %1877 = vmatpush1.xpose.msra.mxu0 0.0
    %1878 = vmatprep.subr.mxu0 0.0
    %1879 = vmatpush1.xpose.msra.mxu0 0.0
    %1880 = vmatprep.subr.mxu0 0.0
    %1881 = vmatpush1.xpose.msra.mxu0 0.0
    %1882 = vmatprep.subr.mxu0 0.0
    %1883 = vmatpush1.xpose.msra.mxu0 0.0
    %1884 = vmatprep.mubr.f32.mxu0 0.0
    %1885 = vmatmul.mubr.f32.gmra.mrb[0].mxu0 %v1812
    %v1886 = vpop.f32.mrb[0].mxu0
    %v1887 = vadd.f32 0.0, %v1886
    %v1888 = vpop.f32.mrb[0].mxu0
    %1889 = vmatprep.mubr.f32.mxu0 0.0
    %1890 = vmatmul.mubr.f32.gmra.mrb[0].mxu0 %v1814
    %v1891 = vpop.f32.mrb[0].mxu0
    %v1892 = vadd.f32 0.0, %v1891
    %v1893 = vpop.f32.mrb[0].mxu0
    %1894 = vdwg.mxu0
    %v1895 = vadd.f32 %v1614, %v54
    %v1896 = vadd.f32 %v1619, %v55
    %v1897 = vadd.f32 %v1705, %v54
    %v1898 = vadd.f32 %v1710, %v55
    %v1899 = vadd.f32 %v1796, %v54
    %v1900 = vadd.f32 %v1801, %v55
    %v1901 = vadd.f32 %v1887, %v54
    %v1902 = vadd.f32 %v1892, %v55
    %v1903 = vsel %vm581, %v1895, -inf
    %1904 = vmax.xlane.f32.xlu0 %v1903
    %v1905 = vpop.xlane.xlu0 %1904
    %v1906 = vsel %vm581, %v1896, -inf
    %1907 = vmax.xlane.f32.xlu0 %v1906
    %v1908 = vpop.xlane.xlu0 %1907
    %v1909 = vsel %vm581, %v1897, -inf
    %1910 = vmax.xlane.f32.xlu0 %v1909
    %v1911 = vpop.xlane.xlu0 %1910
    %v1912 = vsel %vm581, %v1898, -inf
    %1913 = vmax.xlane.f32.xlu0 %v1912
    %v1914 = vpop.xlane.xlu0 %1913
    %v1915 = vsel %vm581, %v1899, -inf
    %1916 = vmax.xlane.f32.xlu0 %v1915
    %v1917 = vpop.xlane.xlu0 %1916
    %v1918 = vsel %vm581, %v1900, -inf
    %1919 = vmax.xlane.f32.xlu0 %v1918
    %v1920 = vpop.xlane.xlu0 %1919
    %v1921 = vsel %vm581, %v1901, -inf
    %1922 = vmax.xlane.f32.xlu0 %v1921
    %v1923 = vpop.xlane.xlu0 %1922
    %v1924 = vsel %vm581, %v1902, -inf
    %1925 = vmax.xlane.f32.xlu0 %v1924
    %v1926 = vpop.xlane.xlu0 %1925
    %v1927 = vsub.f32 %v1895, %v1905
    %v1928 = vsub.f32 %v1896, %v1908
    %v1929 = vsub.f32 %v1897, %v1911
    %v1930 = vsub.f32 %v1898, %v1914
    %v1931 = vsub.f32 %v1899, %v1917
    %v1932 = vsub.f32 %v1900, %v1920
    %v1933 = vsub.f32 %v1901, %v1923
    %v1934 = vsub.f32 %v1902, %v1926
    %v1935 = vmul.f32 %v1927, 1.442695
    %v1936 = vpow.pop %v1935
    %v1937 = vmul.f32 %v1928, 1.442695
    %v1938 = vpow.pop %v1937
    %v1939 = vmul.f32 %v1929, 1.442695
    %v1940 = vpow.pop %v1939
    %v1941 = vmul.f32 %v1930, 1.442695
    %v1942 = vpow.pop %v1941
    %v1943 = vmul.f32 %v1931, 1.442695
    %v1944 = vpow.pop %v1943
    %v1945 = vmul.f32 %v1932, 1.442695
    %v1946 = vpow.pop %v1945
    %v1947 = vmul.f32 %v1933, 1.442695
    %v1948 = vpow.pop %v1947
    %v1949 = vmul.f32 %v1934, 1.442695
    %v1950 = vpow.pop %v1949
    %v1951 = vsel %vm581, %v1936, 0.0
    %1952 = vadd.xlane.f32.xlu0 %v1951
    %v1953 = vpop.xlane.xlu0 %1952
    %v1954 = vsel %vm581, %v1938, 0.0
    %1955 = vadd.xlane.f32.xlu0 %v1954
    %v1956 = vpop.xlane.xlu0 %1955
    %v1957 = vsel %vm581, %v1940, 0.0
    %1958 = vadd.xlane.f32.xlu0 %v1957
    %v1959 = vpop.xlane.xlu0 %1958
    %v1960 = vsel %vm581, %v1942, 0.0
    %1961 = vadd.xlane.f32.xlu0 %v1960
    %v1962 = vpop.xlane.xlu0 %1961
    %v1963 = vsel %vm581, %v1944, 0.0
    %1964 = vadd.xlane.f32.xlu0 %v1963
    %v1965 = vpop.xlane.xlu0 %1964
    %v1966 = vsel %vm581, %v1946, 0.0
    %1967 = vadd.xlane.f32.xlu0 %v1966
    %v1968 = vpop.xlane.xlu0 %1967
    %v1969 = vsel %vm581, %v1948, 0.0
    %1970 = vadd.xlane.f32.xlu0 %v1969
    %v1971 = vpop.xlane.xlu0 %1970
    %v1972 = vsel %vm581, %v1950, 0.0
    %1973 = vadd.xlane.f32.xlu0 %v1972
    %v1974 = vpop.xlane.xlu0 %1973
    %v1975 = vrcp.pop %v1953
    %v1976 = vmul.f32 %v1936, %v1975
    %v1977 = vrcp.pop %v1956
    %v1978 = vmul.f32 %v1938, %v1977
    %v1979 = vrcp.pop %v1959
    %v1980 = vmul.f32 %v1940, %v1979
    %v1981 = vrcp.pop %v1962
    %v1982 = vmul.f32 %v1942, %v1981
    %v1983 = vrcp.pop %v1965
    %v1984 = vmul.f32 %v1944, %v1983
    %v1985 = vrcp.pop %v1968
    %v1986 = vmul.f32 %v1946, %v1985
    %v1987 = vrcp.pop %v1971
    %v1988 = vmul.f32 %v1948, %v1987
    %v1989 = vrcp.pop %v1974
    %v1990 = vmul.f32 %v1950, %v1989
    %1991 = vrot.lane.b32.xlu0 %v1521, 64
    %v1992 = vpop.permute.xlu0 %1991
    %1993 = vrot.lane.b32.xlu0 %v1526, 64
    %v1994 = vpop.permute.xlu0 %1993
    %v1998 = vsel %vm581, %v1976, 0
    %v2001 = vsel %vm581, %v1978, 0
    %2003 = vmatprep.subr.mxu0 0.0
    %2004 = vmatpush1.msra.mxu0 %v1992
    %2005 = vmatprep.subr.mxu0 0.0
    %2006 = vmatpush1.msra.mxu0 %v1994
    %2007 = vmatprep.subr.mxu0 0.0
    %2008 = vmatpush1.msra.mxu0 0.0
    %2009 = vmatprep.subr.mxu0 0.0
    %2010 = vmatpush1.msra.mxu0 0.0
    %2011 = vmatprep.subr.mxu0 0.0
    %2012 = vmatpush1.msra.mxu0 0.0
    %2013 = vmatprep.subr.mxu0 0.0
    %2014 = vmatpush1.msra.mxu0 0.0
    %2015 = vmatprep.subr.mxu0 0.0
    %2016 = vmatpush1.msra.mxu0 0.0
    %2017 = vmatprep.subr.mxu0 0.0
    %2018 = vmatpush1.msra.mxu0 0.0
    %2019 = vmatprep.subr.mxu0 0.0
    %2020 = vmatpush1.msra.mxu0 0.0
    %2021 = vmatprep.subr.mxu0 0.0
    %2022 = vmatpush1.msra.mxu0 0.0
    %2023 = vmatprep.subr.mxu0 0.0
    %2024 = vmatpush1.msra.mxu0 0.0
    %2025 = vmatprep.subr.mxu0 0.0
    %2026 = vmatpush1.msra.mxu0 0.0
    %2027 = vmatprep.subr.mxu0 0.0
    %2028 = vmatpush1.msra.mxu0 0.0
    %2029 = vmatprep.subr.mxu0 0.0
    %2030 = vmatpush1.msra.mxu0 0.0
    %2031 = vmatprep.subr.mxu0 0.0
    %2032 = vmatpush1.msra.mxu0 0.0
    %2033 = vmatprep.subr.mxu0 0.0
    %2034 = vmatpush1.msra.mxu0 0.0
    %2035 = vmatprep.subr.mxu0 0.0
    %2036 = vmatpush1.msra.mxu0 0.0
    %2037 = vmatprep.subr.mxu0 0.0
    %2038 = vmatpush1.msra.mxu0 0.0
    %2039 = vmatprep.subr.mxu0 0.0
    %2040 = vmatpush1.msra.mxu0 0.0
    %2041 = vmatprep.subr.mxu0 0.0
    %2042 = vmatpush1.msra.mxu0 0.0
    %2043 = vmatprep.subr.mxu0 0.0
    %2044 = vmatpush1.msra.mxu0 0.0
    %2045 = vmatprep.subr.mxu0 0.0
    %2046 = vmatpush1.msra.mxu0 0.0
    %2047 = vmatprep.subr.mxu0 0.0
    %2048 = vmatpush1.msra.mxu0 0.0
    %2049 = vmatprep.subr.mxu0 0.0
    %2050 = vmatpush1.msra.mxu0 0.0
    %2051 = vmatprep.subr.mxu0 0.0
    %2052 = vmatpush1.msra.mxu0 0.0
    %2053 = vmatprep.subr.mxu0 0.0
    %2054 = vmatpush1.msra.mxu0 0.0
    %2055 = vmatprep.subr.mxu0 0.0
    %2056 = vmatpush1.msra.mxu0 0.0
    %2057 = vmatprep.subr.mxu0 0.0
    %2058 = vmatpush1.msra.mxu0 0.0
    %2059 = vmatprep.subr.mxu0 0.0
    %2060 = vmatpush1.msra.mxu0 0.0
    %2061 = vmatprep.subr.mxu0 0.0
    %2062 = vmatpush1.msra.mxu0 0.0
    %2063 = vmatprep.subr.mxu0 0.0
    %2064 = vmatpush1.msra.mxu0 0.0
    %2065 = vmatprep.subr.mxu0 0.0
    %2066 = vmatpush1.msra.mxu0 0.0
    %2067 = vmatprep.mubr.f32.mxu0 0.0
    %2068 = vmatmul.mubr.f32.gmra.mrb[0].mxu0 %v1998
    %v2069 = vpop.f32.mrb[0].mxu0
    %v2070 = vadd.f32 0.0, %v2069
    %v2071 = vpop.f32.mrb[0].mxu0
    %2072 = vmatprep.mubr.f32.mxu0 0.0
    %2073 = vmatmul.mubr.f32.gmra.mrb[0].mxu0 %v2001
    %v2074 = vpop.f32.mrb[0].mxu0
    %v2075 = vadd.f32 0.0, %v2074
    %v2076 = vpop.f32.mrb[0].mxu0
    %2077 = vdwg.mxu0
    %2078 = vrot.lane.b32.xlu0 %v1521, 56
    %v2079 = vpop.permute.xlu0 %2078
    %2080 = vrot.lane.b32.xlu0 %v1526, 56
    %v2081 = vpop.permute.xlu0 %2080
    %v2085 = vsel %vm581, %v1980, 0
    %v2088 = vsel %vm581, %v1982, 0
    %2090 = vmatprep.subr.mxu0 0.0
    %2091 = vmatpush1.msra.mxu0 %v2079
    %2092 = vmatprep.subr.mxu0 0.0
    %2093 = vmatpush1.msra.mxu0 %v2081
    %2094 = vmatprep.subr.mxu0 0.0
    %2095 = vmatpush1.msra.mxu0 0.0
    %2096 = vmatprep.subr.mxu0 0.0
    %2097 = vmatpush1.msra.mxu0 0.0
    %2098 = vmatprep.subr.mxu0 0.0
    %2099 = vmatpush1.msra.mxu0 0.0
    %2100 = vmatprep.subr.mxu0 0.0
    %2101 = vmatpush1.msra.mxu0 0.0
    %2102 = vmatprep.subr.mxu0 0.0
    %2103 = vmatpush1.msra.mxu0 0.0
    %2104 = vmatprep.subr.mxu0 0.0
    %2105 = vmatpush1.msra.mxu0 0.0
    %2106 = vmatprep.subr.mxu0 0.0
    %2107 = vmatpush1.msra.mxu0 0.0
    %2108 = vmatprep.subr.mxu0 0.0
    %2109 = vmatpush1.msra.mxu0 0.0
    %2110 = vmatprep.subr.mxu0 0.0
    %2111 = vmatpush1.msra.mxu0 0.0
    %2112 = vmatprep.subr.mxu0 0.0
    %2113 = vmatpush1.msra.mxu0 0.0
    %2114 = vmatprep.subr.mxu0 0.0
    %2115 = vmatpush1.msra.mxu0 0.0
    %2116 = vmatprep.subr.mxu0 0.0
    %2117 = vmatpush1.msra.mxu0 0.0
    %2118 = vmatprep.subr.mxu0 0.0
    %2119 = vmatpush1.msra.mxu0 0.0
    %2120 = vmatprep.subr.mxu0 0.0
    %2121 = vmatpush1.msra.mxu0 0.0
    %2122 = vmatprep.subr.mxu0 0.0
    %2123 = vmatpush1.msra.mxu0 0.0
    %2124 = vmatprep.subr.mxu0 0.0
    %2125 = vmatpush1.msra.mxu0 0.0
    %2126 = vmatprep.subr.mxu0 0.0
    %2127 = vmatpush1.msra.mxu0 0.0
    %2128 = vmatprep.subr.mxu0 0.0
    %2129 = vmatpush1.msra.mxu0 0.0
    %2130 = vmatprep.subr.mxu0 0.0
    %2131 = vmatpush1.msra.mxu0 0.0
    %2132 = vmatprep.subr.mxu0 0.0
    %2133 = vmatpush1.msra.mxu0 0.0
    %2134 = vmatprep.subr.mxu0 0.0
    %2135 = vmatpush1.msra.mxu0 0.0
    %2136 = vmatprep.subr.mxu0 0.0
    %2137 = vmatpush1.msra.mxu0 0.0
    %2138 = vmatprep.subr.mxu0 0.0
    %2139 = vmatpush1.msra.mxu0 0.0
    %2140 = vmatprep.subr.mxu0 0.0
    %2141 = vmatpush1.msra.mxu0 0.0
    %2142 = vmatprep.subr.mxu0 0.0
    %2143 = vmatpush1.msra.mxu0 0.0
    %2144 = vmatprep.subr.mxu0 0.0
    %2145 = vmatpush1.msra.mxu0 0.0
    %2146 = vmatprep.subr.mxu0 0.0
    %2147 = vmatpush1.msra.mxu0 0.0
    %2148 = vmatprep.subr.mxu0 0.0
    %2149 = vmatpush1.msra.mxu0 0.0
    %2150 = vmatprep.subr.mxu0 0.0
    %2151 = vmatpush1.msra.mxu0 0.0
    %2152 = vmatprep.subr.mxu0 0.0
    %2153 = vmatpush1.msra.mxu0 0.0
    %2154 = vmatprep.mubr.f32.mxu0 0.0
    %2155 = vmatmul.mubr.f32.gmra.mrb[0].mxu0 %v2085
    %v2156 = vpop.f32.mrb[0].mxu0
    %v2157 = vadd.f32 0.0, %v2156
    %v2158 = vpop.f32.mrb[0].mxu0
    %2159 = vmatprep.mubr.f32.mxu0 0.0
    %2160 = vmatmul.mubr.f32.gmra.mrb[0].mxu0 %v2088
    %v2161 = vpop.f32.mrb[0].mxu0
    %v2162 = vadd.f32 0.0, %v2161
    %v2163 = vpop.f32.mrb[0].mxu0
    %2164 = vdwg.mxu0
    %2165 = vrot.lane.b32.xlu0 %v1521, 48
    %v2166 = vpop.permute.xlu0 %2165
    %2167 = vrot.lane.b32.xlu0 %v1526, 48
    %v2168 = vpop.permute.xlu0 %2167
    %v2172 = vsel %vm581, %v1984, 0
    %v2175 = vsel %vm581, %v1986, 0
    %2177 = vmatprep.subr.mxu0 0.0
    %2178 = vmatpush1.msra.mxu0 %v2166
    %2179 = vmatprep.subr.mxu0 0.0
    %2180 = vmatpush1.msra.mxu0 %v2168
    %2181 = vmatprep.subr.mxu0 0.0
    %2182 = vmatpush1.msra.mxu0 0.0
    %2183 = vmatprep.subr.mxu0 0.0
    %2184 = vmatpush1.msra.mxu0 0.0
    %2185 = vmatprep.subr.mxu0 0.0
    %2186 = vmatpush1.msra.mxu0 0.0
    %2187 = vmatprep.subr.mxu0 0.0
    %2188 = vmatpush1.msra.mxu0 0.0
    %2189 = vmatprep.subr.mxu0 0.0
    %2190 = vmatpush1.msra.mxu0 0.0
    %2191 = vmatprep.subr.mxu0 0.0
    %2192 = vmatpush1.msra.mxu0 0.0
    %2193 = vmatprep.subr.mxu0 0.0
    %2194 = vmatpush1.msra.mxu0 0.0
    %2195 = vmatprep.subr.mxu0 0.0
    %2196 = vmatpush1.msra.mxu0 0.0
    %2197 = vmatprep.subr.mxu0 0.0
    %2198 = vmatpush1.msra.mxu0 0.0
    %2199 = vmatprep.subr.mxu0 0.0
    %2200 = vmatpush1.msra.mxu0 0.0
    %2201 = vmatprep.subr.mxu0 0.0
    %2202 = vmatpush1.msra.mxu0 0.0
    %2203 = vmatprep.subr.mxu0 0.0
    %2204 = vmatpush1.msra.mxu0 0.0
    %2205 = vmatprep.subr.mxu0 0.0
    %2206 = vmatpush1.msra.mxu0 0.0
    %2207 = vmatprep.subr.mxu0 0.0
    %2208 = vmatpush1.msra.mxu0 0.0
    %2209 = vmatprep.subr.mxu0 0.0
    %2210 = vmatpush1.msra.mxu0 0.0
    %2211 = vmatprep.subr.mxu0 0.0
    %2212 = vmatpush1.msra.mxu0 0.0
    %2213 = vmatprep.subr.mxu0 0.0
    %2214 = vmatpush1.msra.mxu0 0.0
    %2215 = vmatprep.subr.mxu0 0.0
    %2216 = vmatpush1.msra.mxu0 0.0
    %2217 = vmatprep.subr.mxu0 0.0
    %2218 = vmatpush1.msra.mxu0 0.0
    %2219 = vmatprep.subr.mxu0 0.0
    %2220 = vmatpush1.msra.mxu0 0.0
    %2221 = vmatprep.subr.mxu0 0.0
    %2222 = vmatpush1.msra.mxu0 0.0
    %2223 = vmatprep.subr.mxu0 0.0
    %2224 = vmatpush1.msra.mxu0 0.0
    %2225 = vmatprep.subr.mxu0 0.0
    %2226 = vmatpush1.msra.mxu0 0.0
    %2227 = vmatprep.subr.mxu0 0.0
    %2228 = vmatpush1.msra.mxu0 0.0
    %2229 = vmatprep.subr.mxu0 0.0
    %2230 = vmatpush1.msra.mxu0 0.0
    %2231 = vmatprep.subr.mxu0 0.0
    %2232 = vmatpush1.msra.mxu0 0.0
    %2233 = vmatprep.subr.mxu0 0.0
    %2234 = vmatpush1.msra.mxu0 0.0
    %2235 = vmatprep.subr.mxu0 0.0
    %2236 = vmatpush1.msra.mxu0 0.0
    %2237 = vmatprep.subr.mxu0 0.0
    %2238 = vmatpush1.msra.mxu0 0.0
    %2239 = vmatprep.subr.mxu0 0.0
    %2240 = vmatpush1.msra.mxu0 0.0
    %2241 = vmatprep.mubr.f32.mxu0 0.0
    %2242 = vmatmul.mubr.f32.gmra.mrb[0].mxu0 %v2172
    %v2243 = vpop.f32.mrb[0].mxu0
    %v2244 = vadd.f32 0.0, %v2243
    %v2245 = vpop.f32.mrb[0].mxu0
    %2246 = vmatprep.mubr.f32.mxu0 0.0
    %2247 = vmatmul.mubr.f32.gmra.mrb[0].mxu0 %v2175
    %v2248 = vpop.f32.mrb[0].mxu0
    %v2249 = vadd.f32 0.0, %v2248
    %v2250 = vpop.f32.mrb[0].mxu0
    %2251 = vdwg.mxu0
    %2252 = vrot.lane.b32.xlu0 %v1521, 40
    %v2253 = vpop.permute.xlu0 %2252
    %2254 = vrot.lane.b32.xlu0 %v1526, 40
    %v2255 = vpop.permute.xlu0 %2254
    %v2259 = vsel %vm581, %v1988, 0
    %v2262 = vsel %vm581, %v1990, 0
    %2264 = vmatprep.subr.mxu0 0.0
    %2265 = vmatpush1.msra.mxu0 %v2253
    %2266 = vmatprep.subr.mxu0 0.0
    %2267 = vmatpush1.msra.mxu0 %v2255
    %2268 = vmatprep.subr.mxu0 0.0
    %2269 = vmatpush1.msra.mxu0 0.0
    %2270 = vmatprep.subr.mxu0 0.0
    %2271 = vmatpush1.msra.mxu0 0.0
    %2272 = vmatprep.subr.mxu0 0.0
    %2273 = vmatpush1.msra.mxu0 0.0
    %2274 = vmatprep.subr.mxu0 0.0
    %2275 = vmatpush1.msra.mxu0 0.0
    %2276 = vmatprep.subr.mxu0 0.0
    %2277 = vmatpush1.msra.mxu0 0.0
    %2278 = vmatprep.subr.mxu0 0.0
    %2279 = vmatpush1.msra.mxu0 0.0
    %2280 = vmatprep.subr.mxu0 0.0
    %2281 = vmatpush1.msra.mxu0 0.0
    %2282 = vmatprep.subr.mxu0 0.0
    %2283 = vmatpush1.msra.mxu0 0.0
    %2284 = vmatprep.subr.mxu0 0.0
    %2285 = vmatpush1.msra.mxu0 0.0
    %2286 = vmatprep.subr.mxu0 0.0
    %2287 = vmatpush1.msra.mxu0 0.0
    %2288 = vmatprep.subr.mxu0 0.0
    %2289 = vmatpush1.msra.mxu0 0.0
    %2290 = vmatprep.subr.mxu0 0.0
    %2291 = vmatpush1.msra.mxu0 0.0
    %2292 = vmatprep.subr.mxu0 0.0
    %2293 = vmatpush1.msra.mxu0 0.0
    %2294 = vmatprep.subr.mxu0 0.0
    %2295 = vmatpush1.msra.mxu0 0.0
    %2296 = vmatprep.subr.mxu0 0.0
    %2297 = vmatpush1.msra.mxu0 0.0
    %2298 = vmatprep.subr.mxu0 0.0
    %2299 = vmatpush1.msra.mxu0 0.0
    %2300 = vmatprep.subr.mxu0 0.0
    %2301 = vmatpush1.msra.mxu0 0.0
    %2302 = vmatprep.subr.mxu0 0.0
    %2303 = vmatpush1.msra.mxu0 0.0
    %2304 = vmatprep.subr.mxu0 0.0
    %2305 = vmatpush1.msra.mxu0 0.0
    %2306 = vmatprep.subr.mxu0 0.0
    %2307 = vmatpush1.msra.mxu0 0.0
    %2308 = vmatprep.subr.mxu0 0.0
    %2309 = vmatpush1.msra.mxu0 0.0
    %2310 = vmatprep.subr.mxu0 0.0
    %2311 = vmatpush1.msra.mxu0 0.0
    %2312 = vmatprep.subr.mxu0 0.0
    %2313 = vmatpush1.msra.mxu0 0.0
    %2314 = vmatprep.subr.mxu0 0.0
    %2315 = vmatpush1.msra.mxu0 0.0
    %2316 = vmatprep.subr.mxu0 0.0
    %2317 = vmatpush1.msra.mxu0 0.0
    %2318 = vmatprep.subr.mxu0 0.0
    %2319 = vmatpush1.msra.mxu0 0.0
    %2320 = vmatprep.subr.mxu0 0.0
    %2321 = vmatpush1.msra.mxu0 0.0
    %2322 = vmatprep.subr.mxu0 0.0
    %2323 = vmatpush1.msra.mxu0 0.0
    %2324 = vmatprep.subr.mxu0 0.0
    %2325 = vmatpush1.msra.mxu0 0.0
    %2326 = vmatprep.subr.mxu0 0.0
    %2327 = vmatpush1.msra.mxu0 0.0
    %2328 = vmatprep.mubr.f32.mxu0 0.0
    %2329 = vmatmul.mubr.f32.gmra.mrb[0].mxu0 %v2259
    %v2330 = vpop.f32.mrb[0].mxu0
    %v2331 = vadd.f32 0.0, %v2330
    %v2332 = vpop.f32.mrb[0].mxu0
    %2333 = vmatprep.mubr.f32.mxu0 0.0
    %2334 = vmatmul.mubr.f32.gmra.mrb[0].mxu0 %v2262
    %v2335 = vpop.f32.mrb[0].mxu0
    %v2336 = vadd.f32 0.0, %v2335
    %v2337 = vpop.f32.mrb[0].mxu0
    %2338 = vdwg.mxu0
    %2341 = vrot.lane.b32.xlu0 %v2157, 8
    %v2342 = vpop.permute.xlu0 %2341
    %2343 = vrot.lane.b32.xlu0 %v2162, 8
    %v2344 = vpop.permute.xlu0 %2343
    %2349 = vrot.lane.b32.xlu0 %v2244, 16
    %v2350 = vpop.permute.xlu0 %2349
    %2351 = vrot.lane.b32.xlu0 %v2249, 16
    %v2352 = vpop.permute.xlu0 %2351
    %2357 = vrot.lane.b32.xlu0 %v2331, 24
    %v2358 = vpop.permute.xlu0 %2357
    %2359 = vrot.lane.b32.xlu0 %v2336, 24
    %v2360 = vpop.permute.xlu0 %2359
    %v2363 = vsel %vm214, %v2070, %v2342
    %v2364 = vsel %vm214, %v2075, %v2344
    %v2365 = vsel %vm581, %v2363, %v2350
    %v2366 = vsel %vm581, %v2364, %v2352
    %v2367 = vsel %vm1046, %v2365, %v2358
    %v2368 = vsel %vm1046, %v2366, %v2360
    %2373 = vrot.lane.b32.xlu0 %v1382, 32
    %v2374 = vpop.permute.xlu0 %2373
    %2375 = vrot.lane.b32.xlu0 %v1384, 32
    %v2376 = vpop.permute.xlu0 %2375
    %2377 = vrot.lane.b32.xlu0 %v1386, 32
    %v2378 = vpop.permute.xlu0 %2377
    %2379 = vrot.lane.b32.xlu0 %v1388, 32
    %v2380 = vpop.permute.xlu0 %2379
    %v2386 = vsel %vm81, %v2367, 0
    %v2389 = vsel %vm81, %v2368, 0
    %2391 = vmatprep.subr.mxu0 0.0
    %2392 = vmatpush1.msra.mxu0 %v2374
    %2393 = vmatprep.subr.mxu0 0.0
    %2394 = vmatpush1.msra.mxu0 %v2376
    %2395 = vmatprep.subr.mxu0 0.0
    %2396 = vmatpush1.msra.mxu0 %v2378
    %2397 = vmatprep.subr.mxu0 0.0
    %2398 = vmatpush1.msra.mxu0 %v2380
    %2399 = vmatprep.subr.mxu0 0.0
    %2400 = vmatpush1.msra.mxu0 0.0
    %2401 = vmatprep.subr.mxu0 0.0
    %2402 = vmatpush1.msra.mxu0 0.0
    %2403 = vmatprep.subr.mxu0 0.0
    %2404 = vmatpush1.msra.mxu0 0.0
    %2405 = vmatprep.subr.mxu0 0.0
    %2406 = vmatpush1.msra.mxu0 0.0
    %2407 = vmatprep.subr.mxu0 0.0
    %2408 = vmatpush1.msra.mxu0 0.0
    %2409 = vmatprep.subr.mxu0 0.0
    %2410 = vmatpush1.msra.mxu0 0.0
    %2411 = vmatprep.subr.mxu0 0.0
    %2412 = vmatpush1.msra.mxu0 0.0
    %2413 = vmatprep.subr.mxu0 0.0
    %2414 = vmatpush1.msra.mxu0 0.0
    %2415 = vmatprep.subr.mxu0 0.0
    %2416 = vmatpush1.msra.mxu0 0.0
    %2417 = vmatprep.subr.mxu0 0.0
    %2418 = vmatpush1.msra.mxu0 0.0
    %2419 = vmatprep.subr.mxu0 0.0
    %2420 = vmatpush1.msra.mxu0 0.0
    %2421 = vmatprep.subr.mxu0 0.0
    %2422 = vmatpush1.msra.mxu0 0.0
    %2423 = vmatprep.subr.mxu0 0.0
    %2424 = vmatpush1.msra.mxu0 0.0
    %2425 = vmatprep.subr.mxu0 0.0
    %2426 = vmatpush1.msra.mxu0 0.0
    %2427 = vmatprep.subr.mxu0 0.0
    %2428 = vmatpush1.msra.mxu0 0.0
    %2429 = vmatprep.subr.mxu0 0.0
    %2430 = vmatpush1.msra.mxu0 0.0
    %2431 = vmatprep.subr.mxu0 0.0
    %2432 = vmatpush1.msra.mxu0 0.0
    %2433 = vmatprep.subr.mxu0 0.0
    %2434 = vmatpush1.msra.mxu0 0.0
    %2435 = vmatprep.subr.mxu0 0.0
    %2436 = vmatpush1.msra.mxu0 0.0
    %2437 = vmatprep.subr.mxu0 0.0
    %2438 = vmatpush1.msra.mxu0 0.0
    %2439 = vmatprep.subr.mxu0 0.0
    %2440 = vmatpush1.msra.mxu0 0.0
    %2441 = vmatprep.subr.mxu0 0.0
    %2442 = vmatpush1.msra.mxu0 0.0
    %2443 = vmatprep.subr.mxu0 0.0
    %2444 = vmatpush1.msra.mxu0 0.0
    %2445 = vmatprep.subr.mxu0 0.0
    %2446 = vmatpush1.msra.mxu0 0.0
    %2447 = vmatprep.subr.mxu0 0.0
    %2448 = vmatpush1.msra.mxu0 0.0
    %2449 = vmatprep.subr.mxu0 0.0
    %2450 = vmatpush1.msra.mxu0 0.0
    %2451 = vmatprep.subr.mxu0 0.0
    %2452 = vmatpush1.msra.mxu0 0.0
    %2453 = vmatprep.subr.mxu0 0.0
    %2454 = vmatpush1.msra.mxu0 0.0
    %2455 = vmatprep.mubr.f32.mxu0 0.0
    %2456 = vmatmul.mubr.f32.gmra.mrb[0].mxu0 %v2386
    %v2457 = vpop.f32.mrb[0].mxu0
    %v2458 = vadd.f32 0.0, %v2457
    %v2459 = vpop.f32.mrb[0].mxu0
    %2460 = vmatprep.mubr.f32.mxu0 0.0
    %2461 = vmatmul.mubr.f32.gmra.mrb[0].mxu0 %v2389
    %v2462 = vpop.f32.mrb[0].mxu0
    %v2463 = vadd.f32 0.0, %v2462
    %v2464 = vpop.f32.mrb[0].mxu0
    %2465 = vdwg.mxu0
    %v2466 = vadd.f32 %v1376, %v2458
    %v2467 = vadd.f32 %v1377, %v2463
    %v2468 = vlaneseq
    %v2469 = vshrl.u32 %v2468, 7
    %v2470 = vsub.s32 4, %v2469
    %v2471 = vrot.slane %v1379, %v2470
    %v2472 = vadd.f32 %v2466, %v2471
    %v2473 = vadd.f32 %v2467, %v2471
    %v2474 = vsel %vm81, %v2472, 0.0
    %2475 = vadd.xlane.f32.xlu0 %v2474
    %v2476 = vpop.xlane.xlu0 %2475
    %v2477 = vsel %vm81, %v2473, 0.0
    %2478 = vadd.xlane.f32.xlu0 %v2477
    %v2479 = vpop.xlane.xlu0 %2478
    %v2480 = vmul.f32 %v2476, %v88
    %v2481 = vmul.f32 %v2479, %v88
    %v2482 = vsub.f32 %v2472, %v2480
    %v2483 = vsub.f32 %v2473, %v2481
    %v2484 = vmul.f32 %v2482, %v2482
    %v2485 = vmul.f32 %v2483, %v2483
    %v2486 = vsel %vm81, %v2484, 0.0
    %2487 = vadd.xlane.f32.xlu0 %v2486
    %v2488 = vpop.xlane.xlu0 %2487
    %v2489 = vsel %vm81, %v2485, 0.0
    %2490 = vadd.xlane.f32.xlu0 %v2489
    %v2491 = vpop.xlane.xlu0 %2490
    %v2492 = vmul.f32 %v2488, %v88
    %v2493 = vmul.f32 %v2491, %v88
    %v2494 = vadd.f32 %v2492, 1e-05
    %v2495 = vadd.f32 %v2493, 1e-05
    %v2496 = vrsqrt.pop %v2494
    %v2497 = vrsqrt.pop %v2495
    %v2498 = vmul.f32 %v2482, %v2496
    %v2499 = vmul.f32 %v2483, %v2497
    %v2500 = vlaneseq
    %v2501 = vshrl.u32 %v2500, 7
    %v2502 = vsub.s32 2, %v2501
    %v2503 = vrot.slane %v1379, %v2502
    %v2504 = vmul.f32 %v2498, %v2503
    %v2505 = vmul.f32 %v2499, %v2503
    %v2506 = vlaneseq
    %v2507 = vshrl.u32 %v2506, 7
    %v2508 = vsub.s32 3, %v2507
    %v2509 = vrot.slane %v1379, %v2508
    %v2510 = vadd.f32 %v2504, %v2509
    %v2511 = vadd.f32 %v2505, %v2509
    %v2512 = vlaneseq
    %v2513 = vshrl.u32 %v2512, 7
    %v2514 = vsub.s32 7, %v2513
    %v2515 = vrot.slane %v1379, %v2514
    %v2517 = vsel %vm81, %v2510, 0
    %v2520 = vsel %vm81, %v2511, 0
    %2522 = vmatprep.subr.mxu0 0.0
    %2523 = vmatpush1.msra.mxu0 %v1381
    %2524 = vmatprep.subr.mxu0 0.0
    %2525 = vmatpush1.msra.mxu0 %v1383
    %2526 = vmatprep.subr.mxu0 0.0
    %2527 = vmatpush1.msra.mxu0 %v1385
    %2528 = vmatprep.subr.mxu0 0.0
    %2529 = vmatpush1.msra.mxu0 %v1387
    %2530 = vmatprep.subr.mxu0 0.0
    %2531 = vmatpush1.msra.mxu0 0.0
    %2532 = vmatprep.subr.mxu0 0.0
    %2533 = vmatpush1.msra.mxu0 0.0
    %2534 = vmatprep.subr.mxu0 0.0
    %2535 = vmatpush1.msra.mxu0 0.0
    %2536 = vmatprep.subr.mxu0 0.0
    %2537 = vmatpush1.msra.mxu0 0.0
    %2538 = vmatprep.subr.mxu0 0.0
    %2539 = vmatpush1.msra.mxu0 0.0
    %2540 = vmatprep.subr.mxu0 0.0
    %2541 = vmatpush1.msra.mxu0 0.0
    %2542 = vmatprep.subr.mxu0 0.0
    %2543 = vmatpush1.msra.mxu0 0.0
    %2544 = vmatprep.subr.mxu0 0.0
    %2545 = vmatpush1.msra.mxu0 0.0
    %2546 = vmatprep.subr.mxu0 0.0
    %2547 = vmatpush1.msra.mxu0 0.0
    %2548 = vmatprep.subr.mxu0 0.0
    %2549 = vmatpush1.msra.mxu0 0.0
    %2550 = vmatprep.subr.mxu0 0.0
    %2551 = vmatpush1.msra.mxu0 0.0
    %2552 = vmatprep.subr.mxu0 0.0
    %2553 = vmatpush1.msra.mxu0 0.0
    %2554 = vmatprep.subr.mxu0 0.0
    %2555 = vmatpush1.msra.mxu0 0.0
    %2556 = vmatprep.subr.mxu0 0.0
    %2557 = vmatpush1.msra.mxu0 0.0
    %2558 = vmatprep.subr.mxu0 0.0
    %2559 = vmatpush1.msra.mxu0 0.0
    %2560 = vmatprep.subr.mxu0 0.0
    %2561 = vmatpush1.msra.mxu0 0.0
    %2562 = vmatprep.subr.mxu0 0.0
    %2563 = vmatpush1.msra.mxu0 0.0
    %2564 = vmatprep.subr.mxu0 0.0
    %2565 = vmatpush1.msra.mxu0 0.0
    %2566 = vmatprep.subr.mxu0 0.0
    %2567 = vmatpush1.msra.mxu0 0.0
    %2568 = vmatprep.subr.mxu0 0.0
    %2569 = vmatpush1.msra.mxu0 0.0
    %2570 = vmatprep.subr.mxu0 0.0
    %2571 = vmatpush1.msra.mxu0 0.0
    %2572 = vmatprep.subr.mxu0 0.0
    %2573 = vmatpush1.msra.mxu0 0.0
    %2574 = vmatprep.subr.mxu0 0.0
    %2575 = vmatpush1.msra.mxu0 0.0
    %2576 = vmatprep.subr.mxu0 0.0
    %2577 = vmatpush1.msra.mxu0 0.0
    %2578 = vmatprep.subr.mxu0 0.0
    %2579 = vmatpush1.msra.mxu0 0.0
    %2580 = vmatprep.subr.mxu0 0.0
    %2581 = vmatpush1.msra.mxu0 0.0
    %2582 = vmatprep.subr.mxu0 0.0
    %2583 = vmatpush1.msra.mxu0 0.0
    %2584 = vmatprep.subr.mxu0 0.0
    %2585 = vmatpush1.msra.mxu0 0.0
    %2586 = vmatprep.mubr.f32.mxu0 0.0
    %2587 = vmatmul.mubr.f32.gmra.mrb[0].mxu0 %v2517
    %v2588 = vpop.f32.mrb[0].mxu0
    %v2589 = vadd.f32 %v2515, %v2588
    %v2590 = vpop.f32.mrb[0].mxu0
    %2591 = vmatprep.mubr.f32.mxu0 0.0
    %2592 = vmatmul.mubr.f32.gmra.mrb[0].mxu0 %v2520
    %v2593 = vpop.f32.mrb[0].mxu0
    %v2594 = vadd.f32 %v2515, %v2593
    %v2595 = vpop.f32.mrb[0].mxu0
    %2596 = vdwg.mxu0
    %v2597 = vmul.f32 %v2589, 0.5
    %v2598 = vmul.f32 %v2594, 0.5
    %v2599 = vmul.f32 %v2589, %v2589
    %v2600 = vmul.f32 %v2594, %v2594
    %v2601 = vmul.f32 %v2589, %v2599
    %v2602 = vmul.f32 %v2594, %v2600
    %v2603 = vmul.f32 %v2601, 0.044715
    %v2604 = vmul.f32 %v2602, 0.044715
    %v2605 = vadd.f32 %v2589, %v2603
    %v2606 = vadd.f32 %v2594, %v2604
    %v2607 = vmul.f32 %v2605, 0.7978846
    %v2608 = vmul.f32 %v2606, 0.7978846
    %v2609 = vtanh.pop %v2607
    %v2610 = vtanh.pop %v2608
    %v2611 = vadd.f32 %v2609, 1.0
    %v2612 = vadd.f32 %v2610, 1.0
    %v2613 = vmul.f32 %v2597, %v2611
    %v2614 = vmul.f32 %v2598, %v2612
    %2615 = vmatprep.subr.mxu0 0.0
    %2616 = vmatpush1.msra.mxu0 %v1390
    %2617 = vmatprep.subr.mxu0 0.0
    %2618 = vmatpush1.msra.mxu0 %v1391
    %2619 = vmatprep.subr.mxu0 0.0
    %2620 = vmatpush1.msra.mxu0 %v1392
    %2621 = vmatprep.subr.mxu0 0.0
    %2622 = vmatpush1.msra.mxu0 %v1393
    %2623 = vmatprep.subr.mxu0 0.0
    %2624 = vmatpush1.msra.mxu0 %v1394
    %2625 = vmatprep.subr.mxu0 0.0
    %2626 = vmatpush1.msra.mxu0 %v1395
    %2627 = vmatprep.subr.mxu0 0.0
    %2628 = vmatpush1.msra.mxu0 %v1396
    %2629 = vmatprep.subr.mxu0 0.0
    %2630 = vmatpush1.msra.mxu0 %v1397
    %2631 = vmatprep.subr.mxu0 0.0
    %2632 = vmatpush1.msra.mxu0 %v1398
    %2633 = vmatprep.subr.mxu0 0.0
    %2634 = vmatpush1.msra.mxu0 %v1399
    %2635 = vmatprep.subr.mxu0 0.0
    %2636 = vmatpush1.msra.mxu0 %v1400
    %2637 = vmatprep.subr.mxu0 0.0
    %2638 = vmatpush1.msra.mxu0 %v1401
    %2639 = vmatprep.subr.mxu0 0.0
    %2640 = vmatpush1.msra.mxu0 %v1402
    %2641 = vmatprep.subr.mxu0 0.0
    %2642 = vmatpush1.msra.mxu0 %v1403
    %2643 = vmatprep.subr.mxu0 0.0
    %2644 = vmatpush1.msra.mxu0 %v1404
    %2645 = vmatprep.subr.mxu0 0.0
    %2646 = vmatpush1.msra.mxu0 %v1405
    %2647 = vmatprep.subr.mxu0 0.0
    %2648 = vmatpush1.msra.mxu0 0.0
    %2649 = vmatprep.subr.mxu0 0.0
    %2650 = vmatpush1.msra.mxu0 0.0
    %2651 = vmatprep.subr.mxu0 0.0
    %2652 = vmatpush1.msra.mxu0 0.0
    %2653 = vmatprep.subr.mxu0 0.0
    %2654 = vmatpush1.msra.mxu0 0.0
    %2655 = vmatprep.subr.mxu0 0.0
    %2656 = vmatpush1.msra.mxu0 0.0
    %2657 = vmatprep.subr.mxu0 0.0
    %2658 = vmatpush1.msra.mxu0 0.0
    %2659 = vmatprep.subr.mxu0 0.0
    %2660 = vmatpush1.msra.mxu0 0.0
    %2661 = vmatprep.subr.mxu0 0.0
    %2662 = vmatpush1.msra.mxu0 0.0
    %2663 = vmatprep.subr.mxu0 0.0
    %2664 = vmatpush1.msra.mxu0 0.0
    %2665 = vmatprep.subr.mxu0 0.0
    %2666 = vmatpush1.msra.mxu0 0.0
    %2667 = vmatprep.subr.mxu0 0.0
    %2668 = vmatpush1.msra.mxu0 0.0
    %2669 = vmatprep.subr.mxu0 0.0
    %2670 = vmatpush1.msra.mxu0 0.0
    %2671 = vmatprep.subr.mxu0 0.0
    %2672 = vmatpush1.msra.mxu0 0.0
    %2673 = vmatprep.subr.mxu0 0.0
    %2674 = vmatpush1.msra.mxu0 0.0
    %2675 = vmatprep.subr.mxu0 0.0
    %2676 = vmatpush1.msra.mxu0 0.0
    %2677 = vmatprep.subr.mxu0 0.0
    %2678 = vmatpush1.msra.mxu0 0.0
    %2679 = vmatprep.mubr.f32.mxu0 0.0
    %2680 = vmatmul.mubr.f32.gmra.mrb[0].mxu0 %v2613
    %v2681 = vpop.f32.mrb[0].mxu0
    %v2682 = vadd.f32 0.0, %v2681
    %v2683 = vpop.f32.mrb[0].mxu0
    %2684 = vmatprep.mubr.f32.mxu0 0.0
    %2685 = vmatmul.mubr.f32.gmra.mrb[0].mxu0 %v2614
    %v2686 = vpop.f32.mrb[0].mxu0
    %v2687 = vadd.f32 0.0, %v2686
    %v2688 = vpop.f32.mrb[0].mxu0
    %2689 = vdwg.mxu0
    %v2690 = vadd.f32 %v2472, %v2682
    %v2691 = vadd.f32 %v2473, %v2687
    %v2692 = vlaneseq
    %v2693 = vshrl.u32 %v2692, 7
    %v2694 = vsub.s32 5, %v2693
    %v2695 = vrot.slane %v1379, %v2694
    %v2696 = vadd.f32 %v2690, %v2695
    %v2697 = vadd.f32 %v2691, %v2695
    %s2698 = scalar_lea.vmem %s2, 16
    %v2699 = vld [vmem:[%s2698] sm:$0xff]
    %s2700 = scalar_lea.vmem %s3, 128
    %v2701 = vld [vmem:[%s2700] sm:$0xff]
    %v2702 = vld [vmem:[%s2700 + $0x8] sm:$0xff]
    %v2703 = vld [vmem:[%s2700 + $0x10] sm:$0xff]
    %v2704 = vld [vmem:[%s2700 + $0x18] sm:$0xff]
    %v2705 = vld [vmem:[%s2700 + $0x20] sm:$0xff]
    %v2706 = vld [vmem:[%s2700 + $0x28] sm:$0xff]
    %v2707 = vld [vmem:[%s2700 + $0x30] sm:$0xff]
    %v2708 = vld [vmem:[%s2700 + $0x38] sm:$0xff]
    %s2709 = scalar_lea.vmem %s4, 256
    %v2710 = vld [vmem:[%s2709] sm:$0xff]
    %v2711 = vld [vmem:[%s2709 + $0x8] sm:$0xff]
    %v2712 = vld [vmem:[%s2709 + $0x10] sm:$0xff]
    %v2713 = vld [vmem:[%s2709 + $0x18] sm:$0xff]
    %v2714 = vld [vmem:[%s2709 + $0x20] sm:$0xff]
    %v2715 = vld [vmem:[%s2709 + $0x28] sm:$0xff]
    %v2716 = vld [vmem:[%s2709 + $0x30] sm:$0xff]
    %v2717 = vld [vmem:[%s2709 + $0x38] sm:$0xff]
    %v2718 = vld [vmem:[%s2709 + $0x40] sm:$0xff]
    %v2719 = vld [vmem:[%s2709 + $0x48] sm:$0xff]
    %v2720 = vld [vmem:[%s2709 + $0x50] sm:$0xff]
    %v2721 = vld [vmem:[%s2709 + $0x58] sm:$0xff]
    %v2722 = vld [vmem:[%s2709 + $0x60] sm:$0xff]
    %v2723 = vld [vmem:[%s2709 + $0x68] sm:$0xff]
    %v2724 = vld [vmem:[%s2709 + $0x70] sm:$0xff]
    %v2725 = vld [vmem:[%s2709 + $0x78] sm:$0xff]
    %v2726 = vsel %vm81, %v2696, 0.0
    %2727 = vadd.xlane.f32.xlu0 %v2726
    %v2728 = vpop.xlane.xlu0 %2727
    %v2729 = vsel %vm81, %v2697, 0.0
    %2730 = vadd.xlane.f32.xlu0 %v2729
    %v2731 = vpop.xlane.xlu0 %2730
    %v2732 = vmul.f32 %v2728, %v88
    %v2733 = vmul.f32 %v2731, %v88
    %v2734 = vsub.f32 %v2696, %v2732
    %v2735 = vsub.f32 %v2697, %v2733
    %v2736 = vmul.f32 %v2734, %v2734
    %v2737 = vmul.f32 %v2735, %v2735
    %v2738 = vsel %vm81, %v2736, 0.0
    %2739 = vadd.xlane.f32.xlu0 %v2738
    %v2740 = vpop.xlane.xlu0 %2739
    %v2741 = vsel %vm81, %v2737, 0.0
    %2742 = vadd.xlane.f32.xlu0 %v2741
    %v2743 = vpop.xlane.xlu0 %2742
    %v2744 = vmul.f32 %v2740, %v88
    %v2745 = vmul.f32 %v2743, %v88
    %v2746 = vadd.f32 %v2744, 1e-05
    %v2747 = vadd.f32 %v2745, 1e-05
    %v2748 = vrsqrt.pop %v2746
    %v2749 = vrsqrt.pop %v2747
    %v2750 = vmul.f32 %v2734, %v2748
    %v2751 = vmul.f32 %v2735, %v2749
    %v2752 = vlaneseq
    %v2753 = vshrl.u32 %v2752, 7
    %v2754 = vsub.s32 0, %v2753
    %v2755 = vrot.slane %v2699, %v2754
    %v2756 = vmul.f32 %v2750, %v2755
    %v2757 = vmul.f32 %v2751, %v2755
    %v2758 = vlaneseq
    %v2759 = vshrl.u32 %v2758, 7
    %v2760 = vsub.s32 1, %v2759
    %v2761 = vrot.slane %v2699, %v2760
    %v2762 = vadd.f32 %v2756, %v2761
    %v2763 = vadd.f32 %v2757, %v2761
    %v2764 = vlaneseq
    %v2765 = vshrl.u32 %v2764, 7
    %v2766 = vsub.s32 6, %v2765
    %v2767 = vrot.slane %v2699, %v2766
    %v2769 = vsel %vm81, %v2762, 0
    %v2772 = vsel %vm81, %v2763, 0
    %2774 = vmatprep.subr.mxu0 0.0
    %2775 = vmatpush1.msra.mxu0 %v2702
    %2776 = vmatprep.subr.mxu0 0.0
    %2777 = vmatpush1.msra.mxu0 %v2704
    %2778 = vmatprep.subr.mxu0 0.0
    %2779 = vmatpush1.msra.mxu0 %v2706
    %2780 = vmatprep.subr.mxu0 0.0
    %2781 = vmatpush1.msra.mxu0 %v2708
    %2782 = vmatprep.subr.mxu0 0.0
    %2783 = vmatpush1.msra.mxu0 0.0
    %2784 = vmatprep.subr.mxu0 0.0
    %2785 = vmatpush1.msra.mxu0 0.0
    %2786 = vmatprep.subr.mxu0 0.0
    %2787 = vmatpush1.msra.mxu0 0.0
    %2788 = vmatprep.subr.mxu0 0.0
    %2789 = vmatpush1.msra.mxu0 0.0
    %2790 = vmatprep.subr.mxu0 0.0
    %2791 = vmatpush1.msra.mxu0 0.0
    %2792 = vmatprep.subr.mxu0 0.0
    %2793 = vmatpush1.msra.mxu0 0.0
    %2794 = vmatprep.subr.mxu0 0.0
    %2795 = vmatpush1.msra.mxu0 0.0
    %2796 = vmatprep.subr.mxu0 0.0
    %2797 = vmatpush1.msra.mxu0 0.0
    %2798 = vmatprep.subr.mxu0 0.0
    %2799 = vmatpush1.msra.mxu0 0.0
    %2800 = vmatprep.subr.mxu0 0.0
    %2801 = vmatpush1.msra.mxu0 0.0
    %2802 = vmatprep.subr.mxu0 0.0
    %2803 = vmatpush1.msra.mxu0 0.0
    %2804 = vmatprep.subr.mxu0 0.0
    %2805 = vmatpush1.msra.mxu0 0.0
    %2806 = vmatprep.subr.mxu0 0.0
    %2807 = vmatpush1.msra.mxu0 0.0
    %2808 = vmatprep.subr.mxu0 0.0
    %2809 = vmatpush1.msra.mxu0 0.0
    %2810 = vmatprep.subr.mxu0 0.0
    %2811 = vmatpush1.msra.mxu0 0.0
    %2812 = vmatprep.subr.mxu0 0.0
    %2813 = vmatpush1.msra.mxu0 0.0
    %2814 = vmatprep.subr.mxu0 0.0
    %2815 = vmatpush1.msra.mxu0 0.0
    %2816 = vmatprep.subr.mxu0 0.0
    %2817 = vmatpush1.msra.mxu0 0.0
    %2818 = vmatprep.subr.mxu0 0.0
    %2819 = vmatpush1.msra.mxu0 0.0
    %2820 = vmatprep.subr.mxu0 0.0
    %2821 = vmatpush1.msra.mxu0 0.0
    %2822 = vmatprep.subr.mxu0 0.0
    %2823 = vmatpush1.msra.mxu0 0.0
    %2824 = vmatprep.subr.mxu0 0.0
    %2825 = vmatpush1.msra.mxu0 0.0
    %2826 = vmatprep.subr.mxu0 0.0
    %2827 = vmatpush1.msra.mxu0 0.0
    %2828 = vmatprep.subr.mxu0 0.0
    %2829 = vmatpush1.msra.mxu0 0.0
    %2830 = vmatprep.subr.mxu0 0.0
    %2831 = vmatpush1.msra.mxu0 0.0
    %2832 = vmatprep.subr.mxu0 0.0
    %2833 = vmatpush1.msra.mxu0 0.0
    %2834 = vmatprep.subr.mxu0 0.0
    %2835 = vmatpush1.msra.mxu0 0.0
    %2836 = vmatprep.subr.mxu0 0.0
    %2837 = vmatpush1.msra.mxu0 0.0
    %2838 = vmatprep.mubr.f32.mxu0 0.0
    %2839 = vmatmul.mubr.f32.gmra.mrb[0].mxu0 %v2769
    %v2840 = vpop.f32.mrb[0].mxu0
    %v2841 = vadd.f32 %v2767, %v2840
    %v2842 = vpop.f32.mrb[0].mxu0
    %2843 = vmatprep.mubr.f32.mxu0 0.0
    %2844 = vmatmul.mubr.f32.gmra.mrb[0].mxu0 %v2772
    %v2845 = vpop.f32.mrb[0].mxu0
    %v2846 = vadd.f32 %v2767, %v2845
    %v2847 = vpop.f32.mrb[0].mxu0
    %2848 = vdwg.mxu0
    %v2849 = vmul.f32 %v2841, 0.35355338
    %v2850 = vmul.f32 %v2846, 0.35355338
    %2853 = vrot.lane.b32.xlu0 %v2841, 96
    %v2854 = vpop.permute.xlu0 %2853
    %2855 = vrot.lane.b32.xlu0 %v2846, 96
    %v2856 = vpop.permute.xlu0 %2855
    %v2858 = vsel %vm214, %v2849, 0
    %v2861 = vsel %vm214, %v2850, 0
    %v2863 = vsel %vm214, %v2854, 0
    %v2865 = vsel %vm214, %v2856, 0
    %2867 = vmatprep.subr.mxu0 0.0
    %2868 = vmatpush1.xpose.msra.mxu0 %v2863
    %2869 = vmatprep.subr.mxu0 0.0
    %2870 = vmatpush1.xpose.msra.mxu0 %v2865
    %2871 = vmatprep.subr.mxu0 0.0
    %2872 = vmatpush1.xpose.msra.mxu0 0.0
    %2873 = vmatprep.subr.mxu0 0.0
    %2874 = vmatpush1.xpose.msra.mxu0 0.0
    %2875 = vmatprep.subr.mxu0 0.0
    %2876 = vmatpush1.xpose.msra.mxu0 0.0
    %2877 = vmatprep.subr.mxu0 0.0
    %2878 = vmatpush1.xpose.msra.mxu0 0.0
    %2879 = vmatprep.subr.mxu0 0.0
    %2880 = vmatpush1.xpose.msra.mxu0 0.0
    %2881 = vmatprep.subr.mxu0 0.0
    %2882 = vmatpush1.xpose.msra.mxu0 0.0
    %2883 = vmatprep.subr.mxu0 0.0
    %2884 = vmatpush1.xpose.msra.mxu0 0.0
    %2885 = vmatprep.subr.mxu0 0.0
    %2886 = vmatpush1.xpose.msra.mxu0 0.0
    %2887 = vmatprep.subr.mxu0 0.0
    %2888 = vmatpush1.xpose.msra.mxu0 0.0
    %2889 = vmatprep.subr.mxu0 0.0
    %2890 = vmatpush1.xpose.msra.mxu0 0.0
    %2891 = vmatprep.subr.mxu0 0.0
    %2892 = vmatpush1.xpose.msra.mxu0 0.0
    %2893 = vmatprep.subr.mxu0 0.0
    %2894 = vmatpush1.xpose.msra.mxu0 0.0
    %2895 = vmatprep.subr.mxu0 0.0
    %2896 = vmatpush1.xpose.msra.mxu0 0.0
    %2897 = vmatprep.subr.mxu0 0.0
    %2898 = vmatpush1.xpose.msra.mxu0 0.0
    %2899 = vmatprep.subr.mxu0 0.0
    %2900 = vmatpush1.xpose.msra.mxu0 0.0
    %2901 = vmatprep.subr.mxu0 0.0
    %2902 = vmatpush1.xpose.msra.mxu0 0.0
    %2903 = vmatprep.subr.mxu0 0.0
    %2904 = vmatpush1.xpose.msra.mxu0 0.0
    %2905 = vmatprep.subr.mxu0 0.0
    %2906 = vmatpush1.xpose.msra.mxu0 0.0
    %2907 = vmatprep.subr.mxu0 0.0
    %2908 = vmatpush1.xpose.msra.mxu0 0.0
    %2909 = vmatprep.subr.mxu0 0.0
    %2910 = vmatpush1.xpose.msra.mxu0 0.0
    %2911 = vmatprep.subr.mxu0 0.0
    %2912 = vmatpush1.xpose.msra.mxu0 0.0
    %2913 = vmatprep.subr.mxu0 0.0
    %2914 = vmatpush1.xpose.msra.mxu0 0.0
    %2915 = vmatprep.subr.mxu0 0.0
    %2916 = vmatpush1.xpose.msra.mxu0 0.0
    %2917 = vmatprep.subr.mxu0 0.0
    %2918 = vmatpush1.xpose.msra.mxu0 0.0
    %2919 = vmatprep.subr.mxu0 0.0
    %2920 = vmatpush1.xpose.msra.mxu0 0.0
    %2921 = vmatprep.subr.mxu0 0.0
    %2922 = vmatpush1.xpose.msra.mxu0 0.0
    %2923 = vmatprep.subr.mxu0 0.0
    %2924 = vmatpush1.xpose.msra.mxu0 0.0
    %2925 = vmatprep.subr.mxu0 0.0
    %2926 = vmatpush1.xpose.msra.mxu0 0.0
    %2927 = vmatprep.subr.mxu0 0.0
    %2928 = vmatpush1.xpose.msra.mxu0 0.0
    %2929 = vmatprep.subr.mxu0 0.0
    %2930 = vmatpush1.xpose.msra.mxu0 0.0
    %2931 = vmatprep.mubr.f32.mxu0 0.0
    %2932 = vmatmul.mubr.f32.gmra.mrb[0].mxu0 %v2858
    %v2933 = vpop.f32.mrb[0].mxu0
    %v2934 = vadd.f32 0.0, %v2933
    %v2935 = vpop.f32.mrb[0].mxu0
    %2936 = vmatprep.mubr.f32.mxu0 0.0
    %2937 = vmatmul.mubr.f32.gmra.mrb[0].mxu0 %v2861
    %v2938 = vpop.f32.mrb[0].mxu0
    %v2939 = vadd.f32 0.0, %v2938
    %v2940 = vpop.f32.mrb[0].mxu0
    %2941 = vdwg.mxu0
    %2942 = vrot.lane.b32.xlu0 %v2849, 120
    %v2943 = vpop.permute.xlu0 %2942
    %2944 = vrot.lane.b32.xlu0 %v2850, 120
    %v2945 = vpop.permute.xlu0 %2944
    %2946 = vrot.lane.b32.xlu0 %v2841, 88
    %v2947 = vpop.permute.xlu0 %2946
    %2948 = vrot.lane.b32.xlu0 %v2846, 88
    %v2949 = vpop.permute.xlu0 %2948
    %v2950 = vsel %vm214, %v2943, 0
    %v2952 = vsel %vm214, %v2945, 0
    %v2954 = vsel %vm214, %v2947, 0
    %v2956 = vsel %vm214, %v2949, 0
    %2958 = vmatprep.subr.mxu0 0.0
    %2959 = vmatpush1.xpose.msra.mxu0 %v2954
    %2960 = vmatprep.subr.mxu0 0.0
    %2961 = vmatpush1.xpose.msra.mxu0 %v2956
    %2962 = vmatprep.subr.mxu0 0.0
    %2963 = vmatpush1.xpose.msra.mxu0 0.0
    %2964 = vmatprep.subr.mxu0 0.0
    %2965 = vmatpush1.xpose.msra.mxu0 0.0
    %2966 = vmatprep.subr.mxu0 0.0
    %2967 = vmatpush1.xpose.msra.mxu0 0.0
    %2968 = vmatprep.subr.mxu0 0.0
    %2969 = vmatpush1.xpose.msra.mxu0 0.0
    %2970 = vmatprep.subr.mxu0 0.0
    %2971 = vmatpush1.xpose.msra.mxu0 0.0
    %2972 = vmatprep.subr.mxu0 0.0
    %2973 = vmatpush1.xpose.msra.mxu0 0.0
    %2974 = vmatprep.subr.mxu0 0.0
    %2975 = vmatpush1.xpose.msra.mxu0 0.0
    %2976 = vmatprep.subr.mxu0 0.0
    %2977 = vmatpush1.xpose.msra.mxu0 0.0
    %2978 = vmatprep.subr.mxu0 0.0
    %2979 = vmatpush1.xpose.msra.mxu0 0.0
    %2980 = vmatprep.subr.mxu0 0.0
    %2981 = vmatpush1.xpose.msra.mxu0 0.0
    %2982 = vmatprep.subr.mxu0 0.0
    %2983 = vmatpush1.xpose.msra.mxu0 0.0
    %2984 = vmatprep.subr.mxu0 0.0
    %2985 = vmatpush1.xpose.msra.mxu0 0.0
    %2986 = vmatprep.subr.mxu0 0.0
    %2987 = vmatpush1.xpose.msra.mxu0 0.0
    %2988 = vmatprep.subr.mxu0 0.0
    %2989 = vmatpush1.xpose.msra.mxu0 0.0
    %2990 = vmatprep.subr.mxu0 0.0
    %2991 = vmatpush1.xpose.msra.mxu0 0.0
    %2992 = vmatprep.subr.mxu0 0.0
    %2993 = vmatpush1.xpose.msra.mxu0 0.0
    %2994 = vmatprep.subr.mxu0 0.0
    %2995 = vmatpush1.xpose.msra.mxu0 0.0
    %2996 = vmatprep.subr.mxu0 0.0
    %2997 = vmatpush1.xpose.msra.mxu0 0.0
    %2998 = vmatprep.subr.mxu0 0.0
    %2999 = vmatpush1.xpose.msra.mxu0 0.0
    %3000 = vmatprep.subr.mxu0 0.0
    %3001 = vmatpush1.xpose.msra.mxu0 0.0
    %3002 = vmatprep.subr.mxu0 0.0
    %3003 = vmatpush1.xpose.msra.mxu0 0.0
    %3004 = vmatprep.subr.mxu0 0.0
    %3005 = vmatpush1.xpose.msra.mxu0 0.0
    %3006 = vmatprep.subr.mxu0 0.0
    %3007 = vmatpush1.xpose.msra.mxu0 0.0
    %3008 = vmatprep.subr.mxu0 0.0
    %3009 = vmatpush1.xpose.msra.mxu0 0.0
    %3010 = vmatprep.subr.mxu0 0.0
    %3011 = vmatpush1.xpose.msra.mxu0 0.0
    %3012 = vmatprep.subr.mxu0 0.0
    %3013 = vmatpush1.xpose.msra.mxu0 0.0
    %3014 = vmatprep.subr.mxu0 0.0
    %3015 = vmatpush1.xpose.msra.mxu0 0.0
    %3016 = vmatprep.subr.mxu0 0.0
    %3017 = vmatpush1.xpose.msra.mxu0 0.0
    %3018 = vmatprep.subr.mxu0 0.0
    %3019 = vmatpush1.xpose.msra.mxu0 0.0
    %3020 = vmatprep.subr.mxu0 0.0
    %3021 = vmatpush1.xpose.msra.mxu0 0.0
    %3022 = vmatprep.mubr.f32.mxu0 0.0
    %3023 = vmatmul.mubr.f32.gmra.mrb[0].mxu0 %v2950
    %v3024 = vpop.f32.mrb[0].mxu0
    %v3025 = vadd.f32 0.0, %v3024
    %v3026 = vpop.f32.mrb[0].mxu0
    %3027 = vmatprep.mubr.f32.mxu0 0.0
    %3028 = vmatmul.mubr.f32.gmra.mrb[0].mxu0 %v2952
    %v3029 = vpop.f32.mrb[0].mxu0
    %v3030 = vadd.f32 0.0, %v3029
    %v3031 = vpop.f32.mrb[0].mxu0
    %3032 = vdwg.mxu0
    %3033 = vrot.lane.b32.xlu0 %v2849, 112
    %v3034 = vpop.permute.xlu0 %3033
    %3035 = vrot.lane.b32.xlu0 %v2850, 112
    %v3036 = vpop.permute.xlu0 %3035
    %3037 = vrot.lane.b32.xlu0 %v2841, 80
    %v3038 = vpop.permute.xlu0 %3037
    %3039 = vrot.lane.b32.xlu0 %v2846, 80
    %v3040 = vpop.permute.xlu0 %3039
    %v3041 = vsel %vm214, %v3034, 0
    %v3043 = vsel %vm214, %v3036, 0
    %v3045 = vsel %vm214, %v3038, 0
    %v3047 = vsel %vm214, %v3040, 0
    %3049 = vmatprep.subr.mxu0 0.0
    %3050 = vmatpush1.xpose.msra.mxu0 %v3045
    %3051 = vmatprep.subr.mxu0 0.0
    %3052 = vmatpush1.xpose.msra.mxu0 %v3047
    %3053 = vmatprep.subr.mxu0 0.0
    %3054 = vmatpush1.xpose.msra.mxu0 0.0
    %3055 = vmatprep.subr.mxu0 0.0
    %3056 = vmatpush1.xpose.msra.mxu0 0.0
    %3057 = vmatprep.subr.mxu0 0.0
    %3058 = vmatpush1.xpose.msra.mxu0 0.0
    %3059 = vmatprep.subr.mxu0 0.0
    %3060 = vmatpush1.xpose.msra.mxu0 0.0
    %3061 = vmatprep.subr.mxu0 0.0
    %3062 = vmatpush1.xpose.msra.mxu0 0.0
    %3063 = vmatprep.subr.mxu0 0.0
    %3064 = vmatpush1.xpose.msra.mxu0 0.0
    %3065 = vmatprep.subr.mxu0 0.0
    %3066 = vmatpush1.xpose.msra.mxu0 0.0
    %3067 = vmatprep.subr.mxu0 0.0
    %3068 = vmatpush1.xpose.msra.mxu0 0.0
    %3069 = vmatprep.subr.mxu0 0.0
    %3070 = vmatpush1.xpose.msra.mxu0 0.0
    %3071 = vmatprep.subr.mxu0 0.0
    %3072 = vmatpush1.xpose.msra.mxu0 0.0
    %3073 = vmatprep.subr.mxu0 0.0
    %3074 = vmatpush1.xpose.msra.mxu0 0.0
    %3075 = vmatprep.subr.mxu0 0.0
    %3076 = vmatpush1.xpose.msra.mxu0 0.0
    %3077 = vmatprep.subr.mxu0 0.0
    %3078 = vmatpush1.xpose.msra.mxu0 0.0
    %3079 = vmatprep.subr.mxu0 0.0
    %3080 = vmatpush1.xpose.msra.mxu0 0.0
    %3081 = vmatprep.subr.mxu0 0.0
    %3082 = vmatpush1.xpose.msra.mxu0 0.0
    %3083 = vmatprep.subr.mxu0 0.0
    %3084 = vmatpush1.xpose.msra.mxu0 0.0
    %3085 = vmatprep.subr.mxu0 0.0
    %3086 = vmatpush1.xpose.msra.mxu0 0.0
    %3087 = vmatprep.subr.mxu0 0.0
    %3088 = vmatpush1.xpose.msra.mxu0 0.0
    %3089 = vmatprep.subr.mxu0 0.0
    %3090 = vmatpush1.xpose.msra.mxu0 0.0
    %3091 = vmatprep.subr.mxu0 0.0
    %3092 = vmatpush1.xpose.msra.mxu0 0.0
    %3093 = vmatprep.subr.mxu0 0.0
    %3094 = vmatpush1.xpose.msra.mxu0 0.0
    %3095 = vmatprep.subr.mxu0 0.0
    %3096 = vmatpush1.xpose.msra.mxu0 0.0
    %3097 = vmatprep.subr.mxu0 0.0
    %3098 = vmatpush1.xpose.msra.mxu0 0.0
    %3099 = vmatprep.subr.mxu0 0.0
    %3100 = vmatpush1.xpose.msra.mxu0 0.0
    %3101 = vmatprep.subr.mxu0 0.0
    %3102 = vmatpush1.xpose.msra.mxu0 0.0
    %3103 = vmatprep.subr.mxu0 0.0
    %3104 = vmatpush1.xpose.msra.mxu0 0.0
    %3105 = vmatprep.subr.mxu0 0.0
    %3106 = vmatpush1.xpose.msra.mxu0 0.0
    %3107 = vmatprep.subr.mxu0 0.0
    %3108 = vmatpush1.xpose.msra.mxu0 0.0
    %3109 = vmatprep.subr.mxu0 0.0
    %3110 = vmatpush1.xpose.msra.mxu0 0.0
    %3111 = vmatprep.subr.mxu0 0.0
    %3112 = vmatpush1.xpose.msra.mxu0 0.0
    %3113 = vmatprep.mubr.f32.mxu0 0.0
    %3114 = vmatmul.mubr.f32.gmra.mrb[0].mxu0 %v3041
    %v3115 = vpop.f32.mrb[0].mxu0
    %v3116 = vadd.f32 0.0, %v3115
    %v3117 = vpop.f32.mrb[0].mxu0
    %3118 = vmatprep.mubr.f32.mxu0 0.0
    %3119 = vmatmul.mubr.f32.gmra.mrb[0].mxu0 %v3043
    %v3120 = vpop.f32.mrb[0].mxu0
    %v3121 = vadd.f32 0.0, %v3120
    %v3122 = vpop.f32.mrb[0].mxu0
    %3123 = vdwg.mxu0
    %3124 = vrot.lane.b32.xlu0 %v2849, 104
    %v3125 = vpop.permute.xlu0 %3124
    %3126 = vrot.lane.b32.xlu0 %v2850, 104
    %v3127 = vpop.permute.xlu0 %3126
    %3128 = vrot.lane.b32.xlu0 %v2841, 72
    %v3129 = vpop.permute.xlu0 %3128
    %3130 = vrot.lane.b32.xlu0 %v2846, 72
    %v3131 = vpop.permute.xlu0 %3130
    %v3132 = vsel %vm214, %v3125, 0
    %v3134 = vsel %vm214, %v3127, 0
    %v3136 = vsel %vm214, %v3129, 0
    %v3138 = vsel %vm214, %v3131, 0
    %3140 = vmatprep.subr.mxu0 0.0
    %3141 = vmatpush1.xpose.msra.mxu0 %v3136
    %3142 = vmatprep.subr.mxu0 0.0
    %3143 = vmatpush1.xpose.msra.mxu0 %v3138
    %3144 = vmatprep.subr.mxu0 0.0
    %3145 = vmatpush1.xpose.msra.mxu0 0.0
    %3146 = vmatprep.subr.mxu0 0.0
    %3147 = vmatpush1.xpose.msra.mxu0 0.0
    %3148 = vmatprep.subr.mxu0 0.0
    %3149 = vmatpush1.xpose.msra.mxu0 0.0
    %3150 = vmatprep.subr.mxu0 0.0
    %3151 = vmatpush1.xpose.msra.mxu0 0.0
    %3152 = vmatprep.subr.mxu0 0.0
    %3153 = vmatpush1.xpose.msra.mxu0 0.0
    %3154 = vmatprep.subr.mxu0 0.0
    %3155 = vmatpush1.xpose.msra.mxu0 0.0
    %3156 = vmatprep.subr.mxu0 0.0
    %3157 = vmatpush1.xpose.msra.mxu0 0.0
    %3158 = vmatprep.subr.mxu0 0.0
    %3159 = vmatpush1.xpose.msra.mxu0 0.0
    %3160 = vmatprep.subr.mxu0 0.0
    %3161 = vmatpush1.xpose.msra.mxu0 0.0
    %3162 = vmatprep.subr.mxu0 0.0
    %3163 = vmatpush1.xpose.msra.mxu0 0.0
    %3164 = vmatprep.subr.mxu0 0.0
    %3165 = vmatpush1.xpose.msra.mxu0 0.0
    %3166 = vmatprep.subr.mxu0 0.0
    %3167 = vmatpush1.xpose.msra.mxu0 0.0
    %3168 = vmatprep.subr.mxu0 0.0
    %3169 = vmatpush1.xpose.msra.mxu0 0.0
    %3170 = vmatprep.subr.mxu0 0.0
    %3171 = vmatpush1.xpose.msra.mxu0 0.0
    %3172 = vmatprep.subr.mxu0 0.0
    %3173 = vmatpush1.xpose.msra.mxu0 0.0
    %3174 = vmatprep.subr.mxu0 0.0
    %3175 = vmatpush1.xpose.msra.mxu0 0.0
    %3176 = vmatprep.subr.mxu0 0.0
    %3177 = vmatpush1.xpose.msra.mxu0 0.0
    %3178 = vmatprep.subr.mxu0 0.0
    %3179 = vmatpush1.xpose.msra.mxu0 0.0
    %3180 = vmatprep.subr.mxu0 0.0
    %3181 = vmatpush1.xpose.msra.mxu0 0.0
    %3182 = vmatprep.subr.mxu0 0.0
    %3183 = vmatpush1.xpose.msra.mxu0 0.0
    %3184 = vmatprep.subr.mxu0 0.0
    %3185 = vmatpush1.xpose.msra.mxu0 0.0
    %3186 = vmatprep.subr.mxu0 0.0
    %3187 = vmatpush1.xpose.msra.mxu0 0.0
    %3188 = vmatprep.subr.mxu0 0.0
    %3189 = vmatpush1.xpose.msra.mxu0 0.0
    %3190 = vmatprep.subr.mxu0 0.0
    %3191 = vmatpush1.xpose.msra.mxu0 0.0
    %3192 = vmatprep.subr.mxu0 0.0
    %3193 = vmatpush1.xpose.msra.mxu0 0.0
    %3194 = vmatprep.subr.mxu0 0.0
    %3195 = vmatpush1.xpose.msra.mxu0 0.0
    %3196 = vmatprep.subr.mxu0 0.0
    %3197 = vmatpush1.xpose.msra.mxu0 0.0
    %3198 = vmatprep.subr.mxu0 0.0
    %3199 = vmatpush1.xpose.msra.mxu0 0.0
    %3200 = vmatprep.subr.mxu0 0.0
    %3201 = vmatpush1.xpose.msra.mxu0 0.0
    %3202 = vmatprep.subr.mxu0 0.0
    %3203 = vmatpush1.xpose.msra.mxu0 0.0
    %3204 = vmatprep.mubr.f32.mxu0 0.0
    %3205 = vmatmul.mubr.f32.gmra.mrb[0].mxu0 %v3132
    %v3206 = vpop.f32.mrb[0].mxu0
    %v3207 = vadd.f32 0.0, %v3206
    %v3208 = vpop.f32.mrb[0].mxu0
    %3209 = vmatprep.mubr.f32.mxu0 0.0
    %3210 = vmatmul.mubr.f32.gmra.mrb[0].mxu0 %v3134
    %v3211 = vpop.f32.mrb[0].mxu0
    %v3212 = vadd.f32 0.0, %v3211
    %v3213 = vpop.f32.mrb[0].mxu0
    %3214 = vdwg.mxu0
    %v3215 = vadd.f32 %v2934, %v54
    %v3216 = vadd.f32 %v2939, %v55
    %v3217 = vadd.f32 %v3025, %v54
    %v3218 = vadd.f32 %v3030, %v55
    %v3219 = vadd.f32 %v3116, %v54
    %v3220 = vadd.f32 %v3121, %v55
    %v3221 = vadd.f32 %v3207, %v54
    %v3222 = vadd.f32 %v3212, %v55
    %v3223 = vsel %vm581, %v3215, -inf
    %3224 = vmax.xlane.f32.xlu0 %v3223
    %v3225 = vpop.xlane.xlu0 %3224
    %v3226 = vsel %vm581, %v3216, -inf
    %3227 = vmax.xlane.f32.xlu0 %v3226
    %v3228 = vpop.xlane.xlu0 %3227
    %v3229 = vsel %vm581, %v3217, -inf
    %3230 = vmax.xlane.f32.xlu0 %v3229
    %v3231 = vpop.xlane.xlu0 %3230
    %v3232 = vsel %vm581, %v3218, -inf
    %3233 = vmax.xlane.f32.xlu0 %v3232
    %v3234 = vpop.xlane.xlu0 %3233
    %v3235 = vsel %vm581, %v3219, -inf
    %3236 = vmax.xlane.f32.xlu0 %v3235
    %v3237 = vpop.xlane.xlu0 %3236
    %v3238 = vsel %vm581, %v3220, -inf
    %3239 = vmax.xlane.f32.xlu0 %v3238
    %v3240 = vpop.xlane.xlu0 %3239
    %v3241 = vsel %vm581, %v3221, -inf
    %3242 = vmax.xlane.f32.xlu0 %v3241
    %v3243 = vpop.xlane.xlu0 %3242
    %v3244 = vsel %vm581, %v3222, -inf
    %3245 = vmax.xlane.f32.xlu0 %v3244
    %v3246 = vpop.xlane.xlu0 %3245
    %v3247 = vsub.f32 %v3215, %v3225
    %v3248 = vsub.f32 %v3216, %v3228
    %v3249 = vsub.f32 %v3217, %v3231
    %v3250 = vsub.f32 %v3218, %v3234
    %v3251 = vsub.f32 %v3219, %v3237
    %v3252 = vsub.f32 %v3220, %v3240
    %v3253 = vsub.f32 %v3221, %v3243
    %v3254 = vsub.f32 %v3222, %v3246
    %v3255 = vmul.f32 %v3247, 1.442695
    %v3256 = vpow.pop %v3255
    %v3257 = vmul.f32 %v3248, 1.442695
    %v3258 = vpow.pop %v3257
    %v3259 = vmul.f32 %v3249, 1.442695
    %v3260 = vpow.pop %v3259
    %v3261 = vmul.f32 %v3250, 1.442695
    %v3262 = vpow.pop %v3261
    %v3263 = vmul.f32 %v3251, 1.442695
    %v3264 = vpow.pop %v3263
    %v3265 = vmul.f32 %v3252, 1.442695
    %v3266 = vpow.pop %v3265
    %v3267 = vmul.f32 %v3253, 1.442695
    %v3268 = vpow.pop %v3267
    %v3269 = vmul.f32 %v3254, 1.442695
    %v3270 = vpow.pop %v3269
    %v3271 = vsel %vm581, %v3256, 0.0
    %3272 = vadd.xlane.f32.xlu0 %v3271
    %v3273 = vpop.xlane.xlu0 %3272
    %v3274 = vsel %vm581, %v3258, 0.0
    %3275 = vadd.xlane.f32.xlu0 %v3274
    %v3276 = vpop.xlane.xlu0 %3275
    %v3277 = vsel %vm581, %v3260, 0.0
    %3278 = vadd.xlane.f32.xlu0 %v3277
    %v3279 = vpop.xlane.xlu0 %3278
    %v3280 = vsel %vm581, %v3262, 0.0
    %3281 = vadd.xlane.f32.xlu0 %v3280
    %v3282 = vpop.xlane.xlu0 %3281
    %v3283 = vsel %vm581, %v3264, 0.0
    %3284 = vadd.xlane.f32.xlu0 %v3283
    %v3285 = vpop.xlane.xlu0 %3284
    %v3286 = vsel %vm581, %v3266, 0.0
    %3287 = vadd.xlane.f32.xlu0 %v3286
    %v3288 = vpop.xlane.xlu0 %3287
    %v3289 = vsel %vm581, %v3268, 0.0
    %3290 = vadd.xlane.f32.xlu0 %v3289
    %v3291 = vpop.xlane.xlu0 %3290
    %v3292 = vsel %vm581, %v3270, 0.0
    %3293 = vadd.xlane.f32.xlu0 %v3292
    %v3294 = vpop.xlane.xlu0 %3293
    %v3295 = vrcp.pop %v3273
    %v3296 = vmul.f32 %v3256, %v3295
    %v3297 = vrcp.pop %v3276
    %v3298 = vmul.f32 %v3258, %v3297
    %v3299 = vrcp.pop %v3279
    %v3300 = vmul.f32 %v3260, %v3299
    %v3301 = vrcp.pop %v3282
    %v3302 = vmul.f32 %v3262, %v3301
    %v3303 = vrcp.pop %v3285
    %v3304 = vmul.f32 %v3264, %v3303
    %v3305 = vrcp.pop %v3288
    %v3306 = vmul.f32 %v3266, %v3305
    %v3307 = vrcp.pop %v3291
    %v3308 = vmul.f32 %v3268, %v3307
    %v3309 = vrcp.pop %v3294
    %v3310 = vmul.f32 %v3270, %v3309
    %3311 = vrot.lane.b32.xlu0 %v2841, 64
    %v3312 = vpop.permute.xlu0 %3311
    %3313 = vrot.lane.b32.xlu0 %v2846, 64
    %v3314 = vpop.permute.xlu0 %3313
    %v3318 = vsel %vm581, %v3296, 0
    %v3321 = vsel %vm581, %v3298, 0
    %3323 = vmatprep.subr.mxu0 0.0
    %3324 = vmatpush1.msra.mxu0 %v3312
    %3325 = vmatprep.subr.mxu0 0.0
    %3326 = vmatpush1.msra.mxu0 %v3314
    %3327 = vmatprep.subr.mxu0 0.0
    %3328 = vmatpush1.msra.mxu0 0.0
    %3329 = vmatprep.subr.mxu0 0.0
    %3330 = vmatpush1.msra.mxu0 0.0
    %3331 = vmatprep.subr.mxu0 0.0
    %3332 = vmatpush1.msra.mxu0 0.0
    %3333 = vmatprep.subr.mxu0 0.0
    %3334 = vmatpush1.msra.mxu0 0.0
    %3335 = vmatprep.subr.mxu0 0.0
    %3336 = vmatpush1.msra.mxu0 0.0
    %3337 = vmatprep.subr.mxu0 0.0
    %3338 = vmatpush1.msra.mxu0 0.0
    %3339 = vmatprep.subr.mxu0 0.0
    %3340 = vmatpush1.msra.mxu0 0.0
    %3341 = vmatprep.subr.mxu0 0.0
    %3342 = vmatpush1.msra.mxu0 0.0
    %3343 = vmatprep.subr.mxu0 0.0
    %3344 = vmatpush1.msra.mxu0 0.0
    %3345 = vmatprep.subr.mxu0 0.0
    %3346 = vmatpush1.msra.mxu0 0.0
    %3347 = vmatprep.subr.mxu0 0.0
    %3348 = vmatpush1.msra.mxu0 0.0
    %3349 = vmatprep.subr.mxu0 0.0
    %3350 = vmatpush1.msra.mxu0 0.0
    %3351 = vmatprep.subr.mxu0 0.0
    %3352 = vmatpush1.msra.mxu0 0.0
    %3353 = vmatprep.subr.mxu0 0.0
    %3354 = vmatpush1.msra.mxu0 0.0
    %3355 = vmatprep.subr.mxu0 0.0
    %3356 = vmatpush1.msra.mxu0 0.0
    %3357 = vmatprep.subr.mxu0 0.0
    %3358 = vmatpush1.msra.mxu0 0.0
    %3359 = vmatprep.subr.mxu0 0.0
    %3360 = vmatpush1.msra.mxu0 0.0
    %3361 = vmatprep.subr.mxu0 0.0
    %3362 = vmatpush1.msra.mxu0 0.0
    %3363 = vmatprep.subr.mxu0 0.0
    %3364 = vmatpush1.msra.mxu0 0.0
    %3365 = vmatprep.subr.mxu0 0.0
    %3366 = vmatpush1.msra.mxu0 0.0
    %3367 = vmatprep.subr.mxu0 0.0
    %3368 = vmatpush1.msra.mxu0 0.0
    %3369 = vmatprep.subr.mxu0 0.0
    %3370 = vmatpush1.msra.mxu0 0.0
    %3371 = vmatprep.subr.mxu0 0.0
    %3372 = vmatpush1.msra.mxu0 0.0
    %3373 = vmatprep.subr.mxu0 0.0
    %3374 = vmatpush1.msra.mxu0 0.0
    %3375 = vmatprep.subr.mxu0 0.0
    %3376 = vmatpush1.msra.mxu0 0.0
    %3377 = vmatprep.subr.mxu0 0.0
    %3378 = vmatpush1.msra.mxu0 0.0
    %3379 = vmatprep.subr.mxu0 0.0
    %3380 = vmatpush1.msra.mxu0 0.0
    %3381 = vmatprep.subr.mxu0 0.0
    %3382 = vmatpush1.msra.mxu0 0.0
    %3383 = vmatprep.subr.mxu0 0.0
    %3384 = vmatpush1.msra.mxu0 0.0
    %3385 = vmatprep.subr.mxu0 0.0
    %3386 = vmatpush1.msra.mxu0 0.0
    %3387 = vmatprep.mubr.f32.mxu0 0.0
    %3388 = vmatmul.mubr.f32.gmra.mrb[0].mxu0 %v3318
    %v3389 = vpop.f32.mrb[0].mxu0
    %v3390 = vadd.f32 0.0, %v3389
    %v3391 = vpop.f32.mrb[0].mxu0
    %3392 = vmatprep.mubr.f32.mxu0 0.0
    %3393 = vmatmul.mubr.f32.gmra.mrb[0].mxu0 %v3321
    %v3394 = vpop.f32.mrb[0].mxu0
    %v3395 = vadd.f32 0.0, %v3394
    %v3396 = vpop.f32.mrb[0].mxu0
    %3397 = vdwg.mxu0
    %3398 = vrot.lane.b32.xlu0 %v2841, 56
    %v3399 = vpop.permute.xlu0 %3398
    %3400 = vrot.lane.b32.xlu0 %v2846, 56
    %v3401 = vpop.permute.xlu0 %3400
    %v3405 = vsel %vm581, %v3300, 0
    %v3408 = vsel %vm581, %v3302, 0
    %3410 = vmatprep.subr.mxu0 0.0
    %3411 = vmatpush1.msra.mxu0 %v3399
    %3412 = vmatprep.subr.mxu0 0.0
    %3413 = vmatpush1.msra.mxu0 %v3401
    %3414 = vmatprep.subr.mxu0 0.0
    %3415 = vmatpush1.msra.mxu0 0.0
    %3416 = vmatprep.subr.mxu0 0.0
    %3417 = vmatpush1.msra.mxu0 0.0
    %3418 = vmatprep.subr.mxu0 0.0
    %3419 = vmatpush1.msra.mxu0 0.0
    %3420 = vmatprep.subr.mxu0 0.0
    %3421 = vmatpush1.msra.mxu0 0.0
    %3422 = vmatprep.subr.mxu0 0.0
    %3423 = vmatpush1.msra.mxu0 0.0
    %3424 = vmatprep.subr.mxu0 0.0
    %3425 = vmatpush1.msra.mxu0 0.0
    %3426 = vmatprep.subr.mxu0 0.0
    %3427 = vmatpush1.msra.mxu0 0.0
    %3428 = vmatprep.subr.mxu0 0.0
    %3429 = vmatpush1.msra.mxu0 0.0
    %3430 = vmatprep.subr.mxu0 0.0
    %3431 = vmatpush1.msra.mxu0 0.0
    %3432 = vmatprep.subr.mxu0 0.0
    %3433 = vmatpush1.msra.mxu0 0.0
    %3434 = vmatprep.subr.mxu0 0.0
    %3435 = vmatpush1.msra.mxu0 0.0
    %3436 = vmatprep.subr.mxu0 0.0
    %3437 = vmatpush1.msra.mxu0 0.0
    %3438 = vmatprep.subr.mxu0 0.0
    %3439 = vmatpush1.msra.mxu0 0.0
    %3440 = vmatprep.subr.mxu0 0.0
    %3441 = vmatpush1.msra.mxu0 0.0
    %3442 = vmatprep.subr.mxu0 0.0
    %3443 = vmatpush1.msra.mxu0 0.0
    %3444 = vmatprep.subr.mxu0 0.0
    %3445 = vmatpush1.msra.mxu0 0.0
    %3446 = vmatprep.subr.mxu0 0.0
    %3447 = vmatpush1.msra.mxu0 0.0
    %3448 = vmatprep.subr.mxu0 0.0
    %3449 = vmatpush1.msra.mxu0 0.0
    %3450 = vmatprep.subr.mxu0 0.0
    %3451 = vmatpush1.msra.mxu0 0.0
    %3452 = vmatprep.subr.mxu0 0.0
    %3453 = vmatpush1.msra.mxu0 0.0
    %3454 = vmatprep.subr.mxu0 0.0
    %3455 = vmatpush1.msra.mxu0 0.0
    %3456 = vmatprep.subr.mxu0 0.0
    %3457 = vmatpush1.msra.mxu0 0.0
    %3458 = vmatprep.subr.mxu0 0.0
    %3459 = vmatpush1.msra.mxu0 0.0
    %3460 = vmatprep.subr.mxu0 0.0
    %3461 = vmatpush1.msra.mxu0 0.0
    %3462 = vmatprep.subr.mxu0 0.0
    %3463 = vmatpush1.msra.mxu0 0.0
    %3464 = vmatprep.subr.mxu0 0.0
    %3465 = vmatpush1.msra.mxu0 0.0
    %3466 = vmatprep.subr.mxu0 0.0
    %3467 = vmatpush1.msra.mxu0 0.0
    %3468 = vmatprep.subr.mxu0 0.0
    %3469 = vmatpush1.msra.mxu0 0.0
    %3470 = vmatprep.subr.mxu0 0.0
    %3471 = vmatpush1.msra.mxu0 0.0
    %3472 = vmatprep.subr.mxu0 0.0
    %3473 = vmatpush1.msra.mxu0 0.0
    %3474 = vmatprep.mubr.f32.mxu0 0.0
    %3475 = vmatmul.mubr.f32.gmra.mrb[0].mxu0 %v3405
    %v3476 = vpop.f32.mrb[0].mxu0
    %v3477 = vadd.f32 0.0, %v3476
    %v3478 = vpop.f32.mrb[0].mxu0
    %3479 = vmatprep.mubr.f32.mxu0 0.0
    %3480 = vmatmul.mubr.f32.gmra.mrb[0].mxu0 %v3408
    %v3481 = vpop.f32.mrb[0].mxu0
    %v3482 = vadd.f32 0.0, %v3481
    %v3483 = vpop.f32.mrb[0].mxu0
    %3484 = vdwg.mxu0
    %3485 = vrot.lane.b32.xlu0 %v2841, 48
    %v3486 = vpop.permute.xlu0 %3485
    %3487 = vrot.lane.b32.xlu0 %v2846, 48
    %v3488 = vpop.permute.xlu0 %3487
    %v3492 = vsel %vm581, %v3304, 0
    %v3495 = vsel %vm581, %v3306, 0
    %3497 = vmatprep.subr.mxu0 0.0
    %3498 = vmatpush1.msra.mxu0 %v3486
    %3499 = vmatprep.subr.mxu0 0.0
    %3500 = vmatpush1.msra.mxu0 %v3488
    %3501 = vmatprep.subr.mxu0 0.0
    %3502 = vmatpush1.msra.mxu0 0.0
    %3503 = vmatprep.subr.mxu0 0.0
    %3504 = vmatpush1.msra.mxu0 0.0
    %3505 = vmatprep.subr.mxu0 0.0
    %3506 = vmatpush1.msra.mxu0 0.0
    %3507 = vmatprep.subr.mxu0 0.0
    %3508 = vmatpush1.msra.mxu0 0.0
    %3509 = vmatprep.subr.mxu0 0.0
    %3510 = vmatpush1.msra.mxu0 0.0
    %3511 = vmatprep.subr.mxu0 0.0
    %3512 = vmatpush1.msra.mxu0 0.0
    %3513 = vmatprep.subr.mxu0 0.0
    %3514 = vmatpush1.msra.mxu0 0.0
    %3515 = vmatprep.subr.mxu0 0.0
    %3516 = vmatpush1.msra.mxu0 0.0
    %3517 = vmatprep.subr.mxu0 0.0
    %3518 = vmatpush1.msra.mxu0 0.0
    %3519 = vmatprep.subr.mxu0 0.0
    %3520 = vmatpush1.msra.mxu0 0.0
    %3521 = vmatprep.subr.mxu0 0.0
    %3522 = vmatpush1.msra.mxu0 0.0
    %3523 = vmatprep.subr.mxu0 0.0
    %3524 = vmatpush1.msra.mxu0 0.0
    %3525 = vmatprep.subr.mxu0 0.0
    %3526 = vmatpush1.msra.mxu0 0.0
    %3527 = vmatprep.subr.mxu0 0.0
    %3528 = vmatpush1.msra.mxu0 0.0
    %3529 = vmatprep.subr.mxu0 0.0
    %3530 = vmatpush1.msra.mxu0 0.0
    %3531 = vmatprep.subr.mxu0 0.0
    %3532 = vmatpush1.msra.mxu0 0.0
    %3533 = vmatprep.subr.mxu0 0.0
    %3534 = vmatpush1.msra.mxu0 0.0
    %3535 = vmatprep.subr.mxu0 0.0
    %3536 = vmatpush1.msra.mxu0 0.0
    %3537 = vmatprep.subr.mxu0 0.0
    %3538 = vmatpush1.msra.mxu0 0.0
    %3539 = vmatprep.subr.mxu0 0.0
    %3540 = vmatpush1.msra.mxu0 0.0
    %3541 = vmatprep.subr.mxu0 0.0
    %3542 = vmatpush1.msra.mxu0 0.0
    %3543 = vmatprep.subr.mxu0 0.0
    %3544 = vmatpush1.msra.mxu0 0.0
    %3545 = vmatprep.subr.mxu0 0.0
    %3546 = vmatpush1.msra.mxu0 0.0
    %3547 = vmatprep.subr.mxu0 0.0
    %3548 = vmatpush1.msra.mxu0 0.0
    %3549 = vmatprep.subr.mxu0 0.0
    %3550 = vmatpush1.msra.mxu0 0.0
    %3551 = vmatprep.subr.mxu0 0.0
    %3552 = vmatpush1.msra.mxu0 0.0
    %3553 = vmatprep.subr.mxu0 0.0
    %3554 = vmatpush1.msra.mxu0 0.0
    %3555 = vmatprep.subr.mxu0 0.0
    %3556 = vmatpush1.msra.mxu0 0.0
    %3557 = vmatprep.subr.mxu0 0.0
    %3558 = vmatpush1.msra.mxu0 0.0
    %3559 = vmatprep.subr.mxu0 0.0
    %3560 = vmatpush1.msra.mxu0 0.0
    %3561 = vmatprep.mubr.f32.mxu0 0.0
    %3562 = vmatmul.mubr.f32.gmra.mrb[0].mxu0 %v3492
    %v3563 = vpop.f32.mrb[0].mxu0
    %v3564 = vadd.f32 0.0, %v3563
    %v3565 = vpop.f32.mrb[0].mxu0
    %3566 = vmatprep.mubr.f32.mxu0 0.0
    %3567 = vmatmul.mubr.f32.gmra.mrb[0].mxu0 %v3495
    %v3568 = vpop.f32.mrb[0].mxu0
    %v3569 = vadd.f32 0.0, %v3568
    %v3570 = vpop.f32.mrb[0].mxu0
    %3571 = vdwg.mxu0
    %3572 = vrot.lane.b32.xlu0 %v2841, 40
    %v3573 = vpop.permute.xlu0 %3572
    %3574 = vrot.lane.b32.xlu0 %v2846, 40
    %v3575 = vpop.permute.xlu0 %3574
    %v3579 = vsel %vm581, %v3308, 0
    %v3582 = vsel %vm581, %v3310, 0
    %3584 = vmatprep.subr.mxu0 0.0
    %3585 = vmatpush1.msra.mxu0 %v3573
    %3586 = vmatprep.subr.mxu0 0.0
    %3587 = vmatpush1.msra.mxu0 %v3575
    %3588 = vmatprep.subr.mxu0 0.0
    %3589 = vmatpush1.msra.mxu0 0.0
    %3590 = vmatprep.subr.mxu0 0.0
    %3591 = vmatpush1.msra.mxu0 0.0
    %3592 = vmatprep.subr.mxu0 0.0
    %3593 = vmatpush1.msra.mxu0 0.0
    %3594 = vmatprep.subr.mxu0 0.0
    %3595 = vmatpush1.msra.mxu0 0.0
    %3596 = vmatprep.subr.mxu0 0.0
    %3597 = vmatpush1.msra.mxu0 0.0
    %3598 = vmatprep.subr.mxu0 0.0
    %3599 = vmatpush1.msra.mxu0 0.0
    %3600 = vmatprep.subr.mxu0 0.0
    %3601 = vmatpush1.msra.mxu0 0.0
    %3602 = vmatprep.subr.mxu0 0.0
    %3603 = vmatpush1.msra.mxu0 0.0
    %3604 = vmatprep.subr.mxu0 0.0
    %3605 = vmatpush1.msra.mxu0 0.0
    %3606 = vmatprep.subr.mxu0 0.0
    %3607 = vmatpush1.msra.mxu0 0.0
    %3608 = vmatprep.subr.mxu0 0.0
    %3609 = vmatpush1.msra.mxu0 0.0
    %3610 = vmatprep.subr.mxu0 0.0
    %3611 = vmatpush1.msra.mxu0 0.0
    %3612 = vmatprep.subr.mxu0 0.0
    %3613 = vmatpush1.msra.mxu0 0.0
    %3614 = vmatprep.subr.mxu0 0.0
    %3615 = vmatpush1.msra.mxu0 0.0
    %3616 = vmatprep.subr.mxu0 0.0
    %3617 = vmatpush1.msra.mxu0 0.0
    %3618 = vmatprep.subr.mxu0 0.0
    %3619 = vmatpush1.msra.mxu0 0.0
    %3620 = vmatprep.subr.mxu0 0.0
    %3621 = vmatpush1.msra.mxu0 0.0
    %3622 = vmatprep.subr.mxu0 0.0
    %3623 = vmatpush1.msra.mxu0 0.0
    %3624 = vmatprep.subr.mxu0 0.0
    %3625 = vmatpush1.msra.mxu0 0.0
    %3626 = vmatprep.subr.mxu0 0.0
    %3627 = vmatpush1.msra.mxu0 0.0
    %3628 = vmatprep.subr.mxu0 0.0
    %3629 = vmatpush1.msra.mxu0 0.0
    %3630 = vmatprep.subr.mxu0 0.0
    %3631 = vmatpush1.msra.mxu0 0.0
    %3632 = vmatprep.subr.mxu0 0.0
    %3633 = vmatpush1.msra.mxu0 0.0
    %3634 = vmatprep.subr.mxu0 0.0
    %3635 = vmatpush1.msra.mxu0 0.0
    %3636 = vmatprep.subr.mxu0 0.0
    %3637 = vmatpush1.msra.mxu0 0.0
    %3638 = vmatprep.subr.mxu0 0.0
    %3639 = vmatpush1.msra.mxu0 0.0
    %3640 = vmatprep.subr.mxu0 0.0
    %3641 = vmatpush1.msra.mxu0 0.0
    %3642 = vmatprep.subr.mxu0 0.0
    %3643 = vmatpush1.msra.mxu0 0.0
    %3644 = vmatprep.subr.mxu0 0.0
    %3645 = vmatpush1.msra.mxu0 0.0
    %3646 = vmatprep.subr.mxu0 0.0
    %3647 = vmatpush1.msra.mxu0 0.0
    %3648 = vmatprep.mubr.f32.mxu0 0.0
    %3649 = vmatmul.mubr.f32.gmra.mrb[0].mxu0 %v3579
    %v3650 = vpop.f32.mrb[0].mxu0
    %v3651 = vadd.f32 0.0, %v3650
    %v3652 = vpop.f32.mrb[0].mxu0
    %3653 = vmatprep.mubr.f32.mxu0 0.0
    %3654 = vmatmul.mubr.f32.gmra.mrb[0].mxu0 %v3582
    %v3655 = vpop.f32.mrb[0].mxu0
    %v3656 = vadd.f32 0.0, %v3655
    %v3657 = vpop.f32.mrb[0].mxu0
    %3658 = vdwg.mxu0
    %3661 = vrot.lane.b32.xlu0 %v3477, 8
    %v3662 = vpop.permute.xlu0 %3661
    %3663 = vrot.lane.b32.xlu0 %v3482, 8
    %v3664 = vpop.permute.xlu0 %3663
    %3669 = vrot.lane.b32.xlu0 %v3564, 16
    %v3670 = vpop.permute.xlu0 %3669
    %3671 = vrot.lane.b32.xlu0 %v3569, 16
    %v3672 = vpop.permute.xlu0 %3671
    %3677 = vrot.lane.b32.xlu0 %v3651, 24
    %v3678 = vpop.permute.xlu0 %3677
    %3679 = vrot.lane.b32.xlu0 %v3656, 24
    %v3680 = vpop.permute.xlu0 %3679
    %v3683 = vsel %vm214, %v3390, %v3662
    %v3684 = vsel %vm214, %v3395, %v3664
    %v3685 = vsel %vm581, %v3683, %v3670
    %v3686 = vsel %vm581, %v3684, %v3672
    %v3687 = vsel %vm1046, %v3685, %v3678
    %v3688 = vsel %vm1046, %v3686, %v3680
    %3693 = vrot.lane.b32.xlu0 %v2702, 32
    %v3694 = vpop.permute.xlu0 %3693
    %3695 = vrot.lane.b32.xlu0 %v2704, 32
    %v3696 = vpop.permute.xlu0 %3695
    %3697 = vrot.lane.b32.xlu0 %v2706, 32
    %v3698 = vpop.permute.xlu0 %3697
    %3699 = vrot.lane.b32.xlu0 %v2708, 32
    %v3700 = vpop.permute.xlu0 %3699
    %v3706 = vsel %vm81, %v3687, 0
    %v3709 = vsel %vm81, %v3688, 0
    %3711 = vmatprep.subr.mxu0 0.0
    %3712 = vmatpush1.msra.mxu0 %v3694
    %3713 = vmatprep.subr.mxu0 0.0
    %3714 = vmatpush1.msra.mxu0 %v3696
    %3715 = vmatprep.subr.mxu0 0.0
    %3716 = vmatpush1.msra.mxu0 %v3698
    %3717 = vmatprep.subr.mxu0 0.0
    %3718 = vmatpush1.msra.mxu0 %v3700
    %3719 = vmatprep.subr.mxu0 0.0
    %3720 = vmatpush1.msra.mxu0 0.0
    %3721 = vmatprep.subr.mxu0 0.0
    %3722 = vmatpush1.msra.mxu0 0.0
    %3723 = vmatprep.subr.mxu0 0.0
    %3724 = vmatpush1.msra.mxu0 0.0
    %3725 = vmatprep.subr.mxu0 0.0
    %3726 = vmatpush1.msra.mxu0 0.0
    %3727 = vmatprep.subr.mxu0 0.0
    %3728 = vmatpush1.msra.mxu0 0.0
    %3729 = vmatprep.subr.mxu0 0.0
    %3730 = vmatpush1.msra.mxu0 0.0
    %3731 = vmatprep.subr.mxu0 0.0
    %3732 = vmatpush1.msra.mxu0 0.0
    %3733 = vmatprep.subr.mxu0 0.0
    %3734 = vmatpush1.msra.mxu0 0.0
    %3735 = vmatprep.subr.mxu0 0.0
    %3736 = vmatpush1.msra.mxu0 0.0
    %3737 = vmatprep.subr.mxu0 0.0
    %3738 = vmatpush1.msra.mxu0 0.0
    %3739 = vmatprep.subr.mxu0 0.0
    %3740 = vmatpush1.msra.mxu0 0.0
    %3741 = vmatprep.subr.mxu0 0.0
    %3742 = vmatpush1.msra.mxu0 0.0
    %3743 = vmatprep.subr.mxu0 0.0
    %3744 = vmatpush1.msra.mxu0 0.0
    %3745 = vmatprep.subr.mxu0 0.0
    %3746 = vmatpush1.msra.mxu0 0.0
    %3747 = vmatprep.subr.mxu0 0.0
    %3748 = vmatpush1.msra.mxu0 0.0
    %3749 = vmatprep.subr.mxu0 0.0
    %3750 = vmatpush1.msra.mxu0 0.0
    %3751 = vmatprep.subr.mxu0 0.0
    %3752 = vmatpush1.msra.mxu0 0.0
    %3753 = vmatprep.subr.mxu0 0.0
    %3754 = vmatpush1.msra.mxu0 0.0
    %3755 = vmatprep.subr.mxu0 0.0
    %3756 = vmatpush1.msra.mxu0 0.0
    %3757 = vmatprep.subr.mxu0 0.0
    %3758 = vmatpush1.msra.mxu0 0.0
    %3759 = vmatprep.subr.mxu0 0.0
    %3760 = vmatpush1.msra.mxu0 0.0
    %3761 = vmatprep.subr.mxu0 0.0
    %3762 = vmatpush1.msra.mxu0 0.0
    %3763 = vmatprep.subr.mxu0 0.0
    %3764 = vmatpush1.msra.mxu0 0.0
    %3765 = vmatprep.subr.mxu0 0.0
    %3766 = vmatpush1.msra.mxu0 0.0
    %3767 = vmatprep.subr.mxu0 0.0
    %3768 = vmatpush1.msra.mxu0 0.0
    %3769 = vmatprep.subr.mxu0 0.0
    %3770 = vmatpush1.msra.mxu0 0.0
    %3771 = vmatprep.subr.mxu0 0.0
    %3772 = vmatpush1.msra.mxu0 0.0
    %3773 = vmatprep.subr.mxu0 0.0
    %3774 = vmatpush1.msra.mxu0 0.0
    %3775 = vmatprep.mubr.f32.mxu0 0.0
    %3776 = vmatmul.mubr.f32.gmra.mrb[0].mxu0 %v3706
    %v3777 = vpop.f32.mrb[0].mxu0
    %v3778 = vadd.f32 0.0, %v3777
    %v3779 = vpop.f32.mrb[0].mxu0
    %3780 = vmatprep.mubr.f32.mxu0 0.0
    %3781 = vmatmul.mubr.f32.gmra.mrb[0].mxu0 %v3709
    %v3782 = vpop.f32.mrb[0].mxu0
    %v3783 = vadd.f32 0.0, %v3782
    %v3784 = vpop.f32.mrb[0].mxu0
    %3785 = vdwg.mxu0
    %v3786 = vadd.f32 %v2696, %v3778
    %v3787 = vadd.f32 %v2697, %v3783
    %v3788 = vlaneseq
    %v3789 = vshrl.u32 %v3788, 7
    %v3790 = vsub.s32 4, %v3789
    %v3791 = vrot.slane %v2699, %v3790
    %v3792 = vadd.f32 %v3786, %v3791
    %v3793 = vadd.f32 %v3787, %v3791
    %v3794 = vsel %vm81, %v3792, 0.0
    %3795 = vadd.xlane.f32.xlu0 %v3794
    %v3796 = vpop.xlane.xlu0 %3795
    %v3797 = vsel %vm81, %v3793, 0.0
    %3798 = vadd.xlane.f32.xlu0 %v3797
    %v3799 = vpop.xlane.xlu0 %3798
    %v3800 = vmul.f32 %v3796, %v88
    %v3801 = vmul.f32 %v3799, %v88
    %v3802 = vsub.f32 %v3792, %v3800
    %v3803 = vsub.f32 %v3793, %v3801
    %v3804 = vmul.f32 %v3802, %v3802
    %v3805 = vmul.f32 %v3803, %v3803
    %v3806 = vsel %vm81, %v3804, 0.0
    %3807 = vadd.xlane.f32.xlu0 %v3806
    %v3808 = vpop.xlane.xlu0 %3807
    %v3809 = vsel %vm81, %v3805, 0.0
    %3810 = vadd.xlane.f32.xlu0 %v3809
    %v3811 = vpop.xlane.xlu0 %3810
    %v3812 = vmul.f32 %v3808, %v88
    %v3813 = vmul.f32 %v3811, %v88
    %v3814 = vadd.f32 %v3812, 1e-05
    %v3815 = vadd.f32 %v3813, 1e-05
    %v3816 = vrsqrt.pop %v3814
    %v3817 = vrsqrt.pop %v3815
    %v3818 = vmul.f32 %v3802, %v3816
    %v3819 = vmul.f32 %v3803, %v3817
    %v3820 = vlaneseq
    %v3821 = vshrl.u32 %v3820, 7
    %v3822 = vsub.s32 2, %v3821
    %v3823 = vrot.slane %v2699, %v3822
    %v3824 = vmul.f32 %v3818, %v3823
    %v3825 = vmul.f32 %v3819, %v3823
    %v3826 = vlaneseq
    %v3827 = vshrl.u32 %v3826, 7
    %v3828 = vsub.s32 3, %v3827
    %v3829 = vrot.slane %v2699, %v3828
    %v3830 = vadd.f32 %v3824, %v3829
    %v3831 = vadd.f32 %v3825, %v3829
    %v3832 = vlaneseq
    %v3833 = vshrl.u32 %v3832, 7
    %v3834 = vsub.s32 7, %v3833
    %v3835 = vrot.slane %v2699, %v3834
    %v3837 = vsel %vm81, %v3830, 0
    %v3840 = vsel %vm81, %v3831, 0
    %3842 = vmatprep.subr.mxu0 0.0
    %3843 = vmatpush1.msra.mxu0 %v2701
    %3844 = vmatprep.subr.mxu0 0.0
    %3845 = vmatpush1.msra.mxu0 %v2703
    %3846 = vmatprep.subr.mxu0 0.0
    %3847 = vmatpush1.msra.mxu0 %v2705
    %3848 = vmatprep.subr.mxu0 0.0
    %3849 = vmatpush1.msra.mxu0 %v2707
    %3850 = vmatprep.subr.mxu0 0.0
    %3851 = vmatpush1.msra.mxu0 0.0
    %3852 = vmatprep.subr.mxu0 0.0
    %3853 = vmatpush1.msra.mxu0 0.0
    %3854 = vmatprep.subr.mxu0 0.0
    %3855 = vmatpush1.msra.mxu0 0.0
    %3856 = vmatprep.subr.mxu0 0.0
    %3857 = vmatpush1.msra.mxu0 0.0
    %3858 = vmatprep.subr.mxu0 0.0
    %3859 = vmatpush1.msra.mxu0 0.0
    %3860 = vmatprep.subr.mxu0 0.0
    %3861 = vmatpush1.msra.mxu0 0.0
    %3862 = vmatprep.subr.mxu0 0.0
    %3863 = vmatpush1.msra.mxu0 0.0
    %3864 = vmatprep.subr.mxu0 0.0
    %3865 = vmatpush1.msra.mxu0 0.0
    %3866 = vmatprep.subr.mxu0 0.0
    %3867 = vmatpush1.msra.mxu0 0.0
    %3868 = vmatprep.subr.mxu0 0.0
    %3869 = vmatpush1.msra.mxu0 0.0
    %3870 = vmatprep.subr.mxu0 0.0
    %3871 = vmatpush1.msra.mxu0 0.0
    %3872 = vmatprep.subr.mxu0 0.0
    %3873 = vmatpush1.msra.mxu0 0.0
    %3874 = vmatprep.subr.mxu0 0.0
    %3875 = vmatpush1.msra.mxu0 0.0
    %3876 = vmatprep.subr.mxu0 0.0
    %3877 = vmatpush1.msra.mxu0 0.0
    %3878 = vmatprep.subr.mxu0 0.0
    %3879 = vmatpush1.msra.mxu0 0.0
    %3880 = vmatprep.subr.mxu0 0.0
    %3881 = vmatpush1.msra.mxu0 0.0
    %3882 = vmatprep.subr.mxu0 0.0
    %3883 = vmatpush1.msra.mxu0 0.0
    %3884 = vmatprep.subr.mxu0 0.0
    %3885 = vmatpush1.msra.mxu0 0.0
    %3886 = vmatprep.subr.mxu0 0.0
    %3887 = vmatpush1.msra.mxu0 0.0
    %3888 = vmatprep.subr.mxu0 0.0
    %3889 = vmatpush1.msra.mxu0 0.0
    %3890 = vmatprep.subr.mxu0 0.0
    %3891 = vmatpush1.msra.mxu0 0.0
    %3892 = vmatprep.subr.mxu0 0.0
    %3893 = vmatpush1.msra.mxu0 0.0
    %3894 = vmatprep.subr.mxu0 0.0
    %3895 = vmatpush1.msra.mxu0 0.0
    %3896 = vmatprep.subr.mxu0 0.0
    %3897 = vmatpush1.msra.mxu0 0.0
    %3898 = vmatprep.subr.mxu0 0.0
    %3899 = vmatpush1.msra.mxu0 0.0
    %3900 = vmatprep.subr.mxu0 0.0
    %3901 = vmatpush1.msra.mxu0 0.0
    %3902 = vmatprep.subr.mxu0 0.0
    %3903 = vmatpush1.msra.mxu0 0.0
    %3904 = vmatprep.subr.mxu0 0.0
    %3905 = vmatpush1.msra.mxu0 0.0
    %3906 = vmatprep.mubr.f32.mxu0 0.0
    %3907 = vmatmul.mubr.f32.gmra.mrb[0].mxu0 %v3837
    %v3908 = vpop.f32.mrb[0].mxu0
    %v3909 = vadd.f32 %v3835, %v3908
    %v3910 = vpop.f32.mrb[0].mxu0
    %3911 = vmatprep.mubr.f32.mxu0 0.0
    %3912 = vmatmul.mubr.f32.gmra.mrb[0].mxu0 %v3840
    %v3913 = vpop.f32.mrb[0].mxu0
    %v3914 = vadd.f32 %v3835, %v3913
    %v3915 = vpop.f32.mrb[0].mxu0
    %3916 = vdwg.mxu0
    %v3917 = vmul.f32 %v3909, 0.5
    %v3918 = vmul.f32 %v3914, 0.5
    %v3919 = vmul.f32 %v3909, %v3909
    %v3920 = vmul.f32 %v3914, %v3914
    %v3921 = vmul.f32 %v3909, %v3919
    %v3922 = vmul.f32 %v3914, %v3920
    %v3923 = vmul.f32 %v3921, 0.044715
    %v3924 = vmul.f32 %v3922, 0.044715
    %v3925 = vadd.f32 %v3909, %v3923
    %v3926 = vadd.f32 %v3914, %v3924
    %v3927 = vmul.f32 %v3925, 0.7978846
    %v3928 = vmul.f32 %v3926, 0.7978846
    %v3929 = vtanh.pop %v3927
    %v3930 = vtanh.pop %v3928
    %v3931 = vadd.f32 %v3929, 1.0
    %v3932 = vadd.f32 %v3930, 1.0
    %v3933 = vmul.f32 %v3917, %v3931
    %v3934 = vmul.f32 %v3918, %v3932
    %3935 = vmatprep.subr.mxu0 0.0
    %3936 = vmatpush1.msra.mxu0 %v2710
    %3937 = vmatprep.subr.mxu0 0.0
    %3938 = vmatpush1.msra.mxu0 %v2711
    %3939 = vmatprep.subr.mxu0 0.0
    %3940 = vmatpush1.msra.mxu0 %v2712
    %3941 = vmatprep.subr.mxu0 0.0
    %3942 = vmatpush1.msra.mxu0 %v2713
    %3943 = vmatprep.subr.mxu0 0.0
    %3944 = vmatpush1.msra.mxu0 %v2714
    %3945 = vmatprep.subr.mxu0 0.0
    %3946 = vmatpush1.msra.mxu0 %v2715
    %3947 = vmatprep.subr.mxu0 0.0
    %3948 = vmatpush1.msra.mxu0 %v2716
    %3949 = vmatprep.subr.mxu0 0.0
    %3950 = vmatpush1.msra.mxu0 %v2717
    %3951 = vmatprep.subr.mxu0 0.0
    %3952 = vmatpush1.msra.mxu0 %v2718
    %3953 = vmatprep.subr.mxu0 0.0
    %3954 = vmatpush1.msra.mxu0 %v2719
    %3955 = vmatprep.subr.mxu0 0.0
    %3956 = vmatpush1.msra.mxu0 %v2720
    %3957 = vmatprep.subr.mxu0 0.0
    %3958 = vmatpush1.msra.mxu0 %v2721
    %3959 = vmatprep.subr.mxu0 0.0
    %3960 = vmatpush1.msra.mxu0 %v2722
    %3961 = vmatprep.subr.mxu0 0.0
    %3962 = vmatpush1.msra.mxu0 %v2723
    %3963 = vmatprep.subr.mxu0 0.0
    %3964 = vmatpush1.msra.mxu0 %v2724
    %3965 = vmatprep.subr.mxu0 0.0
    %3966 = vmatpush1.msra.mxu0 %v2725
    %3967 = vmatprep.subr.mxu0 0.0
    %3968 = vmatpush1.msra.mxu0 0.0
    %3969 = vmatprep.subr.mxu0 0.0
    %3970 = vmatpush1.msra.mxu0 0.0
    %3971 = vmatprep.subr.mxu0 0.0
    %3972 = vmatpush1.msra.mxu0 0.0
    %3973 = vmatprep.subr.mxu0 0.0
    %3974 = vmatpush1.msra.mxu0 0.0
    %3975 = vmatprep.subr.mxu0 0.0
    %3976 = vmatpush1.msra.mxu0 0.0
    %3977 = vmatprep.subr.mxu0 0.0
    %3978 = vmatpush1.msra.mxu0 0.0
    %3979 = vmatprep.subr.mxu0 0.0
    %3980 = vmatpush1.msra.mxu0 0.0
    %3981 = vmatprep.subr.mxu0 0.0
    %3982 = vmatpush1.msra.mxu0 0.0
    %3983 = vmatprep.subr.mxu0 0.0
    %3984 = vmatpush1.msra.mxu0 0.0
    %3985 = vmatprep.subr.mxu0 0.0
    %3986 = vmatpush1.msra.mxu0 0.0
    %3987 = vmatprep.subr.mxu0 0.0
    %3988 = vmatpush1.msra.mxu0 0.0
    %3989 = vmatprep.subr.mxu0 0.0
    %3990 = vmatpush1.msra.mxu0 0.0
    %3991 = vmatprep.subr.mxu0 0.0
    %3992 = vmatpush1.msra.mxu0 0.0
    %3993 = vmatprep.subr.mxu0 0.0
    %3994 = vmatpush1.msra.mxu0 0.0
    %3995 = vmatprep.subr.mxu0 0.0
    %3996 = vmatpush1.msra.mxu0 0.0
    %3997 = vmatprep.subr.mxu0 0.0
    %3998 = vmatpush1.msra.mxu0 0.0
    %3999 = vmatprep.mubr.f32.mxu0 0.0
    %4000 = vmatmul.mubr.f32.gmra.mrb[0].mxu0 %v3933
    %v4001 = vpop.f32.mrb[0].mxu0
    %v4002 = vadd.f32 0.0, %v4001
    %v4003 = vpop.f32.mrb[0].mxu0
    %4004 = vmatprep.mubr.f32.mxu0 0.0
    %4005 = vmatmul.mubr.f32.gmra.mrb[0].mxu0 %v3934
    %v4006 = vpop.f32.mrb[0].mxu0
    %v4007 = vadd.f32 0.0, %v4006
    %v4008 = vpop.f32.mrb[0].mxu0
    %4009 = vdwg.mxu0
    %v4010 = vadd.f32 %v3792, %v4002
    %v4011 = vadd.f32 %v3793, %v4007
    %v4012 = vlaneseq
    %v4013 = vshrl.u32 %v4012, 7
    %v4014 = vsub.s32 5, %v4013
    %v4015 = vrot.slane %v2699, %v4014
    %v4016 = vadd.f32 %v4010, %v4015
    %v4017 = vadd.f32 %v4011, %v4015
    %v4018 = vsel %vm81, %v4016, 0.0
    %4019 = vadd.xlane.f32.xlu0 %v4018
    %v4020 = vpop.xlane.xlu0 %4019
    %v4021 = vsel %vm81, %v4017, 0.0
    %4022 = vadd.xlane.f32.xlu0 %v4021
    %v4023 = vpop.xlane.xlu0 %4022
    %v4024 = vmul.f32 %v4020, %v88
    %v4025 = vmul.f32 %v4023, %v88
    %v4026 = vsub.f32 %v4016, %v4024
    %v4027 = vsub.f32 %v4017, %v4025
    %v4028 = vmul.f32 %v4026, %v4026
    %v4029 = vmul.f32 %v4027, %v4027
    %v4030 = vsel %vm81, %v4028, 0.0
    %4031 = vadd.xlane.f32.xlu0 %v4030
    %v4032 = vpop.xlane.xlu0 %4031
    %v4033 = vsel %vm81, %v4029, 0.0
    %4034 = vadd.xlane.f32.xlu0 %v4033
    %v4035 = vpop.xlane.xlu0 %4034
    %v4036 = vmul.f32 %v4032, %v88
    %v4037 = vmul.f32 %v4035, %v88
    %v4038 = vadd.f32 %v4036, 1e-05
    %v4039 = vadd.f32 %v4037, 1e-05
    %v4040 = vrsqrt.pop %v4038
    %v4041 = vrsqrt.pop %v4039
    %v4042 = vmul.f32 %v4026, %v4040
    %v4043 = vmul.f32 %v4027, %v4041
    %v4044 = vlaneseq
    %v4045 = vshrl.u32 %v4044, 7
    %v4046 = vsub.s32 2, %v4045
    %v4047 = vrot.slane %v23, %v4046
    %v4048 = vmul.f32 %v4042, %v4047
    %v4049 = vmul.f32 %v4043, %v4047
    %v4050 = vlaneseq
    %v4051 = vshrl.u32 %v4050, 7
    %v4052 = vsub.s32 3, %v4051
    %v4053 = vrot.slane %v23, %v4052
    %v4054 = vadd.f32 %v4048, %v4053
    %v4055 = vadd.f32 %v4049, %v4053
    %v4056 = vlaneseq
    %v4057 = vshrl.u32 %v4056, 7
    %v4058 = vsub.s32 4, %v4057
    %v4059 = vrot.slane %v23, %v4058
    %v4060 = vmul.f32 %v4054, %v4059
    %v4061 = vmul.f32 %v4055, %v4059
    %v4062 = vsel %vm81, %v4060, 0.0
    %4063 = vadd.xlane.f32.xlu0 %v4062
    %v4064 = vpop.xlane.xlu0 %4063
    %v4065 = vsel %vm81, %v4061, 0.0
    %4066 = vadd.xlane.f32.xlu0 %v4065
    %v4067 = vpop.xlane.xlu0 %4066
    %v4068 = vlaneseq
    %v4069 = vshrl.u32 %v4068, 7
    %v4070 = vsub.s32 5, %v4069
    %v4071 = vrot.slane %v23, %v4070
    %v4072 = vadd.f32 %v4064, %v4071
    %v4073 = vadd.f32 %v4067, %v4071
    %4075 = vset.pattern.permute.xlu0 0
    %4076 = vperm.xlu0 %4075, %v4072
    %v4077 = vpop.permute.xlu0 %4076
    %4080 = vset.pattern.permute.xlu0 0
    %4081 = vperm.xlu0 %4080, %v4073
    %v4082 = vpop.permute.xlu0 %4081
    %4084 = vst [vmem:[#allocation2] sm:$0xff] %v4077
    %4085 = vst [vmem:[#allocation2 + $0x8] sm:$0xff] %v4082
    // Predicated region
    $region22: #{tpu_custom_call.1} parent=1 // pred_check
      _
    $region23: #{tpu_custom_call.1} parent=1 // pred_check_branch
      %4087 = sbr.rel (0) target = $region25
    $region24: #{tpu_custom_call.1} parent=1 // pred_region
      %s4089 = ssub.s32 256, 256
      %4090 = vsyncadd [#allocation3], %s4089
      %s4091 = sshll.u32 [#allocation2], 4
      %s4092 = int_to_ptr.vmem [resolvable:$true] %s4091
      %4097 = dma.vmem_to_hbm [thread:$0]  %s4092, 256, %s5, [#allocation3], 128, 128, 8
    $region25: #{tpu_custom_call.1} parent=1 // pred_fallthru
      _
    // Predicated region
    $region26: #{tpu_custom_call.1} parent=1 // pred_check
      _
    $region27: #{tpu_custom_call.1} parent=1 // pred_check_branch
      %4099 = sbr.rel (0) target = $region29
    $region28: #{tpu_custom_call.1} parent=1 // pred_region
      %4100 = dma.done [#allocation3], 256
    $region29: #{tpu_custom_call.1} parent=1 // pred_fallthru
      _
    %4101 = vsyncpa [#allocation3], 1

</llo_original>
